<compile_context>
chip_gen: v5e
topology: v5e:2x2
jax: 0.10.0
libtpu: 0.0.40
codegen_flags: <defaults>
</compile_context>

<pallas_src>
import functools

import numpy as np
import jax
import jax.numpy as jnp
from jax.experimental import pallas as pl
from jax.experimental.pallas import tpu as pltpu


def _round_up(x, m):
    return (x + m - 1) // m * m


def _full_spec(shape):
    """Single full-array block for grid=(1,)."""
    zeros = (0,) * len(shape)
    return pl.BlockSpec(shape, lambda i, _z=zeros: _z)


# ----------------------------- Pallas kernels -----------------------------

def _matmul_bias_relu_kernel(w_ref, x_ref, b_ref, o_ref):
    """o = relu(w @ x + b); channels-first so the lane dim is spatial*batch."""
    y = jnp.dot(w_ref[...], x_ref[...], preferred_element_type=jnp.float32)
    o_ref[...] = jnp.maximum(y + b_ref[...], 0.0).astype(o_ref.dtype)


def _dense_block_kernel(*refs, W, M, C0, growth, cmid, num_layers, has_trans,
                        taps, padl):
    """One whole dense block (+ optional transition) in a single kernel.

    refs = [x, masks] + per-layer [sc1, sh1, w1(scaled), sh2, w2(9,growth,cmid)]
           (+ [sct, sht, wt, pool] if has_trans) + [out] + [feat_scratch, hp_scratch]
    Layout: channels-first, features (C, M) with M = N*H*W on the lane axis.
    """
    it = iter(refs)
    x_ref, mask_ref = next(it), next(it)
    layers = [tuple(next(it) for _ in range(5)) for _ in range(num_layers)]
    if has_trans:
        sct_ref, sht_ref, wt_ref, pool_ref = (next(it), next(it),
                                              next(it), next(it))
    o_ref = next(it)
    feat_ref, hp_ref = next(it), next(it)

    # Zero the padded conv2 slab once: only the interior is overwritten per
    # layer, so the (masked-out) border reads always see zeros, never garbage.
    hp_ref[...] = jnp.zeros_like(hp_ref)
    feat_ref[0:C0, :] = x_ref[...].astype(jnp.float32)
    masks = mask_ref[...]                               # (9, M) f32 in {0, 1}

    for li in range(num_layers):
        sc1_ref, sh1_ref, w1_ref, sh2_ref, w2_ref = layers[li]
        c_in = C0 + li * growth

        # norm1 -> relu1 (per-row affine prologue), conv1 (1x1, BN2 scale
        # pre-folded into w1), norm2 shift -> relu2.
        a = jnp.maximum(feat_ref[0:c_in, :] * sc1_ref[...] + sh1_ref[...], 0.0)
        h = jnp.dot(w1_ref[...], a.astype(jnp.bfloat16),
                    preferred_element_type=jnp.float32)
        h = jnp.maximum(h + sh2_ref[...], 0.0)          # (cmid, M) f32

        # conv2 (3x3, stride 1, pad 1): store the bottleneck once into the
        # zero-padded slab (lane-tile-aligned interior), then accumulate 9
        # shifted lane-slices, masking invalid (padding / wrap) columns.
        hp_ref[:, padl:padl + M] = h.astype(jnp.bfloat16)
        acc = jnp.zeros((growth, M), jnp.float32)
        for t in taps:
            off = (t // 3 - 1) * W + (t % 3 - 1)
            tap = hp_ref[:, padl + off:padl + off + M]  # (cmid, M) bf16
            contrib = jnp.dot(w2_ref[t], tap,
                              preferred_element_type=jnp.float32)
            acc = acc + contrib * masks[t:t + 1, :]
        # dense concat: append the new features as sublane-aligned rows
        feat_ref[c_in:c_in + growth, :] = acc

    feats = feat_ref[...]                               # (C_total, M) f32
    if has_trans:
        # transition: norm -> relu -> conv(1x1) -> 2x2/s2 avg-pool (as matmul)
        a = jnp.maximum(feats * sct_ref[...] + sht_ref[...], 0.0)
        y = jnp.dot(wt_ref[...], a.astype(jnp.bfloat16),
                    preferred_element_type=jnp.float32)
        o_ref[...] = jnp.dot(y.astype(jnp.bfloat16), pool_ref[...],
                             preferred_element_type=jnp.float32)
    else:
        o_ref[...] = feats


# ----------------------------- trace-time constants -----------------------------

def _conv3x3_masks(N, H, W):
    """masks[t, m] = 1 iff output column m has a valid in-image input for 3x3
    tap t under padding=1 (also kills cross-row / cross-image lane wraps)."""
    i = np.arange(H).reshape(H, 1)
    j = np.arange(W).reshape(1, W)
    masks = np.zeros((9, N, H, W), np.float32)
    for t in range(9):
        oy, ox = t // 3 - 1, t % 3 - 1
        ok = (i + oy >= 0) & (i + oy < H) & (j + ox >= 0) & (j + ox < W)
        masks[t] = ok.astype(np.float32)[None]
    return masks.reshape(9, N * H * W)


def _avgpool2_matrix(N, H, W):
    """(M, Mout) matrix so that y(C, M) @ P == AvgPool2d(2, 2) on the lanes."""
    # TODO(synk): assumes even H, W (PyTorch AvgPool2d truncates odd sizes).
    Ho, Wo = H // 2, W // 2
    P = np.zeros((N * H * W, N * Ho * Wo), np.float32)
    for n in range(N):
        for i in range(H):
            for j in range(W):
                P[(n * H + i) * W + j, (n * Ho + i // 2) * Wo + j // 2] = 0.25
    return P


# ----------------------------- layer wrappers -----------------------------

def bn_scale_shift(bn):
    """Eval-mode BatchNorm -> per-channel affine (scale, shift)."""
    scale = bn["weight"] / jnp.sqrt(bn["var"] + bn["eps"])
    shift = bn["bias"] - bn["mean"] * scale
    return scale, shift


def _im2col_cf(x_nchw, kh, kw, stride, pad):
    """Channels-first patches (Cin*kh*kw, N*Ho*Wo); K order matches OIHW flat."""
    N, C, H, W = x_nchw.shape
    xp = jnp.pad(x_nchw, ((0, 0), (0, 0), (pad, pad), (pad, pad)))
    Ho = (H + 2 * pad - kh) // stride + 1
    Wo = (W + 2 * pad - kw) // stride + 1
    cols = []
    for di in range(kh):
        for dj in range(kw):
            cols.append(xp[:, :, di:di + stride * (Ho - 1) + 1:stride,
                           dj:dj + stride * (Wo - 1) + 1:stride])
    p = jnp.stack(cols, axis=2)                         # (N, C, kh*kw, Ho, Wo)
    p = jnp.transpose(p, (1, 2, 0, 3, 4)).reshape(C * kh * kw, N * Ho * Wo)
    return p, Ho, Wo


def stem_conv_bn_relu(x_nchw, w_oihw, scale, shift):
    """conv0(7x7/s2/p3, no bias) + norm0 + relu0 as one fused Pallas matmul.
    BN scale is folded into the weights; output is channels-first (Cout, M)."""
    cout, _, kh, kw = w_oihw.shape
    patches, ho, wo = _im2col_cf(x_nchw, kh, kw, 2, 3)
    k, m = patches.shape
    wmat = (w_oihw.reshape(cout, k) * scale[:, None]).astype(jnp.bfloat16)
    bias = shift.reshape(cout, 1).astype(jnp.float32)
    pats = patches.astype(jnp.bfloat16)
    out = pl.pallas_call(
        _matmul_bias_relu_kernel,
        out_shape=jax.ShapeDtypeStruct((cout, m), jnp.float32),
        grid_spec=pltpu.PrefetchScalarGridSpec(
            num_scalar_prefetch=0, grid=(1,),
            in_specs=[_full_spec(wmat.shape), _full_spec(pats.shape),
                      _full_spec(bias.shape)],
            out_specs=_full_spec((cout, m))),
        compiler_params=pltpu.CompilerParams(
            dimension_semantics=("arbitrary",)),
        cost_estimate=pl.CostEstimate(
            flops=2 * cout * k * m, transcendentals=0,
            bytes_accessed=int(wmat.size * 2 + pats.size * 2 + bias.size * 4
                               + cout * m * 4)),
    )(wmat, pats, bias)
    return out, ho, wo


def dense_block_fused(x_cf, N, H, W, layers, transition=None):
    """Whole dense block (+ optional transition) in ONE pallas_call.

    x_cf: (C0, N*H*W) channels-first features (f32).
    Returns (out_cf (f32), (H_out, W_out)).
    """
    C0, M = x_cf.shape
    assert M == N * H * W
    num_layers = len(layers)
    growth = layers[0]["conv2"].shape[0]
    cmid = layers[0]["conv2"].shape[1]
    c_total = C0 + num_layers * growth

    masks_np = _conv3x3_masks(N, H, W)
    taps = tuple(t for t in range(9) if masks_np[t].any())
    padl = _round_up(W + 1, 128)        # lane-tile-aligned interior offset

    operands = [x_cf.astype(jnp.float32), jnp.asarray(masks_np)]
    flops = 0
    for li, lp in enumerate(layers):
        c_in = C0 + li * growth
        sc1, sh1 = bn_scale_shift(lp["norm1"])
        sc2, sh2 = bn_scale_shift(lp["norm2"])
        # fold the post-conv1 BN scale into the weight matrix (perf review)
        w1 = (lp["conv1"].reshape(cmid, c_in) * sc2[:, None]).astype(jnp.bfloat16)
        w2 = jnp.transpose(lp["conv2"], (2, 3, 0, 1)).reshape(
            9, growth, cmid).astype(jnp.bfloat16)
        operands += [sc1.reshape(c_in, 1), sh1.reshape(c_in, 1), w1,
                     sh2.reshape(cmid, 1), w2]
        flops += 2 * cmid * c_in * M + 2 * len(taps) * growth * cmid * M

    has_trans = transition is not None
    if has_trans:
        sct, sht = bn_scale_shift(transition["norm"])
        c_out = transition["conv"].shape[0]
        wt = transition["conv"].reshape(c_out, c_total).astype(jnp.bfloat16)
        pool = jnp.asarray(_avgpool2_matrix(N, H, W), jnp.bfloat16)
        m_out = pool.shape[1]
        operands += [sct.reshape(c_total, 1), sht.reshape(c_total, 1), wt, pool]
        flops += 2 * c_out * c_total * M + 2 * c_out * M * m_out
        out_shape = (c_out, m_out)
        h_out, w_out = H // 2, W // 2
    else:
        out_shape = (c_total, M)
        h_out, w_out = H, W

    in_specs = [_full_spec(op.shape) for op in operands]
    bytes_accessed = sum(int(op.size) * op.dtype.itemsize for op in operands)
    bytes_accessed += int(np.prod(out_shape)) * 4

    kernel = functools.partial(
        _dense_block_kernel, W=W, M=M, C0=C0, growth=growth, cmid=cmid,
        num_layers=num_layers, has_trans=has_trans, taps=taps, padl=padl)

    out = pl.pallas_call(
        kernel,
        out_shape=jax.ShapeDtypeStruct(out_shape, jnp.float32),
        grid_spec=pltpu.PrefetchScalarGridSpec(
            num_scalar_prefetch=0, grid=(1,),
            in_specs=in_specs,
            out_specs=_full_spec(out_shape),
            scratch_shapes=[
                pltpu.VMEM((c_total, M), jnp.float32),               # features
                pltpu.VMEM((cmid, padl + M + W + 1), jnp.bfloat16),  # conv2 slab
            ]),
        compiler_params=pltpu.CompilerParams(
            dimension_semantics=("arbitrary",)),
        cost_estimate=pl.CostEstimate(flops=int(flops), transcendentals=0,
                                      bytes_accessed=int(bytes_accessed)),
    )(*operands)
    return out, (h_out, w_out)


# ----------------------------- parameter init -----------------------------

def _bn_init(c):
    return dict(weight=jnp.ones((c,), jnp.float32),
                bias=jnp.zeros((c,), jnp.float32),
                mean=jnp.zeros((c,), jnp.float32),
                var=jnp.ones((c,), jnp.float32),
                eps=1e-5)


def _kaiming(key, shape):
    # shape = (Cout, Cin, kh, kw); fan_in = Cin*kh*kw (matches kaiming_normal_)
    fan_in = shape[1] * shape[2] * shape[3]
    return jax.random.normal(key, shape, jnp.float32) * jnp.sqrt(2.0 / fan_in)


def init_densenet(key, num_input_channels, growth_rate, block_config,
                  num_init_features, bn_size, num_classes):
    keys = iter(jax.random.split(key, 256))
    params = {}
    params["conv0"] = _kaiming(next(keys),
                               (num_init_features, num_input_channels, 7, 7))
    params["norm0"] = _bn_init(num_init_features)

    num_features = num_init_features
    blocks, transitions = [], []
    for bi, num_layers in enumerate(block_config):
        layers = []
        for li in range(num_layers):
            nin = num_features + li * growth_rate
            layers.append(dict(
                norm1=_bn_init(nin),
                conv1=_kaiming(next(keys), (bn_size * growth_rate, nin, 1, 1)),
                norm2=_bn_init(bn_size * growth_rate),
                conv2=_kaiming(next(keys),
                               (growth_rate, bn_size * growth_rate, 3, 3)),
            ))
        blocks.append(layers)
        num_features = num_features + num_layers * growth_rate
        if bi != len(block_config) - 1:
            transitions.append(dict(
                norm=_bn_init(num_features),
                conv=_kaiming(next(keys),
                              (num_features // 2, num_features, 1, 1)),
            ))
            num_features //= 2
    params["blocks"] = blocks
    params["transitions"] = transitions
    params["norm5"] = _bn_init(num_features)

    lim = 1.0 / jnp.sqrt(jnp.float32(num_features))
    params["fc_w"] = jax.random.uniform(next(keys), (num_classes, num_features),
                                        jnp.float32, -lim, lim)
    params["fc_b"] = jnp.zeros((num_classes,), jnp.float32)
    return params


# ----------------------------- forward pass -----------------------------

def densenet_forward(params, x_nchw):
    N = x_nchw.shape[0]

    # stem: conv0 + norm0 + relu0 fused (channels-first output), pool0 in JAX
    sc0, sh0 = bn_scale_shift(params["norm0"])
    y, H, W = stem_conv_bn_relu(x_nchw, params["conv0"], sc0, sh0)
    C = params["conv0"].shape[0]
    y = y.reshape(C, N, H, W)
    y = jax.lax.reduce_window(
        y, jnp.array(-jnp.inf, y.dtype), jax.lax.max,
        (1, 1, 3, 3), (1, 1, 2, 2), ((0, 0), (0, 0), (1, 1), (1, 1)))
    H, W = y.shape[2], y.shape[3]
    x_cf = y.reshape(C, N * H * W)

    # dense blocks, each fused with its transition (norm/relu/1x1/avg-pool)
    transitions = params["transitions"]
    for bi, block in enumerate(params["blocks"]):
        trans = transitions[bi] if bi < len(transitions) else None
        x_cf, (H, W) = dense_block_fused(x_cf, N, H, W, block, trans)

    # norm5 + ReLU + global average pool + classifier: plain jnp (tiny slabs;
    # a pallas_call here would be pure launch/DMA overhead)
    C = x_cf.shape[0]
    sc5, sh5 = bn_scale_shift(params["norm5"])
    f = jnp.maximum(x_cf * sc5[:, None] + sh5[:, None], 0.0)
    f = f.reshape(C, N, H * W).mean(axis=2).T            # (N, num_features)
    return f @ params["fc_w"].T + params["fc_b"]


# ----------------------------- pure-JAX reference -----------------------------

def densenet_reference(params, x_nchw):
    """XLA-conv reference (eval-mode BN) used only for a numeric sanity check."""
    def conv(x, w, stride, pad):
        return jax.lax.conv_general_dilated(
            x, w, (stride, stride), ((pad, pad), (pad, pad)),
            dimension_numbers=("NCHW", "OIHW", "NCHW"))

    def bn_relu(x, p):
        sc = p["weight"] / jnp.sqrt(p["var"] + p["eps"])
        sh = p["bias"] - p["mean"] * sc
        return jnp.maximum(x * sc[None, :, None, None]
                           + sh[None, :, None, None], 0.0)

    x = conv(x_nchw, params["conv0"], 2, 3)
    x = bn_relu(x, params["norm0"])
    x = jax.lax.reduce_window(
        x, jnp.array(-jnp.inf, x.dtype), jax.lax.max,
        (1, 1, 3, 3), (1, 1, 2, 2), ((0, 0), (0, 0), (1, 1), (1, 1)))
    for bi, block in enumerate(params["blocks"]):
        feats = [x]
        for layer in block:
            cat = jnp.concatenate(feats, axis=1)
            h = conv(bn_relu(cat, layer["norm1"]), layer["conv1"], 1, 0)
            h = conv(bn_relu(h, layer["norm2"]), layer["conv2"], 1, 1)
            feats.append(h)
        x = jnp.concatenate(feats, axis=1)
        if bi < len(params["transitions"]):
            t = params["transitions"][bi]
            x = conv(bn_relu(x, t["norm"]), t["conv"], 1, 0)
            x = jax.lax.reduce_window(
                x, jnp.array(0.0, x.dtype), jax.lax.add,
                (1, 1, 2, 2), (1, 1, 2, 2), "VALID") / 4.0
    x = bn_relu(x, params["norm5"])
    x = x.mean(axis=(2, 3))
    return x @ params["fc_w"].T + params["fc_b"]


# ----------------------------- main -----------------------------

if __name__ == "__main__":
    key = jax.random.PRNGKey(0)
    k_param, k_x = jax.random.split(key)

    # small synthetic DenseNet config (same topology as the PyTorch module)
    NUM_INPUT_CHANNELS = 3
    GROWTH_RATE = 8
    BLOCK_CONFIG = (2, 2, 2, 2)
    NUM_INIT_FEATURES = 16
    BN_SIZE = 2
    NUM_CLASSES = 10

    params = init_densenet(k_param, NUM_INPUT_CHANNELS, GROWTH_RATE,
                           BLOCK_CONFIG, NUM_INIT_FEATURES, BN_SIZE,
                           NUM_CLASSES)

    x = jax.random.normal(k_x, (2, NUM_INPUT_CHANNELS, 32, 32), jnp.float32)

    forward = jax.jit(densenet_forward)
    logits = forward(params, x)
    jax.block_until_ready(logits)

    assert logits.shape == (2, NUM_CLASSES)
    assert jnp.all(jnp.isfinite(logits))

    # numeric sanity check vs. pure-JAX reference (bf16-MXU tolerance)
    ref = jax.jit(densenet_reference)(params, x)
    jax.block_until_ready(ref)
    err = float(jnp.max(jnp.abs(logits - ref)))
    assert err < 0.15, f"max abs error vs reference too large: {err}"

    print("KERNEL_OK")
</pallas_src>

<mosaic_0001>
module attributes {stable_mosaic.version = 11 : i64} {
  func.func @_matmul_bias_relu_kernel(%arg0: i32, %arg1: memref<16x147xbf16, #tpu.memory_space<vmem>>, %arg2: memref<147x512xbf16, #tpu.memory_space<vmem>>, %arg3: memref<16x1xf32, #tpu.memory_space<vmem>>, %arg4: memref<16x512xf32, #tpu.memory_space<vmem>>) attributes {dimension_semantics = [#tpu.dimension_semantics<arbitrary>], iteration_bounds = array<i64: 1>, scalar_prefetch = 0 : i64, scratch_operands = 0 : i64, tpu.core_type = #tpu.core_type<tc>, window_params = [{pipeline_mode = #tpu.pipeline_mode<synchronous>, transform_indices = @transform_0, window_bounds = array<i64: 16, 147>}, {pipeline_mode = #tpu.pipeline_mode<synchronous>, transform_indices = @transform_1, window_bounds = array<i64: 147, 512>}, {pipeline_mode = #tpu.pipeline_mode<synchronous>, transform_indices = @transform_2, window_bounds = array<i64: 16, 1>}, {pipeline_mode = #tpu.pipeline_mode<synchronous>, transform_indices = @transform_3, window_bounds = array<i64: 16, 512>}]} {
    %c0 = arith.constant 0 : index
    %c0_0 = arith.constant 0 : index
    %0 = vector.load %arg1[%c0, %c0_0] : memref<16x147xbf16, #tpu.memory_space<vmem>>, vector<16x147xbf16>
    %c0_1 = arith.constant 0 : index
    %c0_2 = arith.constant 0 : index
    %1 = vector.load %arg2[%c0_1, %c0_2] : memref<147x512xbf16, #tpu.memory_space<vmem>>, vector<147x512xbf16>
    %cst = arith.constant dense<0.000000e+00> : vector<16x512xf32>
    %2 = tpu.matmul %0, %1, %cst {dimension_numbers = #tpu.dot_dimension_numbers<[1], [0], [0], [1], [0, 0, 1, 1], [], []>} : vector<16x147xbf16>, vector<147x512xbf16>, vector<16x512xf32> -> vector<16x512xf32>
    %c0_3 = arith.constant 0 : index
    %c0_4 = arith.constant 0 : index
    %3 = vector.load %arg3[%c0_3, %c0_4] : memref<16x1xf32, #tpu.memory_space<vmem>>, vector<16x1xf32>
    %4 = vector.broadcast %3 : vector<16x1xf32> to vector<16x512xf32>
    %5 = arith.addf %2, %4 : vector<16x512xf32>
    %cst_5 = arith.constant 0.000000e+00 : f32
    %6 = vector.broadcast %cst_5 : f32 to vector<16x512xf32>
    %7 = arith.maximumf %5, %6 : vector<16x512xf32>
    %c0_6 = arith.constant 0 : index
    %c0_7 = arith.constant 0 : index
    %8 = vector.load %arg4[%c0_6, %c0_7] : memref<16x512xf32, #tpu.memory_space<vmem>>, vector<16x512xf32>
    tpu.vector_store %arg4[%c0_6, %c0_7], %7 {strides = array<i32>} : memref<16x512xf32, #tpu.memory_space<vmem>>, vector<16x512xf32>,
    return
  }
  func.func @transform_0(%arg0: i32) -> (i32, i32) {
    %c0_i32 = arith.constant 0 : i32
    %c0_i32_0 = arith.constant 0 : i32
    %c0_i32_1 = arith.constant 0 : i32
    return %c0_i32, %c0_i32_0 : i32, i32
  }
  func.func @transform_1(%arg0: i32) -> (i32, i32) {
    %c0_i32 = arith.constant 0 : i32
    %c0_i32_0 = arith.constant 0 : i32
    %c0_i32_1 = arith.constant 0 : i32
    return %c0_i32, %c0_i32_0 : i32, i32
  }
  func.func @transform_2(%arg0: i32) -> (i32, i32) {
    %c0_i32 = arith.constant 0 : i32
    %c0_i32_0 = arith.constant 0 : i32
    %c0_i32_1 = arith.constant 0 : i32
    return %c0_i32, %c0_i32_0 : i32, i32
  }
  func.func @transform_3(%arg0: i32) -> (i32, i32) {
    %c0_i32 = arith.constant 0 : i32
    %c0_i32_0 = arith.constant 0 : i32
    %c0_i32_1 = arith.constant 0 : i32
    return %c0_i32, %c0_i32_0 : i32, i32
  }
}

module attributes {stable_mosaic.version = 11 : i64} {
  func.func @_dense_block_kernel(%arg0: i32, %arg1: memref<16x128xf32, #tpu.memory_space<vmem>>, %arg2: memref<9x128xf32, #tpu.memory_space<vmem>>, %arg3: memref<16x1xf32, #tpu.memory_space<vmem>>, %arg4: memref<16x1xf32, #tpu.memory_space<vmem>>, %arg5: memref<16x16xbf16, #tpu.memory_space<vmem>>, %arg6: memref<16x1xf32, #tpu.memory_space<vmem>>, %arg7: memref<9x8x16xbf16, #tpu.memory_space<vmem>>, %arg8: memref<24x1xf32, #tpu.memory_space<vmem>>, %arg9: memref<24x1xf32, #tpu.memory_space<vmem>>, %arg10: memref<16x24xbf16, #tpu.memory_space<vmem>>, %arg11: memref<16x1xf32, #tpu.memory_space<vmem>>, %arg12: memref<9x8x16xbf16, #tpu.memory_space<vmem>>, %arg13: memref<32x1xf32, #tpu.memory_space<vmem>>, %arg14: memref<32x1xf32, #tpu.memory_space<vmem>>, %arg15: memref<16x32xbf16, #tpu.memory_space<vmem>>, %arg16: memref<128x32xbf16, #tpu.memory_space<vmem>>, %arg17: memref<16x32xf32, #tpu.memory_space<vmem>>, %arg18: memref<32x128xf32, #tpu.memory_space<vmem>>, %arg19: memref<16x265xbf16, #tpu.memory_space<vmem>>) attributes {dimension_semantics = [#tpu.dimension_semantics<arbitrary>], iteration_bounds = array<i64: 1>, scalar_prefetch = 0 : i64, scratch_operands = 2 : i64, tpu.core_type = #tpu.core_type<tc>, window_params = [{pipeline_mode = #tpu.pipeline_mode<synchronous>, transform_indices = @transform_0, window_bounds = array<i64: 16, 128>}, {pipeline_mode = #tpu.pipeline_mode<synchronous>, transform_indices = @transform_1, window_bounds = array<i64: 9, 128>}, {pipeline_mode = #tpu.pipeline_mode<synchronous>, transform_indices = @transform_2, window_bounds = array<i64: 16, 1>}, {pipeline_mode = #tpu.pipeline_mode<synchronous>, transform_indices = @transform_3, window_bounds = array<i64: 16, 1>}, {pipeline_mode = #tpu.pipeline_mode<synchronous>, transform_indices = @transform_4, window_bounds = array<i64: 16, 16>}, {pipeline_mode = #tpu.pipeline_mode<synchronous>, transform_indices = @transform_5, window_bounds = array<i64: 16, 1>}, {pipeline_mode = #tpu.pipeline_mode<synchronous>, transform_indices = @transform_6, window_bounds = array<i64: 9, 8, 16>}, {pipeline_mode = #tpu.pipeline_mode<synchronous>, transform_indices = @transform_7, window_bounds = array<i64: 24, 1>}, {pipeline_mode = #tpu.pipeline_mode<synchronous>, transform_indices = @transform_8, window_bounds = array<i64: 24, 1>}, {pipeline_mode = #tpu.pipeline_mode<synchronous>, transform_indices = @transform_9, window_bounds = array<i64: 16, 24>}, {pipeline_mode = #tpu.pipeline_mode<synchronous>, transform_indices = @transform_10, window_bounds = array<i64: 16, 1>}, {pipeline_mode = #tpu.pipeline_mode<synchronous>, transform_indices = @transform_11, window_bounds = array<i64: 9, 8, 16>}, {pipeline_mode = #tpu.pipeline_mode<synchronous>, transform_indices = @transform_12, window_bounds = array<i64: 32, 1>}, {pipeline_mode = #tpu.pipeline_mode<synchronous>, transform_indices = @transform_13, window_bounds = array<i64: 32, 1>}, {pipeline_mode = #tpu.pipeline_mode<synchronous>, transform_indices = @transform_14, window_bounds = array<i64: 16, 32>}, {pipeline_mode = #tpu.pipeline_mode<synchronous>, transform_indices = @transform_15, window_bounds = array<i64: 128, 32>}, {pipeline_mode = #tpu.pipeline_mode<synchronous>, transform_indices = @transform_16, window_bounds = array<i64: 16, 32>}]} {
    %cst = arith.constant 0.000000e+00 : bf16
    %0 = vector.broadcast %cst : bf16 to vector<16x265xbf16>
    %c0 = arith.constant 0 : index
    %c0_0 = arith.constant 0 : index
    %1 = vector.load %arg19[%c0, %c0_0] : memref<16x265xbf16, #tpu.memory_space<vmem>>, vector<16x265xbf16>
    tpu.vector_store %arg19[%c0, %c0_0], %0 {strides = array<i32>} : memref<16x265xbf16, #tpu.memory_space<vmem>>, vector<16x265xbf16>,
    %c0_1 = arith.constant 0 : index
    %c0_2 = arith.constant 0 : index
    %2 = vector.load %arg1[%c0_1, %c0_2] : memref<16x128xf32, #tpu.memory_space<vmem>>, vector<16x128xf32>
    %c0_3 = arith.constant 0 : index
    %c0_4 = arith.constant 0 : index
    %3 = vector.load %arg18[%c0_3, %c0_4] : memref<32x128xf32, #tpu.memory_space<vmem>>, vector<16x128xf32>
    tpu.vector_store %arg18[%c0_3, %c0_4], %2 {strides = array<i32>} : memref<32x128xf32, #tpu.memory_space<vmem>>, vector<16x128xf32>,
    %c0_5 = arith.constant 0 : index
    %c0_6 = arith.constant 0 : index
    %4 = vector.load %arg2[%c0_5, %c0_6] : memref<9x128xf32, #tpu.memory_space<vmem>>, vector<9x128xf32>
    %c0_7 = arith.constant 0 : index
    %c0_8 = arith.constant 0 : index
    %5 = vector.load %arg18[%c0_7, %c0_8] : memref<32x128xf32, #tpu.memory_space<vmem>>, vector<16x128xf32>
    %c0_9 = arith.constant 0 : index
    %c0_10 = arith.constant 0 : index
    %6 = vector.load %arg3[%c0_9, %c0_10] : memref<16x1xf32, #tpu.memory_space<vmem>>, vector<16x1xf32>
    %7 = vector.broadcast %6 : vector<16x1xf32> to vector<16x128xf32>
    %8 = arith.mulf %5, %7 : vector<16x128xf32>
    %c0_11 = arith.constant 0 : index
    %c0_12 = arith.constant 0 : index
    %9 = vector.load %arg4[%c0_11, %c0_12] : memref<16x1xf32, #tpu.memory_space<vmem>>, vector<16x1xf32>
    %10 = vector.broadcast %9 : vector<16x1xf32> to vector<16x128xf32>
    %11 = arith.addf %8, %10 : vector<16x128xf32>
    %cst_13 = arith.constant 0.000000e+00 : f32
    %12 = vector.broadcast %cst_13 : f32 to vector<16x128xf32>
    %13 = arith.maximumf %11, %12 : vector<16x128xf32>
    %c0_14 = arith.constant 0 : index
    %c0_15 = arith.constant 0 : index
    %14 = vector.load %arg5[%c0_14, %c0_15] : memref<16x16xbf16, #tpu.memory_space<vmem>>, vector<16x16xbf16>
    %15 = arith.truncf %13 : vector<16x128xf32> to vector<16x128xbf16>
    %cst_16 = arith.constant dense<0.000000e+00> : vector<16x128xf32>
    %16 = tpu.matmul %14, %15, %cst_16 {dimension_numbers = #tpu.dot_dimension_numbers<[1], [0], [0], [1], [0, 0, 1, 1], [], []>} : vector<16x16xbf16>, vector<16x128xbf16>, vector<16x128xf32> -> vector<16x128xf32>
    %c0_17 = arith.constant 0 : index
    %c0_18 = arith.constant 0 : index
    %17 = vector.load %arg6[%c0_17, %c0_18] : memref<16x1xf32, #tpu.memory_space<vmem>>, vector<16x1xf32>
    %18 = vector.broadcast %17 : vector<16x1xf32> to vector<16x128xf32>
    %19 = arith.addf %16, %18 : vector<16x128xf32>
    %cst_19 = arith.constant 0.000000e+00 : f32
    %20 = vector.broadcast %cst_19 : f32 to vector<16x128xf32>
    %21 = arith.maximumf %19, %20 : vector<16x128xf32>
    %22 = arith.truncf %21 : vector<16x128xf32> to vector<16x128xbf16>
    %c0_20 = arith.constant 0 : index
    %c128 = arith.constant 128 : index
    %23 = vector.load %arg19[%c0_20, %c128] : memref<16x265xbf16, #tpu.memory_space<vmem>>, vector<16x128xbf16>
    tpu.vector_store %arg19[%c0_20, %c128], %22 {strides = array<i32>} : memref<16x265xbf16, #tpu.memory_space<vmem>>, vector<16x128xbf16>,
    %cst_21 = arith.constant 0.000000e+00 : f32
    %24 = vector.broadcast %cst_21 : f32 to vector<8x128xf32>
    %c0_22 = arith.constant 0 : index
    %c119 = arith.constant 119 : index
    %25 = vector.load %arg19[%c0_22, %c119] : memref<16x265xbf16, #tpu.memory_space<vmem>>, vector<16x128xbf16>
    %c0_23 = arith.constant 0 : index
    %c0_24 = arith.constant 0 : index
    %c0_25 = arith.constant 0 : index
    %26 = vector.load %arg7[%c0_23, %c0_24, %c0_25] : memref<9x8x16xbf16, #tpu.memory_space<vmem>>, vector<1x8x16xbf16>
    %27 = vector.shape_cast %26 : vector<1x8x16xbf16> to vector<8x16xbf16>
    %cst_26 = arith.constant dense<0.000000e+00> : vector<8x128xf32>
    %28 = tpu.matmul %27, %25, %cst_26 {dimension_numbers = #tpu.dot_dimension_numbers<[1], [0], [0], [1], [0, 0, 1, 1], [], []>} : vector<8x16xbf16>, vector<16x128xbf16>, vector<8x128xf32> -> vector<8x128xf32>
    %29 = vector.extract_strided_slice %4 {offsets = [0, 0], sizes = [1, 128], strides = [1, 1]} : vector<9x128xf32> to vector<1x128xf32>
    %30 = vector.broadcast %29 : vector<1x128xf32> to vector<8x128xf32>
    %31 = arith.mulf %28, %30 : vector<8x128xf32>
    %32 = arith.addf %24, %31 : vector<8x128xf32>
    %c0_27 = arith.constant 0 : index
    %c120 = arith.constant 120 : index
    %33 = vector.load %arg19[%c0_27, %c120] : memref<16x265xbf16, #tpu.memory_space<vmem>>, vector<16x128xbf16>
    %c1 = arith.constant 1 : index
    %c0_28 = arith.constant 0 : index
    %c0_29 = arith.constant 0 : index
    %34 = vector.load %arg7[%c1, %c0_28, %c0_29] : memref<9x8x16xbf16, #tpu.memory_space<vmem>>, vector<1x8x16xbf16>
    %35 = vector.shape_cast %34 : vector<1x8x16xbf16> to vector<8x16xbf16>
    %cst_30 = arith.constant dense<0.000000e+00> : vector<8x128xf32>
    %36 = tpu.matmul %35, %33, %cst_30 {dimension_numbers = #tpu.dot_dimension_numbers<[1], [0], [0], [1], [0, 0, 1, 1], [], []>} : vector<8x16xbf16>, vector<16x128xbf16>, vector<8x128xf32> -> vector<8x128xf32>
    %37 = vector.extract_strided_slice %4 {offsets = [1, 0], sizes = [1, 128], strides = [1, 1]} : vector<9x128xf32> to vector<1x128xf32>
    %38 = vector.broadcast %37 : vector<1x128xf32> to vector<8x128xf32>
    %39 = arith.mulf %36, %38 : vector<8x128xf32>
    %40 = arith.addf %32, %39 : vector<8x128xf32>
    %c0_31 = arith.constant 0 : index
    %c121 = arith.constant 121 : index
    %41 = vector.load %arg19[%c0_31, %c121] : memref<16x265xbf16, #tpu.memory_space<vmem>>, vector<16x128xbf16>
    %c2 = arith.constant 2 : index
    %c0_32 = arith.constant 0 : index
    %c0_33 = arith.constant 0 : index
    %42 = vector.load %arg7[%c2, %c0_32, %c0_33] : memref<9x8x16xbf16, #tpu.memory_space<vmem>>, vector<1x8x16xbf16>
    %43 = vector.shape_cast %42 : vector<1x8x16xbf16> to vector<8x16xbf16>
    %cst_34 = arith.constant dense<0.000000e+00> : vector<8x128xf32>
    %44 = tpu.matmul %43, %41, %cst_34 {dimension_numbers = #tpu.dot_dimension_numbers<[1], [0], [0], [1], [0, 0, 1, 1], [], []>} : vector<8x16xbf16>, vector<16x128xbf16>, vector<8x128xf32> -> vector<8x128xf32>
    %45 = vector.extract_strided_slice %4 {offsets = [2, 0], sizes = [1, 128], strides = [1, 1]} : vector<9x128xf32> to vector<1x128xf32>
    %46 = vector.broadcast %45 : vector<1x128xf32> to vector<8x128xf32>
    %47 = arith.mulf %44, %46 : vector<8x128xf32>
    %48 = arith.addf %40, %47 : vector<8x128xf32>
    %c0_35 = arith.constant 0 : index
    %c127 = arith.constant 127 : index
    %49 = vector.load %arg19[%c0_35, %c127] : memref<16x265xbf16, #tpu.memory_space<vmem>>, vector<16x128xbf16>
    %c3 = arith.constant 3 : index
    %c0_36 = arith.constant 0 : index
    %c0_37 = arith.constant 0 : index
    %50 = vector.load %arg7[%c3, %c0_36, %c0_37] : memref<9x8x16xbf16, #tpu.memory_space<vmem>>, vector<1x8x16xbf16>
    %51 = vector.shape_cast %50 : vector<1x8x16xbf16> to vector<8x16xbf16>
    %cst_38 = arith.constant dense<0.000000e+00> : vector<8x128xf32>
    %52 = tpu.matmul %51, %49, %cst_38 {dimension_numbers = #tpu.dot_dimension_numbers<[1], [0], [0], [1], [0, 0, 1, 1], [], []>} : vector<8x16xbf16>, vector<16x128xbf16>, vector<8x128xf32> -> vector<8x128xf32>
    %53 = vector.extract_strided_slice %4 {offsets = [3, 0], sizes = [1, 128], strides = [1, 1]} : vector<9x128xf32> to vector<1x128xf32>
    %54 = vector.broadcast %53 : vector<1x128xf32> to vector<8x128xf32>
    %55 = arith.mulf %52, %54 : vector<8x128xf32>
    %56 = arith.addf %48, %55 : vector<8x128xf32>
    %c0_39 = arith.constant 0 : index
    %c128_40 = arith.constant 128 : index
    %57 = vector.load %arg19[%c0_39, %c128_40] : memref<16x265xbf16, #tpu.memory_space<vmem>>, vector<16x128xbf16>
    %c4 = arith.constant 4 : index
    %c0_41 = arith.constant 0 : index
    %c0_42 = arith.constant 0 : index
    %58 = vector.load %arg7[%c4, %c0_41, %c0_42] : memref<9x8x16xbf16, #tpu.memory_space<vmem>>, vector<1x8x16xbf16>
    %59 = vector.shape_cast %58 : vector<1x8x16xbf16> to vector<8x16xbf16>
    %cst_43 = arith.constant dense<0.000000e+00> : vector<8x128xf32>
    %60 = tpu.matmul %59, %57, %cst_43 {dimension_numbers = #tpu.dot_dimension_numbers<[1], [0], [0], [1], [0, 0, 1, 1], [], []>} : vector<8x16xbf16>, vector<16x128xbf16>, vector<8x128xf32> -> vector<8x128xf32>
    %61 = vector.extract_strided_slice %4 {offsets = [4, 0], sizes = [1, 128], strides = [1, 1]} : vector<9x128xf32> to vector<1x128xf32>
    %62 = vector.broadcast %61 : vector<1x128xf32> to vector<8x128xf32>
    %63 = arith.mulf %60, %62 : vector<8x128xf32>
    %64 = arith.addf %56, %63 : vector<8x128xf32>
    %c0_44 = arith.constant 0 : index
    %c129 = arith.constant 129 : index
    %65 = vector.load %arg19[%c0_44, %c129] : memref<16x265xbf16, #tpu.memory_space<vmem>>, vector<16x128xbf16>
    %c5 = arith.constant 5 : index
    %c0_45 = arith.constant 0 : index
    %c0_46 = arith.constant 0 : index
    %66 = vector.load %arg7[%c5, %c0_45, %c0_46] : memref<9x8x16xbf16, #tpu.memory_space<vmem>>, vector<1x8x16xbf16>
    %67 = vector.shape_cast %66 : vector<1x8x16xbf16> to vector<8x16xbf16>
    %cst_47 = arith.constant dense<0.000000e+00> : vector<8x128xf32>
    %68 = tpu.matmul %67, %65, %cst_47 {dimension_numbers = #tpu.dot_dimension_numbers<[1], [0], [0], [1], [0, 0, 1, 1], [], []>} : vector<8x16xbf16>, vector<16x128xbf16>, vector<8x128xf32> -> vector<8x128xf32>
    %69 = vector.extract_strided_slice %4 {offsets = [5, 0], sizes = [1, 128], strides = [1, 1]} : vector<9x128xf32> to vector<1x128xf32>
    %70 = vector.broadcast %69 : vector<1x128xf32> to vector<8x128xf32>
    %71 = arith.mulf %68, %70 : vector<8x128xf32>
    %72 = arith.addf %64, %71 : vector<8x128xf32>
    %c0_48 = arith.constant 0 : index
    %c135 = arith.constant 135 : index
    %73 = vector.load %arg19[%c0_48, %c135] : memref<16x265xbf16, #tpu.memory_space<vmem>>, vector<16x128xbf16>
    %c6 = arith.constant 6 : index
    %c0_49 = arith.constant 0 : index
    %c0_50 = arith.constant 0 : index
    %74 = vector.load %arg7[%c6, %c0_49, %c0_50] : memref<9x8x16xbf16, #tpu.memory_space<vmem>>, vector<1x8x16xbf16>
    %75 = vector.shape_cast %74 : vector<1x8x16xbf16> to vector<8x16xbf16>
    %cst_51 = arith.constant dense<0.000000e+00> : vector<8x128xf32>
    %76 = tpu.matmul %75, %73, %cst_51 {dimension_numbers = #tpu.dot_dimension_numbers<[1], [0], [0], [1], [0, 0, 1, 1], [], []>} : vector<8x16xbf16>, vector<16x128xbf16>, vector<8x128xf32> -> vector<8x128xf32>
    %77 = vector.extract_strided_slice %4 {offsets = [6, 0], sizes = [1, 128], strides = [1, 1]} : vector<9x128xf32> to vector<1x128xf32>
    %78 = vector.broadcast %77 : vector<1x128xf32> to vector<8x128xf32>
    %79 = arith.mulf %76, %78 : vector<8x128xf32>
    %80 = arith.addf %72, %79 : vector<8x128xf32>
    %c0_52 = arith.constant 0 : index
    %c136 = arith.constant 136 : index
    %81 = vector.load %arg19[%c0_52, %c136] : memref<16x265xbf16, #tpu.memory_space<vmem>>, vector<16x128xbf16>
    %c7 = arith.constant 7 : index
    %c0_53 = arith.constant 0 : index
    %c0_54 = arith.constant 0 : index
    %82 = vector.load %arg7[%c7, %c0_53, %c0_54] : memref<9x8x16xbf16, #tpu.memory_space<vmem>>, vector<1x8x16xbf16>
    %83 = vector.shape_cast %82 : vector<1x8x16xbf16> to vector<8x16xbf16>
    %cst_55 = arith.constant dense<0.000000e+00> : vector<8x128xf32>
    %84 = tpu.matmul %83, %81, %cst_55 {dimension_numbers = #tpu.dot_dimension_numbers<[1], [0], [0], [1], [0, 0, 1, 1], [], []>} : vector<8x16xbf16>, vector<16x128xbf16>, vector<8x128xf32> -> vector<8x128xf32>
    %85 = vector.extract_strided_slice %4 {offsets = [7, 0], sizes = [1, 128], strides = [1, 1]} : vector<9x128xf32> to vector<1x128xf32>
    %86 = vector.broadcast %85 : vector<1x128xf32> to vector<8x128xf32>
    %87 = arith.mulf %84, %86 : vector<8x128xf32>
    %88 = arith.addf %80, %87 : vector<8x128xf32>
    %c0_56 = arith.constant 0 : index
    %c137 = arith.constant 137 : index
    %89 = vector.load %arg19[%c0_56, %c137] : memref<16x265xbf16, #tpu.memory_space<vmem>>, vector<16x128xbf16>
    %c8 = arith.constant 8 : index
    %c0_57 = arith.constant 0 : index
    %c0_58 = arith.constant 0 : index
    %90 = vector.load %arg7[%c8, %c0_57, %c0_58] : memref<9x8x16xbf16, #tpu.memory_space<vmem>>, vector<1x8x16xbf16>
    %91 = vector.shape_cast %90 : vector<1x8x16xbf16> to vector<8x16xbf16>
    %cst_59 = arith.constant dense<0.000000e+00> : vector<8x128xf32>
    %92 = tpu.matmul %91, %89, %cst_59 {dimension_numbers = #tpu.dot_dimension_numbers<[1], [0], [0], [1], [0, 0, 1, 1], [], []>} : vector<8x16xbf16>, vector<16x128xbf16>, vector<8x128xf32> -> vector<8x128xf32>
    %93 = vector.extract_strided_slice %4 {offsets = [8, 0], sizes = [1, 128], strides = [1, 1]} : vector<9x128xf32> to vector<1x128xf32>
    %94 = vector.broadcast %93 : vector<1x128xf32> to vector<8x128xf32>
    %95 = arith.mulf %92, %94 : vector<8x128xf32>
    %96 = arith.addf %88, %95 : vector<8x128xf32>
    %c16 = arith.constant 16 : index
    %c0_60 = arith.constant 0 : index
    %97 = vector.load %arg18[%c16, %c0_60] : memref<32x128xf32, #tpu.memory_space<vmem>>, vector<8x128xf32>
    tpu.vector_store %arg18[%c16, %c0_60], %96 {strides = array<i32>} : memref<32x128xf32, #tpu.memory_space<vmem>>, vector<8x128xf32>,
    %c0_61 = arith.constant 0 : index
    %c0_62 = arith.constant 0 : index
    %98 = vector.load %arg18[%c0_61, %c0_62] : memref<32x128xf32, #tpu.memory_space<vmem>>, vector<24x128xf32>
    %c0_63 = arith.constant 0 : index
    %c0_64 = arith.constant 0 : index
    %99 = vector.load %arg8[%c0_63, %c0_64] : memref<24x1xf32, #tpu.memory_space<vmem>>, vector<24x1xf32>
    %100 = vector.broadcast %99 : vector<24x1xf32> to vector<24x128xf32>
    %101 = arith.mulf %98, %100 : vector<24x128xf32>
    %c0_65 = arith.constant 0 : index
    %c0_66 = arith.constant 0 : index
    %102 = vector.load %arg9[%c0_65, %c0_66] : memref<24x1xf32, #tpu.memory_space<vmem>>, vector<24x1xf32>
    %103 = vector.broadcast %102 : vector<24x1xf32> to vector<24x128xf32>
    %104 = arith.addf %101, %103 : vector<24x128xf32>
    %cst_67 = arith.constant 0.000000e+00 : f32
    %105 = vector.broadcast %cst_67 : f32 to vector<24x128xf32>
    %106 = arith.maximumf %104, %105 : vector<24x128xf32>
    %c0_68 = arith.constant 0 : index
    %c0_69 = arith.constant 0 : index
    %107 = vector.load %arg10[%c0_68, %c0_69] : memref<16x24xbf16, #tpu.memory_space<vmem>>, vector<16x24xbf16>
    %108 = arith.truncf %106 : vector<24x128xf32> to vector<24x128xbf16>
    %cst_70 = arith.constant dense<0.000000e+00> : vector<16x128xf32>
    %109 = tpu.matmul %107, %108, %cst_70 {dimension_numbers = #tpu.dot_dimension_numbers<[1], [0], [0], [1], [0, 0, 1, 1], [], []>} : vector<16x24xbf16>, vector<24x128xbf16>, vector<16x128xf32> -> vector<16x128xf32>
    %c0_71 = arith.constant 0 : index
    %c0_72 = arith.constant 0 : index
    %110 = vector.load %arg11[%c0_71, %c0_72] : memref<16x1xf32, #tpu.memory_space<vmem>>, vector<16x1xf32>
    %111 = vector.broadcast %110 : vector<16x1xf32> to vector<16x128xf32>
    %112 = arith.addf %109, %111 : vector<16x128xf32>
    %cst_73 = arith.constant 0.000000e+00 : f32
    %113 = vector.broadcast %cst_73 : f32 to vector<16x128xf32>
    %114 = arith.maximumf %112, %113 : vector<16x128xf32>
    %115 = arith.truncf %114 : vector<16x128xf32> to vector<16x128xbf16>
    %c0_74 = arith.constant 0 : index
    %c128_75 = arith.constant 128 : index
    %116 = vector.load %arg19[%c0_74, %c128_75] : memref<16x265xbf16, #tpu.memory_space<vmem>>, vector<16x128xbf16>
    tpu.vector_store %arg19[%c0_74, %c128_75], %115 {strides = array<i32>} : memref<16x265xbf16, #tpu.memory_space<vmem>>, vector<16x128xbf16>,
    %cst_76 = arith.constant 0.000000e+00 : f32
    %117 = vector.broadcast %cst_76 : f32 to vector<8x128xf32>
    %c0_77 = arith.constant 0 : index
    %c119_78 = arith.constant 119 : index
    %118 = vector.load %arg19[%c0_77, %c119_78] : memref<16x265xbf16, #tpu.memory_space<vmem>>, vector<16x128xbf16>
    %c0_79 = arith.constant 0 : index
    %c0_80 = arith.constant 0 : index
    %c0_81 = arith.constant 0 : index
    %119 = vector.load %arg12[%c0_79, %c0_80, %c0_81] : memref<9x8x16xbf16, #tpu.memory_space<vmem>>, vector<1x8x16xbf16>
    %120 = vector.shape_cast %119 : vector<1x8x16xbf16> to vector<8x16xbf16>
    %cst_82 = arith.constant dense<0.000000e+00> : vector<8x128xf32>
    %121 = tpu.matmul %120, %118, %cst_82 {dimension_numbers = #tpu.dot_dimension_numbers<[1], [0], [0], [1], [0, 0, 1, 1], [], []>} : vector<8x16xbf16>, vector<16x128xbf16>, vector<8x128xf32> -> vector<8x128xf32>
    %122 = vector.extract_strided_slice %4 {offsets = [0, 0], sizes = [1, 128], strides = [1, 1]} : vector<9x128xf32> to vector<1x128xf32>
    %123 = vector.broadcast %122 : vector<1x128xf32> to vector<8x128xf32>
    %124 = arith.mulf %121, %123 : vector<8x128xf32>
    %125 = arith.addf %117, %124 : vector<8x128xf32>
    %c0_83 = arith.constant 0 : index
    %c120_84 = arith.constant 120 : index
    %126 = vector.load %arg19[%c0_83, %c120_84] : memref<16x265xbf16, #tpu.memory_space<vmem>>, vector<16x128xbf16>
    %c1_85 = arith.constant 1 : index
    %c0_86 = arith.constant 0 : index
    %c0_87 = arith.constant 0 : index
    %127 = vector.load %arg12[%c1_85, %c0_86, %c0_87] : memref<9x8x16xbf16, #tpu.memory_space<vmem>>, vector<1x8x16xbf16>
    %128 = vector.shape_cast %127 : vector<1x8x16xbf16> to vector<8x16xbf16>
    %cst_88 = arith.constant dense<0.000000e+00> : vector<8x128xf32>
    %129 = tpu.matmul %128, %126, %cst_88 {dimension_numbers = #tpu.dot_dimension_numbers<[1], [0], [0], [1], [0, 0, 1, 1], [], []>} : vector<8x16xbf16>, vector<16x128xbf16>, vector<8x128xf32> -> vector<8x128xf32>
    %130 = vector.extract_strided_slice %4 {offsets = [1, 0], sizes = [1, 128], strides = [1, 1]} : vector<9x128xf32> to vector<1x128xf32>
    %131 = vector.broadcast %130 : vector<1x128xf32> to vector<8x128xf32>
    %132 = arith.mulf %129, %131 : vector<8x128xf32>
    %133 = arith.addf %125, %132 : vector<8x128xf32>
    %c0_89 = arith.constant 0 : index
    %c121_90 = arith.constant 121 : index
    %134 = vector.load %arg19[%c0_89, %c121_90] : memref<16x265xbf16, #tpu.memory_space<vmem>>, vector<16x128xbf16>
    %c2_91 = arith.constant 2 : index
    %c0_92 = arith.constant 0 : index
    %c0_93 = arith.constant 0 : index
    %135 = vector.load %arg12[%c2_91, %c0_92, %c0_93] : memref<9x8x16xbf16, #tpu.memory_space<vmem>>, vector<1x8x16xbf16>
    %136 = vector.shape_cast %135 : vector<1x8x16xbf16> to vector<8x16xbf16>
    %cst_94 = arith.constant dense<0.000000e+00> : vector<8x128xf32>
    %137 = tpu.matmul %136, %134, %cst_94 {dimension_numbers = #tpu.dot_dimension_numbers<[1], [0], [0], [1], [0, 0, 1, 1], [], []>} : vector<8x16xbf16>, vector<16x128xbf16>, vector<8x128xf32> -> vector<8x128xf32>
    %138 = vector.extract_strided_slice %4 {offsets = [2, 0], sizes = [1, 128], strides = [1, 1]} : vector<9x128xf32> to vector<1x128xf32>
    %139 = vector.broadcast %138 : vector<1x128xf32> to vector<8x128xf32>
    %140 = arith.mulf %137, %139 : vector<8x128xf32>
    %141 = arith.addf %133, %140 : vector<8x128xf32>
    %c0_95 = arith.constant 0 : index
    %c127_96 = arith.constant 127 : index
    %142 = vector.load %arg19[%c0_95, %c127_96] : memref<16x265xbf16, #tpu.memory_space<vmem>>, vector<16x128xbf16>
    %c3_97 = arith.constant 3 : index
    %c0_98 = arith.constant 0 : index
    %c0_99 = arith.constant 0 : index
    %143 = vector.load %arg12[%c3_97, %c0_98, %c0_99] : memref<9x8x16xbf16, #tpu.memory_space<vmem>>, vector<1x8x16xbf16>
    %144 = vector.shape_cast %143 : vector<1x8x16xbf16> to vector<8x16xbf16>
    %cst_100 = arith.constant dense<0.000000e+00> : vector<8x128xf32>
    %145 = tpu.matmul %144, %142, %cst_100 {dimension_numbers = #tpu.dot_dimension_numbers<[1], [0], [0], [1], [0, 0, 1, 1], [], []>} : vector<8x16xbf16>, vector<16x128xbf16>, vector<8x128xf32> -> vector<8x128xf32>
    %146 = vector.extract_strided_slice %4 {offsets = [3, 0], sizes = [1, 128], strides = [1, 1]} : vector<9x128xf32> to vector<1x128xf32>
    %147 = vector.broadcast %146 : vector<1x128xf32> to vector<8x128xf32>
    %148 = arith.mulf %145, %147 : vector<8x128xf32>
    %149 = arith.addf %141, %148 : vector<8x128xf32>
    %c0_101 = arith.constant 0 : index
    %c128_102 = arith.constant 128 : index
    %150 = vector.load %arg19[%c0_101, %c128_102] : memref<16x265xbf16, #tpu.memory_space<vmem>>, vector<16x128xbf16>
    %c4_103 = arith.constant 4 : index
    %c0_104 = arith.constant 0 : index
    %c0_105 = arith.constant 0 : index
    %151 = vector.load %arg12[%c4_103, %c0_104, %c0_105] : memref<9x8x16xbf16, #tpu.memory_space<vmem>>, vector<1x8x16xbf16>
    %152 = vector.shape_cast %151 : vector<1x8x16xbf16> to vector<8x16xbf16>
    %cst_106 = arith.constant dense<0.000000e+00> : vector<8x128xf32>
    %153 = tpu.matmul %152, %150, %cst_106 {dimension_numbers = #tpu.dot_dimension_numbers<[1], [0], [0], [1], [0, 0, 1, 1], [], []>} : vector<8x16xbf16>, vector<16x128xbf16>, vector<8x128xf32> -> vector<8x128xf32>
    %154 = vector.extract_strided_slice %4 {offsets = [4, 0], sizes = [1, 128], strides = [1, 1]} : vector<9x128xf32> to vector<1x128xf32>
    %155 = vector.broadcast %154 : vector<1x128xf32> to vector<8x128xf32>
    %156 = arith.mulf %153, %155 : vector<8x128xf32>
    %157 = arith.addf %149, %156 : vector<8x128xf32>
    %c0_107 = arith.constant 0 : index
    %c129_108 = arith.constant 129 : index
    %158 = vector.load %arg19[%c0_107, %c129_108] : memref<16x265xbf16, #tpu.memory_space<vmem>>, vector<16x128xbf16>
    %c5_109 = arith.constant 5 : index
    %c0_110 = arith.constant 0 : index
    %c0_111 = arith.constant 0 : index
    %159 = vector.load %arg12[%c5_109, %c0_110, %c0_111] : memref<9x8x16xbf16, #tpu.memory_space<vmem>>, vector<1x8x16xbf16>
    %160 = vector.shape_cast %159 : vector<1x8x16xbf16> to vector<8x16xbf16>
    %cst_112 = arith.constant dense<0.000000e+00> : vector<8x128xf32>
    %161 = tpu.matmul %160, %158, %cst_112 {dimension_numbers = #tpu.dot_dimension_numbers<[1], [0], [0], [1], [0, 0, 1, 1], [], []>} : vector<8x16xbf16>, vector<16x128xbf16>, vector<8x128xf32> -> vector<8x128xf32>
    %162 = vector.extract_strided_slice %4 {offsets = [5, 0], sizes = [1, 128], strides = [1, 1]} : vector<9x128xf32> to vector<1x128xf32>
    %163 = vector.broadcast %162 : vector<1x128xf32> to vector<8x128xf32>
    %164 = arith.mulf %161, %163 : vector<8x128xf32>
    %165 = arith.addf %157, %164 : vector<8x128xf32>
    %c0_113 = arith.constant 0 : index
    %c135_114 = arith.constant 135 : index
    %166 = vector.load %arg19[%c0_113, %c135_114] : memref<16x265xbf16, #tpu.memory_space<vmem>>, vector<16x128xbf16>
    %c6_115 = arith.constant 6 : index
    %c0_116 = arith.constant 0 : index
    %c0_117 = arith.constant 0 : index
    %167 = vector.load %arg12[%c6_115, %c0_116, %c0_117] : memref<9x8x16xbf16, #tpu.memory_space<vmem>>, vector<1x8x16xbf16>
    %168 = vector.shape_cast %167 : vector<1x8x16xbf16> to vector<8x16xbf16>
    %cst_118 = arith.constant dense<0.000000e+00> : vector<8x128xf32>
    %169 = tpu.matmul %168, %166, %cst_118 {dimension_numbers = #tpu.dot_dimension_numbers<[1], [0], [0], [1], [0, 0, 1, 1], [], []>} : vector<8x16xbf16>, vector<16x128xbf16>, vector<8x128xf32> -> vector<8x128xf32>
    %170 = vector.extract_strided_slice %4 {offsets = [6, 0], sizes = [1, 128], strides = [1, 1]} : vector<9x128xf32> to vector<1x128xf32>
    %171 = vector.broadcast %170 : vector<1x128xf32> to vector<8x128xf32>
    %172 = arith.mulf %169, %171 : vector<8x128xf32>
    %173 = arith.addf %165, %172 : vector<8x128xf32>
    %c0_119 = arith.constant 0 : index
    %c136_120 = arith.constant 136 : index
    %174 = vector.load %arg19[%c0_119, %c136_120] : memref<16x265xbf16, #tpu.memory_space<vmem>>, vector<16x128xbf16>
    %c7_121 = arith.constant 7 : index
    %c0_122 = arith.constant 0 : index
    %c0_123 = arith.constant 0 : index
    %175 = vector.load %arg12[%c7_121, %c0_122, %c0_123] : memref<9x8x16xbf16, #tpu.memory_space<vmem>>, vector<1x8x16xbf16>
    %176 = vector.shape_cast %175 : vector<1x8x16xbf16> to vector<8x16xbf16>
    %cst_124 = arith.constant dense<0.000000e+00> : vector<8x128xf32>
    %177 = tpu.matmul %176, %174, %cst_124 {dimension_numbers = #tpu.dot_dimension_numbers<[1], [0], [0], [1], [0, 0, 1, 1], [], []>} : vector<8x16xbf16>, vector<16x128xbf16>, vector<8x128xf32> -> vector<8x128xf32>
    %178 = vector.extract_strided_slice %4 {offsets = [7, 0], sizes = [1, 128], strides = [1, 1]} : vector<9x128xf32> to vector<1x128xf32>
    %179 = vector.broadcast %178 : vector<1x128xf32> to vector<8x128xf32>
    %180 = arith.mulf %177, %179 : vector<8x128xf32>
    %181 = arith.addf %173, %180 : vector<8x128xf32>
    %c0_125 = arith.constant 0 : index
    %c137_126 = arith.constant 137 : index
    %182 = vector.load %arg19[%c0_125, %c137_126] : memref<16x265xbf16, #tpu.memory_space<vmem>>, vector<16x128xbf16>
    %c8_127 = arith.constant 8 : index
    %c0_128 = arith.constant 0 : index
    %c0_129 = arith.constant 0 : index
    %183 = vector.load %arg12[%c8_127, %c0_128, %c0_129] : memref<9x8x16xbf16, #tpu.memory_space<vmem>>, vector<1x8x16xbf16>
    %184 = vector.shape_cast %183 : vector<1x8x16xbf16> to vector<8x16xbf16>
    %cst_130 = arith.constant dense<0.000000e+00> : vector<8x128xf32>
    %185 = tpu.matmul %184, %182, %cst_130 {dimension_numbers = #tpu.dot_dimension_numbers<[1], [0], [0], [1], [0, 0, 1, 1], [], []>} : vector<8x16xbf16>, vector<16x128xbf16>, vector<8x128xf32> -> vector<8x128xf32>
    %186 = vector.extract_strided_slice %4 {offsets = [8, 0], sizes = [1, 128], strides = [1, 1]} : vector<9x128xf32> to vector<1x128xf32>
    %187 = vector.broadcast %186 : vector<1x128xf32> to vector<8x128xf32>
    %188 = arith.mulf %185, %187 : vector<8x128xf32>
    %189 = arith.addf %181, %188 : vector<8x128xf32>
    %c24 = arith.constant 24 : index
    %c0_131 = arith.constant 0 : index
    %190 = vector.load %arg18[%c24, %c0_131] : memref<32x128xf32, #tpu.memory_space<vmem>>, vector<8x128xf32>
    tpu.vector_store %arg18[%c24, %c0_131], %189 {strides = array<i32>} : memref<32x128xf32, #tpu.memory_space<vmem>>, vector<8x128xf32>,
    %c0_132 = arith.constant 0 : index
    %c0_133 = arith.constant 0 : index
    %191 = vector.load %arg18[%c0_132, %c0_133] : memref<32x128xf32, #tpu.memory_space<vmem>>, vector<32x128xf32>
    %c0_134 = arith.constant 0 : index
    %c0_135 = arith.constant 0 : index
    %192 = vector.load %arg13[%c0_134, %c0_135] : memref<32x1xf32, #tpu.memory_space<vmem>>, vector<32x1xf32>
    %193 = vector.broadcast %192 : vector<32x1xf32> to vector<32x128xf32>
    %194 = arith.mulf %191, %193 : vector<32x128xf32>
    %c0_136 = arith.constant 0 : index
    %c0_137 = arith.constant 0 : index
    %195 = vector.load %arg14[%c0_136, %c0_137] : memref<32x1xf32, #tpu.memory_space<vmem>>, vector<32x1xf32>
    %196 = vector.broadcast %195 : vector<32x1xf32> to vector<32x128xf32>
    %197 = arith.addf %194, %196 : vector<32x128xf32>
    %cst_138 = arith.constant 0.000000e+00 : f32
    %198 = vector.broadcast %cst_138 : f32 to vector<32x128xf32>
    %199 = arith.maximumf %197, %198 : vector<32x128xf32>
    %c0_139 = arith.constant 0 : index
    %c0_140 = arith.constant 0 : index
    %200 = vector.load %arg15[%c0_139, %c0_140] : memref<16x32xbf16, #tpu.memory_space<vmem>>, vector<16x32xbf16>
    %201 = arith.truncf %199 : vector<32x128xf32> to vector<32x128xbf16>
    %cst_141 = arith.constant dense<0.000000e+00> : vector<16x128xf32>
    %202 = tpu.matmul %200, %201, %cst_141 {dimension_numbers = #tpu.dot_dimension_numbers<[1], [0], [0], [1], [0, 0, 1, 1], [], []>} : vector<16x32xbf16>, vector<32x128xbf16>, vector<16x128xf32> -> vector<16x128xf32>
    %203 = arith.truncf %202 : vector<16x128xf32> to vector<16x128xbf16>
    %c0_142 = arith.constant 0 : index
    %c0_143 = arith.constant 0 : index
    %204 = vector.load %arg16[%c0_142, %c0_143] : memref<128x32xbf16, #tpu.memory_space<vmem>>, vector<128x32xbf16>
    %cst_144 = arith.constant dense<0.000000e+00> : vector<16x32xf32>
    %205 = tpu.matmul %203, %204, %cst_144 {dimension_numbers = #tpu.dot_dimension_numbers<[1], [0], [0], [1], [0, 0, 1, 1], [], []>} : vector<16x128xbf16>, vector<128x32xbf16>, vector<16x32xf32> -> vector<16x32xf32>
    %c0_145 = arith.constant 0 : index
    %c0_146 = arith.constant 0 : index
    %206 = vector.load %arg17[%c0_145, %c0_146] : memref<16x32xf32, #tpu.memory_space<vmem>>, vector<16x32xf32>
    tpu.vector_store %arg17[%c0_145, %c0_146], %205 {strides = array<i32>} : memref<16x32xf32, #tpu.memory_space<vmem>>, vector<16x32xf32>,
    return
  }
  func.func @transform_0(%arg0: i32) -> (i32, i32) {
    %c0_i32 = arith.constant 0 : i32
    %c0_i32_0 = arith.constant 0 : i32
    %c0_i32_1 = arith.constant 0 : i32
    return %c0_i32, %c0_i32_0 : i32, i32
  }
  func.func @transform_1(%arg0: i32) -> (i32, i32) {
    %c0_i32 = arith.constant 0 : i32
    %c0_i32_0 = arith.constant 0 : i32
    %c0_i32_1 = arith.constant 0 : i32
    return %c0_i32, %c0_i32_0 : i32, i32
  }
  func.func @transform_2(%arg0: i32) -> (i32, i32) {
    %c0_i32 = arith.constant 0 : i32
    %c0_i32_0 = arith.constant 0 : i32
    %c0_i32_1 = arith.constant 0 : i32
    return %c0_i32, %c0_i32_0 : i32, i32
  }
  func.func @transform_3(%arg0: i32) -> (i32, i32) {
    %c0_i32 = arith.constant 0 : i32
    %c0_i32_0 = arith.constant 0 : i32
    %c0_i32_1 = arith.constant 0 : i32
    return %c0_i32, %c0_i32_0 : i32, i32
  }
  func.func @transform_4(%arg0: i32) -> (i32, i32) {
    %c0_i32 = arith.constant 0 : i32
    %c0_i32_0 = arith.constant 0 : i32
    %c0_i32_1 = arith.constant 0 : i32
    return %c0_i32, %c0_i32_0 : i32, i32
  }
  func.func @transform_5(%arg0: i32) -> (i32, i32) {
    %c0_i32 = arith.constant 0 : i32
    %c0_i32_0 = arith.constant 0 : i32
    %c0_i32_1 = arith.constant 0 : i32
    return %c0_i32, %c0_i32_0 : i32, i32
  }
  func.func @transform_6(%arg0: i32) -> (i32, i32, i32) {
    %c0_i32 = arith.constant 0 : i32
    %c0_i32_0 = arith.constant 0 : i32
    %c0_i32_1 = arith.constant 0 : i32
    %c0_i32_2 = arith.constant 0 : i32
    return %c0_i32, %c0_i32_0, %c0_i32_1 : i32, i32, i32
  }
  func.func @transform_7(%arg0: i32) -> (i32, i32) {
    %c0_i32 = arith.constant 0 : i32
    %c0_i32_0 = arith.constant 0 : i32
    %c0_i32_1 = arith.constant 0 : i32
    return %c0_i32, %c0_i32_0 : i32, i32
  }
  func.func @transform_8(%arg0: i32) -> (i32, i32) {
    %c0_i32 = arith.constant 0 : i32
    %c0_i32_0 = arith.constant 0 : i32
    %c0_i32_1 = arith.constant 0 : i32
    return %c0_i32, %c0_i32_0 : i32, i32
  }
  func.func @transform_9(%arg0: i32) -> (i32, i32) {
    %c0_i32 = arith.constant 0 : i32
    %c0_i32_0 = arith.constant 0 : i32
    %c0_i32_1 = arith.constant 0 : i32
    return %c0_i32, %c0_i32_0 : i32, i32
  }
  func.func @transform_10(%arg0: i32) -> (i32, i32) {
    %c0_i32 = arith.constant 0 : i32
    %c0_i32_0 = arith.constant 0 : i32
    %c0_i32_1 = arith.constant 0 : i32
    return %c0_i32, %c0_i32_0 : i32, i32
  }
  func.func @transform_11(%arg0: i32) -> (i32, i32, i32) {
    %c0_i32 = arith.constant 0 : i32
    %c0_i32_0 = arith.constant 0 : i32
    %c0_i32_1 = arith.constant 0 : i32
    %c0_i32_2 = arith.constant 0 : i32
    return %c0_i32, %c0_i32_0, %c0_i32_1 : i32, i32, i32
  }
  func.func @transform_12(%arg0: i32) -> (i32, i32) {
    %c0_i32 = arith.constant 0 : i32
    %c0_i32_0 = arith.constant 0 : i32
    %c0_i32_1 = arith.constant 0 : i32
    return %c0_i32, %c0_i32_0 : i32, i32
  }
  func.func @transform_13(%arg0: i32) -> (i32, i32) {
    %c0_i32 = arith.constant 0 : i32
    %c0_i32_0 = arith.constant 0 : i32
    %c0_i32_1 = arith.constant 0 : i32
    return %c0_i32, %c0_i32_0 : i32, i32
  }
  func.func @transform_14(%arg0: i32) -> (i32, i32) {
    %c0_i32 = arith.constant 0 : i32
    %c0_i32_0 = arith.constant 0 : i32
    %c0_i32_1 = arith.constant 0 : i32
    return %c0_i32, %c0_i32_0 : i32, i32
  }
  func.func @transform_15(%arg0: i32) -> (i32, i32) {
    %c0_i32 = arith.constant 0 : i32
    %c0_i32_0 = arith.constant 0 : i32
    %c0_i32_1 = arith.constant 0 : i32
    return %c0_i32, %c0_i32_0 : i32, i32
  }
  func.func @transform_16(%arg0: i32) -> (i32, i32) {
    %c0_i32 = arith.constant 0 : i32
    %c0_i32_0 = arith.constant 0 : i32
    %c0_i32_1 = arith.constant 0 : i32
    return %c0_i32, %c0_i32_0 : i32, i32
  }
}

module attributes {stable_mosaic.version = 11 : i64} {
  func.func @_dense_block_kernel(%arg0: i32, %arg1: memref<16x32xf32, #tpu.memory_space<vmem>>, %arg2: memref<9x32xf32, #tpu.memory_space<vmem>>, %arg3: memref<16x1xf32, #tpu.memory_space<vmem>>, %arg4: memref<16x1xf32, #tpu.memory_space<vmem>>, %arg5: memref<16x16xbf16, #tpu.memory_space<vmem>>, %arg6: memref<16x1xf32, #tpu.memory_space<vmem>>, %arg7: memref<9x8x16xbf16, #tpu.memory_space<vmem>>, %arg8: memref<24x1xf32, #tpu.memory_space<vmem>>, %arg9: memref<24x1xf32, #tpu.memory_space<vmem>>, %arg10: memref<16x24xbf16, #tpu.memory_space<vmem>>, %arg11: memref<16x1xf32, #tpu.memory_space<vmem>>, %arg12: memref<9x8x16xbf16, #tpu.memory_space<vmem>>, %arg13: memref<32x1xf32, #tpu.memory_space<vmem>>, %arg14: memref<32x1xf32, #tpu.memory_space<vmem>>, %arg15: memref<16x32xbf16, #tpu.memory_space<vmem>>, %arg16: memref<32x8xbf16, #tpu.memory_space<vmem>>, %arg17: memref<16x8xf32, #tpu.memory_space<vmem>>, %arg18: memref<32x32xf32, #tpu.memory_space<vmem>>, %arg19: memref<16x165xbf16, #tpu.memory_space<vmem>>) attributes {dimension_semantics = [#tpu.dimension_semantics<arbitrary>], iteration_bounds = array<i64: 1>, scalar_prefetch = 0 : i64, scratch_operands = 2 : i64, tpu.core_type = #tpu.core_type<tc>, window_params = [{pipeline_mode = #tpu.pipeline_mode<synchronous>, transform_indices = @transform_0, window_bounds = array<i64: 16, 32>}, {pipeline_mode = #tpu.pipeline_mode<synchronous>, transform_indices = @transform_1, window_bounds = array<i64: 9, 32>}, {pipeline_mode = #tpu.pipeline_mode<synchronous>, transform_indices = @transform_2, window_bounds = array<i64: 16, 1>}, {pipeline_mode = #tpu.pipeline_mode<synchronous>, transform_indices = @transform_3, window_bounds = array<i64: 16, 1>}, {pipeline_mode = #tpu.pipeline_mode<synchronous>, transform_indices = @transform_4, window_bounds = array<i64: 16, 16>}, {pipeline_mode = #tpu.pipeline_mode<synchronous>, transform_indices = @transform_5, window_bounds = array<i64: 16, 1>}, {pipeline_mode = #tpu.pipeline_mode<synchronous>, transform_indices = @transform_6, window_bounds = array<i64: 9, 8, 16>}, {pipeline_mode = #tpu.pipeline_mode<synchronous>, transform_indices = @transform_7, window_bounds = array<i64: 24, 1>}, {pipeline_mode = #tpu.pipeline_mode<synchronous>, transform_indices = @transform_8, window_bounds = array<i64: 24, 1>}, {pipeline_mode = #tpu.pipeline_mode<synchronous>, transform_indices = @transform_9, window_bounds = array<i64: 16, 24>}, {pipeline_mode = #tpu.pipeline_mode<synchronous>, transform_indices = @transform_10, window_bounds = array<i64: 16, 1>}, {pipeline_mode = #tpu.pipeline_mode<synchronous>, transform_indices = @transform_11, window_bounds = array<i64: 9, 8, 16>}, {pipeline_mode = #tpu.pipeline_mode<synchronous>, transform_indices = @transform_12, window_bounds = array<i64: 32, 1>}, {pipeline_mode = #tpu.pipeline_mode<synchronous>, transform_indices = @transform_13, window_bounds = array<i64: 32, 1>}, {pipeline_mode = #tpu.pipeline_mode<synchronous>, transform_indices = @transform_14, window_bounds = array<i64: 16, 32>}, {pipeline_mode = #tpu.pipeline_mode<synchronous>, transform_indices = @transform_15, window_bounds = array<i64: 32, 8>}, {pipeline_mode = #tpu.pipeline_mode<synchronous>, transform_indices = @transform_16, window_bounds = array<i64: 16, 8>}]} {
    %cst = arith.constant 0.000000e+00 : bf16
    %0 = vector.broadcast %cst : bf16 to vector<16x165xbf16>
    %c0 = arith.constant 0 : index
    %c0_0 = arith.constant 0 : index
    %1 = vector.load %arg19[%c0, %c0_0] : memref<16x165xbf16, #tpu.memory_space<vmem>>, vector<16x165xbf16>
    tpu.vector_store %arg19[%c0, %c0_0], %0 {strides = array<i32>} : memref<16x165xbf16, #tpu.memory_space<vmem>>, vector<16x165xbf16>,
    %c0_1 = arith.constant 0 : index
    %c0_2 = arith.constant 0 : index
    %2 = vector.load %arg1[%c0_1, %c0_2] : memref<16x32xf32, #tpu.memory_space<vmem>>, vector<16x32xf32>
    %c0_3 = arith.constant 0 : index
    %c0_4 = arith.constant 0 : index
    %3 = vector.load %arg18[%c0_3, %c0_4] : memref<32x32xf32, #tpu.memory_space<vmem>>, vector<16x32xf32>
    tpu.vector_store %arg18[%c0_3, %c0_4], %2 {strides = array<i32>} : memref<32x32xf32, #tpu.memory_space<vmem>>, vector<16x32xf32>,
    %c0_5 = arith.constant 0 : index
    %c0_6 = arith.constant 0 : index
    %4 = vector.load %arg2[%c0_5, %c0_6] : memref<9x32xf32, #tpu.memory_space<vmem>>, vector<9x32xf32>
    %c0_7 = arith.constant 0 : index
    %c0_8 = arith.constant 0 : index
    %5 = vector.load %arg18[%c0_7, %c0_8] : memref<32x32xf32, #tpu.memory_space<vmem>>, vector<16x32xf32>
    %c0_9 = arith.constant 0 : index
    %c0_10 = arith.constant 0 : index
    %6 = vector.load %arg3[%c0_9, %c0_10] : memref<16x1xf32, #tpu.memory_space<vmem>>, vector<16x1xf32>
    %7 = vector.broadcast %6 : vector<16x1xf32> to vector<16x32xf32>
    %8 = arith.mulf %5, %7 : vector<16x32xf32>
    %c0_11 = arith.constant 0 : index
    %c0_12 = arith.constant 0 : index
    %9 = vector.load %arg4[%c0_11, %c0_12] : memref<16x1xf32, #tpu.memory_space<vmem>>, vector<16x1xf32>
    %10 = vector.broadcast %9 : vector<16x1xf32> to vector<16x32xf32>
    %11 = arith.addf %8, %10 : vector<16x32xf32>
    %cst_13 = arith.constant 0.000000e+00 : f32
    %12 = vector.broadcast %cst_13 : f32 to vector<16x32xf32>
    %13 = arith.maximumf %11, %12 : vector<16x32xf32>
    %c0_14 = arith.constant 0 : index
    %c0_15 = arith.constant 0 : index
    %14 = vector.load %arg5[%c0_14, %c0_15] : memref<16x16xbf16, #tpu.memory_space<vmem>>, vector<16x16xbf16>
    %15 = arith.truncf %13 : vector<16x32xf32> to vector<16x32xbf16>
    %cst_16 = arith.constant dense<0.000000e+00> : vector<16x32xf32>
    %16 = tpu.matmul %14, %15, %cst_16 {dimension_numbers = #tpu.dot_dimension_numbers<[1], [0], [0], [1], [0, 0, 1, 1], [], []>} : vector<16x16xbf16>, vector<16x32xbf16>, vector<16x32xf32> -> vector<16x32xf32>
    %c0_17 = arith.constant 0 : index
    %c0_18 = arith.constant 0 : index
    %17 = vector.load %arg6[%c0_17, %c0_18] : memref<16x1xf32, #tpu.memory_space<vmem>>, vector<16x1xf32>
    %18 = vector.broadcast %17 : vector<16x1xf32> to vector<16x32xf32>
    %19 = arith.addf %16, %18 : vector<16x32xf32>
    %cst_19 = arith.constant 0.000000e+00 : f32
    %20 = vector.broadcast %cst_19 : f32 to vector<16x32xf32>
    %21 = arith.maximumf %19, %20 : vector<16x32xf32>
    %22 = arith.truncf %21 : vector<16x32xf32> to vector<16x32xbf16>
    %c0_20 = arith.constant 0 : index
    %c128 = arith.constant 128 : index
    %23 = vector.load %arg19[%c0_20, %c128] : memref<16x165xbf16, #tpu.memory_space<vmem>>, vector<16x32xbf16>
    tpu.vector_store %arg19[%c0_20, %c128], %22 {strides = array<i32>} : memref<16x165xbf16, #tpu.memory_space<vmem>>, vector<16x32xbf16>,
    %cst_21 = arith.constant 0.000000e+00 : f32
    %24 = vector.broadcast %cst_21 : f32 to vector<8x32xf32>
    %c0_22 = arith.constant 0 : index
    %c123 = arith.constant 123 : index
    %25 = vector.load %arg19[%c0_22, %c123] : memref<16x165xbf16, #tpu.memory_space<vmem>>, vector<16x32xbf16>
    %c0_23 = arith.constant 0 : index
    %c0_24 = arith.constant 0 : index
    %c0_25 = arith.constant 0 : index
    %26 = vector.load %arg7[%c0_23, %c0_24, %c0_25] : memref<9x8x16xbf16, #tpu.memory_space<vmem>>, vector<1x8x16xbf16>
    %27 = vector.shape_cast %26 : vector<1x8x16xbf16> to vector<8x16xbf16>
    %cst_26 = arith.constant dense<0.000000e+00> : vector<8x32xf32>
    %28 = tpu.matmul %27, %25, %cst_26 {dimension_numbers = #tpu.dot_dimension_numbers<[1], [0], [0], [1], [0, 0, 1, 1], [], []>} : vector<8x16xbf16>, vector<16x32xbf16>, vector<8x32xf32> -> vector<8x32xf32>
    %29 = vector.extract_strided_slice %4 {offsets = [0, 0], sizes = [1, 32], strides = [1, 1]} : vector<9x32xf32> to vector<1x32xf32>
    %30 = vector.broadcast %29 : vector<1x32xf32> to vector<8x32xf32>
    %31 = arith.mulf %28, %30 : vector<8x32xf32>
    %32 = arith.addf %24, %31 : vector<8x32xf32>
    %c0_27 = arith.constant 0 : index
    %c124 = arith.constant 124 : index
    %33 = vector.load %arg19[%c0_27, %c124] : memref<16x165xbf16, #tpu.memory_space<vmem>>, vector<16x32xbf16>
    %c1 = arith.constant 1 : index
    %c0_28 = arith.constant 0 : index
    %c0_29 = arith.constant 0 : index
    %34 = vector.load %arg7[%c1, %c0_28, %c0_29] : memref<9x8x16xbf16, #tpu.memory_space<vmem>>, vector<1x8x16xbf16>
    %35 = vector.shape_cast %34 : vector<1x8x16xbf16> to vector<8x16xbf16>
    %cst_30 = arith.constant dense<0.000000e+00> : vector<8x32xf32>
    %36 = tpu.matmul %35, %33, %cst_30 {dimension_numbers = #tpu.dot_dimension_numbers<[1], [0], [0], [1], [0, 0, 1, 1], [], []>} : vector<8x16xbf16>, vector<16x32xbf16>, vector<8x32xf32> -> vector<8x32xf32>
    %37 = vector.extract_strided_slice %4 {offsets = [1, 0], sizes = [1, 32], strides = [1, 1]} : vector<9x32xf32> to vector<1x32xf32>
    %38 = vector.broadcast %37 : vector<1x32xf32> to vector<8x32xf32>
    %39 = arith.mulf %36, %38 : vector<8x32xf32>
    %40 = arith.addf %32, %39 : vector<8x32xf32>
    %c0_31 = arith.constant 0 : index
    %c125 = arith.constant 125 : index
    %41 = vector.load %arg19[%c0_31, %c125] : memref<16x165xbf16, #tpu.memory_space<vmem>>, vector<16x32xbf16>
    %c2 = arith.constant 2 : index
    %c0_32 = arith.constant 0 : index
    %c0_33 = arith.constant 0 : index
    %42 = vector.load %arg7[%c2, %c0_32, %c0_33] : memref<9x8x16xbf16, #tpu.memory_space<vmem>>, vector<1x8x16xbf16>
    %43 = vector.shape_cast %42 : vector<1x8x16xbf16> to vector<8x16xbf16>
    %cst_34 = arith.constant dense<0.000000e+00> : vector<8x32xf32>
    %44 = tpu.matmul %43, %41, %cst_34 {dimension_numbers = #tpu.dot_dimension_numbers<[1], [0], [0], [1], [0, 0, 1, 1], [], []>} : vector<8x16xbf16>, vector<16x32xbf16>, vector<8x32xf32> -> vector<8x32xf32>
    %45 = vector.extract_strided_slice %4 {offsets = [2, 0], sizes = [1, 32], strides = [1, 1]} : vector<9x32xf32> to vector<1x32xf32>
    %46 = vector.broadcast %45 : vector<1x32xf32> to vector<8x32xf32>
    %47 = arith.mulf %44, %46 : vector<8x32xf32>
    %48 = arith.addf %40, %47 : vector<8x32xf32>
    %c0_35 = arith.constant 0 : index
    %c127 = arith.constant 127 : index
    %49 = vector.load %arg19[%c0_35, %c127] : memref<16x165xbf16, #tpu.memory_space<vmem>>, vector<16x32xbf16>
    %c3 = arith.constant 3 : index
    %c0_36 = arith.constant 0 : index
    %c0_37 = arith.constant 0 : index
    %50 = vector.load %arg7[%c3, %c0_36, %c0_37] : memref<9x8x16xbf16, #tpu.memory_space<vmem>>, vector<1x8x16xbf16>
    %51 = vector.shape_cast %50 : vector<1x8x16xbf16> to vector<8x16xbf16>
    %cst_38 = arith.constant dense<0.000000e+00> : vector<8x32xf32>
    %52 = tpu.matmul %51, %49, %cst_38 {dimension_numbers = #tpu.dot_dimension_numbers<[1], [0], [0], [1], [0, 0, 1, 1], [], []>} : vector<8x16xbf16>, vector<16x32xbf16>, vector<8x32xf32> -> vector<8x32xf32>
    %53 = vector.extract_strided_slice %4 {offsets = [3, 0], sizes = [1, 32], strides = [1, 1]} : vector<9x32xf32> to vector<1x32xf32>
    %54 = vector.broadcast %53 : vector<1x32xf32> to vector<8x32xf32>
    %55 = arith.mulf %52, %54 : vector<8x32xf32>
    %56 = arith.addf %48, %55 : vector<8x32xf32>
    %c0_39 = arith.constant 0 : index
    %c128_40 = arith.constant 128 : index
    %57 = vector.load %arg19[%c0_39, %c128_40] : memref<16x165xbf16, #tpu.memory_space<vmem>>, vector<16x32xbf16>
    %c4 = arith.constant 4 : index
    %c0_41 = arith.constant 0 : index
    %c0_42 = arith.constant 0 : index
    %58 = vector.load %arg7[%c4, %c0_41, %c0_42] : memref<9x8x16xbf16, #tpu.memory_space<vmem>>, vector<1x8x16xbf16>
    %59 = vector.shape_cast %58 : vector<1x8x16xbf16> to vector<8x16xbf16>
    %cst_43 = arith.constant dense<0.000000e+00> : vector<8x32xf32>
    %60 = tpu.matmul %59, %57, %cst_43 {dimension_numbers = #tpu.dot_dimension_numbers<[1], [0], [0], [1], [0, 0, 1, 1], [], []>} : vector<8x16xbf16>, vector<16x32xbf16>, vector<8x32xf32> -> vector<8x32xf32>
    %61 = vector.extract_strided_slice %4 {offsets = [4, 0], sizes = [1, 32], strides = [1, 1]} : vector<9x32xf32> to vector<1x32xf32>
    %62 = vector.broadcast %61 : vector<1x32xf32> to vector<8x32xf32>
    %63 = arith.mulf %60, %62 : vector<8x32xf32>
    %64 = arith.addf %56, %63 : vector<8x32xf32>
    %c0_44 = arith.constant 0 : index
    %c129 = arith.constant 129 : index
    %65 = vector.load %arg19[%c0_44, %c129] : memref<16x165xbf16, #tpu.memory_space<vmem>>, vector<16x32xbf16>
    %c5 = arith.constant 5 : index
    %c0_45 = arith.constant 0 : index
    %c0_46 = arith.constant 0 : index
    %66 = vector.load %arg7[%c5, %c0_45, %c0_46] : memref<9x8x16xbf16, #tpu.memory_space<vmem>>, vector<1x8x16xbf16>
    %67 = vector.shape_cast %66 : vector<1x8x16xbf16> to vector<8x16xbf16>
    %cst_47 = arith.constant dense<0.000000e+00> : vector<8x32xf32>
    %68 = tpu.matmul %67, %65, %cst_47 {dimension_numbers = #tpu.dot_dimension_numbers<[1], [0], [0], [1], [0, 0, 1, 1], [], []>} : vector<8x16xbf16>, vector<16x32xbf16>, vector<8x32xf32> -> vector<8x32xf32>
    %69 = vector.extract_strided_slice %4 {offsets = [5, 0], sizes = [1, 32], strides = [1, 1]} : vector<9x32xf32> to vector<1x32xf32>
    %70 = vector.broadcast %69 : vector<1x32xf32> to vector<8x32xf32>
    %71 = arith.mulf %68, %70 : vector<8x32xf32>
    %72 = arith.addf %64, %71 : vector<8x32xf32>
    %c0_48 = arith.constant 0 : index
    %c131 = arith.constant 131 : index
    %73 = vector.load %arg19[%c0_48, %c131] : memref<16x165xbf16, #tpu.memory_space<vmem>>, vector<16x32xbf16>
    %c6 = arith.constant 6 : index
    %c0_49 = arith.constant 0 : index
    %c0_50 = arith.constant 0 : index
    %74 = vector.load %arg7[%c6, %c0_49, %c0_50] : memref<9x8x16xbf16, #tpu.memory_space<vmem>>, vector<1x8x16xbf16>
    %75 = vector.shape_cast %74 : vector<1x8x16xbf16> to vector<8x16xbf16>
    %cst_51 = arith.constant dense<0.000000e+00> : vector<8x32xf32>
    %76 = tpu.matmul %75, %73, %cst_51 {dimension_numbers = #tpu.dot_dimension_numbers<[1], [0], [0], [1], [0, 0, 1, 1], [], []>} : vector<8x16xbf16>, vector<16x32xbf16>, vector<8x32xf32> -> vector<8x32xf32>
    %77 = vector.extract_strided_slice %4 {offsets = [6, 0], sizes = [1, 32], strides = [1, 1]} : vector<9x32xf32> to vector<1x32xf32>
    %78 = vector.broadcast %77 : vector<1x32xf32> to vector<8x32xf32>
    %79 = arith.mulf %76, %78 : vector<8x32xf32>
    %80 = arith.addf %72, %79 : vector<8x32xf32>
    %c0_52 = arith.constant 0 : index
    %c132 = arith.constant 132 : index
    %81 = vector.load %arg19[%c0_52, %c132] : memref<16x165xbf16, #tpu.memory_space<vmem>>, vector<16x32xbf16>
    %c7 = arith.constant 7 : index
    %c0_53 = arith.constant 0 : index
    %c0_54 = arith.constant 0 : index
    %82 = vector.load %arg7[%c7, %c0_53, %c0_54] : memref<9x8x16xbf16, #tpu.memory_space<vmem>>, vector<1x8x16xbf16>
    %83 = vector.shape_cast %82 : vector<1x8x16xbf16> to vector<8x16xbf16>
    %cst_55 = arith.constant dense<0.000000e+00> : vector<8x32xf32>
    %84 = tpu.matmul %83, %81, %cst_55 {dimension_numbers = #tpu.dot_dimension_numbers<[1], [0], [0], [1], [0, 0, 1, 1], [], []>} : vector<8x16xbf16>, vector<16x32xbf16>, vector<8x32xf32> -> vector<8x32xf32>
    %85 = vector.extract_strided_slice %4 {offsets = [7, 0], sizes = [1, 32], strides = [1, 1]} : vector<9x32xf32> to vector<1x32xf32>
    %86 = vector.broadcast %85 : vector<1x32xf32> to vector<8x32xf32>
    %87 = arith.mulf %84, %86 : vector<8x32xf32>
    %88 = arith.addf %80, %87 : vector<8x32xf32>
    %c0_56 = arith.constant 0 : index
    %c133 = arith.constant 133 : index
    %89 = vector.load %arg19[%c0_56, %c133] : memref<16x165xbf16, #tpu.memory_space<vmem>>, vector<16x32xbf16>
    %c8 = arith.constant 8 : index
    %c0_57 = arith.constant 0 : index
    %c0_58 = arith.constant 0 : index
    %90 = vector.load %arg7[%c8, %c0_57, %c0_58] : memref<9x8x16xbf16, #tpu.memory_space<vmem>>, vector<1x8x16xbf16>
    %91 = vector.shape_cast %90 : vector<1x8x16xbf16> to vector<8x16xbf16>
    %cst_59 = arith.constant dense<0.000000e+00> : vector<8x32xf32>
    %92 = tpu.matmul %91, %89, %cst_59 {dimension_numbers = #tpu.dot_dimension_numbers<[1], [0], [0], [1], [0, 0, 1, 1], [], []>} : vector<8x16xbf16>, vector<16x32xbf16>, vector<8x32xf32> -> vector<8x32xf32>
    %93 = vector.extract_strided_slice %4 {offsets = [8, 0], sizes = [1, 32], strides = [1, 1]} : vector<9x32xf32> to vector<1x32xf32>
    %94 = vector.broadcast %93 : vector<1x32xf32> to vector<8x32xf32>
    %95 = arith.mulf %92, %94 : vector<8x32xf32>
    %96 = arith.addf %88, %95 : vector<8x32xf32>
    %c16 = arith.constant 16 : index
    %c0_60 = arith.constant 0 : index
    %97 = vector.load %arg18[%c16, %c0_60] : memref<32x32xf32, #tpu.memory_space<vmem>>, vector<8x32xf32>
    tpu.vector_store %arg18[%c16, %c0_60], %96 {strides = array<i32>} : memref<32x32xf32, #tpu.memory_space<vmem>>, vector<8x32xf32>,
    %c0_61 = arith.constant 0 : index
    %c0_62 = arith.constant 0 : index
    %98 = vector.load %arg18[%c0_61, %c0_62] : memref<32x32xf32, #tpu.memory_space<vmem>>, vector<24x32xf32>
    %c0_63 = arith.constant 0 : index
    %c0_64 = arith.constant 0 : index
    %99 = vector.load %arg8[%c0_63, %c0_64] : memref<24x1xf32, #tpu.memory_space<vmem>>, vector<24x1xf32>
    %100 = vector.broadcast %99 : vector<24x1xf32> to vector<24x32xf32>
    %101 = arith.mulf %98, %100 : vector<24x32xf32>
    %c0_65 = arith.constant 0 : index
    %c0_66 = arith.constant 0 : index
    %102 = vector.load %arg9[%c0_65, %c0_66] : memref<24x1xf32, #tpu.memory_space<vmem>>, vector<24x1xf32>
    %103 = vector.broadcast %102 : vector<24x1xf32> to vector<24x32xf32>
    %104 = arith.addf %101, %103 : vector<24x32xf32>
    %cst_67 = arith.constant 0.000000e+00 : f32
    %105 = vector.broadcast %cst_67 : f32 to vector<24x32xf32>
    %106 = arith.maximumf %104, %105 : vector<24x32xf32>
    %c0_68 = arith.constant 0 : index
    %c0_69 = arith.constant 0 : index
    %107 = vector.load %arg10[%c0_68, %c0_69] : memref<16x24xbf16, #tpu.memory_space<vmem>>, vector<16x24xbf16>
    %108 = arith.truncf %106 : vector<24x32xf32> to vector<24x32xbf16>
    %cst_70 = arith.constant dense<0.000000e+00> : vector<16x32xf32>
    %109 = tpu.matmul %107, %108, %cst_70 {dimension_numbers = #tpu.dot_dimension_numbers<[1], [0], [0], [1], [0, 0, 1, 1], [], []>} : vector<16x24xbf16>, vector<24x32xbf16>, vector<16x32xf32> -> vector<16x32xf32>
    %c0_71 = arith.constant 0 : index
    %c0_72 = arith.constant 0 : index
    %110 = vector.load %arg11[%c0_71, %c0_72] : memref<16x1xf32, #tpu.memory_space<vmem>>, vector<16x1xf32>
    %111 = vector.broadcast %110 : vector<16x1xf32> to vector<16x32xf32>
    %112 = arith.addf %109, %111 : vector<16x32xf32>
    %cst_73 = arith.constant 0.000000e+00 : f32
    %113 = vector.broadcast %cst_73 : f32 to vector<16x32xf32>
    %114 = arith.maximumf %112, %113 : vector<16x32xf32>
    %115 = arith.truncf %114 : vector<16x32xf32> to vector<16x32xbf16>
    %c0_74 = arith.constant 0 : index
    %c128_75 = arith.constant 128 : index
    %116 = vector.load %arg19[%c0_74, %c128_75] : memref<16x165xbf16, #tpu.memory_space<vmem>>, vector<16x32xbf16>
    tpu.vector_store %arg19[%c0_74, %c128_75], %115 {strides = array<i32>} : memref<16x165xbf16, #tpu.memory_space<vmem>>, vector<16x32xbf16>,
    %cst_76 = arith.constant 0.000000e+00 : f32
    %117 = vector.broadcast %cst_76 : f32 to vector<8x32xf32>
    %c0_77 = arith.constant 0 : index
    %c123_78 = arith.constant 123 : index
    %118 = vector.load %arg19[%c0_77, %c123_78] : memref<16x165xbf16, #tpu.memory_space<vmem>>, vector<16x32xbf16>
    %c0_79 = arith.constant 0 : index
    %c0_80 = arith.constant 0 : index
    %c0_81 = arith.constant 0 : index
    %119 = vector.load %arg12[%c0_79, %c0_80, %c0_81] : memref<9x8x16xbf16, #tpu.memory_space<vmem>>, vector<1x8x16xbf16>
    %120 = vector.shape_cast %119 : vector<1x8x16xbf16> to vector<8x16xbf16>
    %cst_82 = arith.constant dense<0.000000e+00> : vector<8x32xf32>
    %121 = tpu.matmul %120, %118, %cst_82 {dimension_numbers = #tpu.dot_dimension_numbers<[1], [0], [0], [1], [0, 0, 1, 1], [], []>} : vector<8x16xbf16>, vector<16x32xbf16>, vector<8x32xf32> -> vector<8x32xf32>
    %122 = vector.extract_strided_slice %4 {offsets = [0, 0], sizes = [1, 32], strides = [1, 1]} : vector<9x32xf32> to vector<1x32xf32>
    %123 = vector.broadcast %122 : vector<1x32xf32> to vector<8x32xf32>
    %124 = arith.mulf %121, %123 : vector<8x32xf32>
    %125 = arith.addf %117, %124 : vector<8x32xf32>
    %c0_83 = arith.constant 0 : index
    %c124_84 = arith.constant 124 : index
    %126 = vector.load %arg19[%c0_83, %c124_84] : memref<16x165xbf16, #tpu.memory_space<vmem>>, vector<16x32xbf16>
    %c1_85 = arith.constant 1 : index
    %c0_86 = arith.constant 0 : index
    %c0_87 = arith.constant 0 : index
    %127 = vector.load %arg12[%c1_85, %c0_86, %c0_87] : memref<9x8x16xbf16, #tpu.memory_space<vmem>>, vector<1x8x16xbf16>
    %128 = vector.shape_cast %127 : vector<1x8x16xbf16> to vector<8x16xbf16>
    %cst_88 = arith.constant dense<0.000000e+00> : vector<8x32xf32>
    %129 = tpu.matmul %128, %126, %cst_88 {dimension_numbers = #tpu.dot_dimension_numbers<[1], [0], [0], [1], [0, 0, 1, 1], [], []>} : vector<8x16xbf16>, vector<16x32xbf16>, vector<8x32xf32> -> vector<8x32xf32>
    %130 = vector.extract_strided_slice %4 {offsets = [1, 0], sizes = [1, 32], strides = [1, 1]} : vector<9x32xf32> to vector<1x32xf32>
    %131 = vector.broadcast %130 : vector<1x32xf32> to vector<8x32xf32>
    %132 = arith.mulf %129, %131 : vector<8x32xf32>
    %133 = arith.addf %125, %132 : vector<8x32xf32>
    %c0_89 = arith.constant 0 : index
    %c125_90 = arith.constant 125 : index
    %134 = vector.load %arg19[%c0_89, %c125_90] : memref<16x165xbf16, #tpu.memory_space<vmem>>, vector<16x32xbf16>
    %c2_91 = arith.constant 2 : index
    %c0_92 = arith.constant 0 : index
    %c0_93 = arith.constant 0 : index
    %135 = vector.load %arg12[%c2_91, %c0_92, %c0_93] : memref<9x8x16xbf16, #tpu.memory_space<vmem>>, vector<1x8x16xbf16>
    %136 = vector.shape_cast %135 : vector<1x8x16xbf16> to vector<8x16xbf16>
    %cst_94 = arith.constant dense<0.000000e+00> : vector<8x32xf32>
    %137 = tpu.matmul %136, %134, %cst_94 {dimension_numbers = #tpu.dot_dimension_numbers<[1], [0], [0], [1], [0, 0, 1, 1], [], []>} : vector<8x16xbf16>, vector<16x32xbf16>, vector<8x32xf32> -> vector<8x32xf32>
    %138 = vector.extract_strided_slice %4 {offsets = [2, 0], sizes = [1, 32], strides = [1, 1]} : vector<9x32xf32> to vector<1x32xf32>
    %139 = vector.broadcast %138 : vector<1x32xf32> to vector<8x32xf32>
    %140 = arith.mulf %137, %139 : vector<8x32xf32>
    %141 = arith.addf %133, %140 : vector<8x32xf32>
    %c0_95 = arith.constant 0 : index
    %c127_96 = arith.constant 127 : index
    %142 = vector.load %arg19[%c0_95, %c127_96] : memref<16x165xbf16, #tpu.memory_space<vmem>>, vector<16x32xbf16>
    %c3_97 = arith.constant 3 : index
    %c0_98 = arith.constant 0 : index
    %c0_99 = arith.constant 0 : index
    %143 = vector.load %arg12[%c3_97, %c0_98, %c0_99] : memref<9x8x16xbf16, #tpu.memory_space<vmem>>, vector<1x8x16xbf16>
    %144 = vector.shape_cast %143 : vector<1x8x16xbf16> to vector<8x16xbf16>
    %cst_100 = arith.constant dense<0.000000e+00> : vector<8x32xf32>
    %145 = tpu.matmul %144, %142, %cst_100 {dimension_numbers = #tpu.dot_dimension_numbers<[1], [0], [0], [1], [0, 0, 1, 1], [], []>} : vector<8x16xbf16>, vector<16x32xbf16>, vector<8x32xf32> -> vector<8x32xf32>
    %146 = vector.extract_strided_slice %4 {offsets = [3, 0], sizes = [1, 32], strides = [1, 1]} : vector<9x32xf32> to vector<1x32xf32>
    %147 = vector.broadcast %146 : vector<1x32xf32> to vector<8x32xf32>
    %148 = arith.mulf %145, %147 : vector<8x32xf32>
    %149 = arith.addf %141, %148 : vector<8x32xf32>
    %c0_101 = arith.constant 0 : index
    %c128_102 = arith.constant 128 : index
    %150 = vector.load %arg19[%c0_101, %c128_102] : memref<16x165xbf16, #tpu.memory_space<vmem>>, vector<16x32xbf16>
    %c4_103 = arith.constant 4 : index
    %c0_104 = arith.constant 0 : index
    %c0_105 = arith.constant 0 : index
    %151 = vector.load %arg12[%c4_103, %c0_104, %c0_105] : memref<9x8x16xbf16, #tpu.memory_space<vmem>>, vector<1x8x16xbf16>
    %152 = vector.shape_cast %151 : vector<1x8x16xbf16> to vector<8x16xbf16>
    %cst_106 = arith.constant dense<0.000000e+00> : vector<8x32xf32>
    %153 = tpu.matmul %152, %150, %cst_106 {dimension_numbers = #tpu.dot_dimension_numbers<[1], [0], [0], [1], [0, 0, 1, 1], [], []>} : vector<8x16xbf16>, vector<16x32xbf16>, vector<8x32xf32> -> vector<8x32xf32>
    %154 = vector.extract_strided_slice %4 {offsets = [4, 0], sizes = [1, 32], strides = [1, 1]} : vector<9x32xf32> to vector<1x32xf32>
    %155 = vector.broadcast %154 : vector<1x32xf32> to vector<8x32xf32>
    %156 = arith.mulf %153, %155 : vector<8x32xf32>
    %157 = arith.addf %149, %156 : vector<8x32xf32>
    %c0_107 = arith.constant 0 : index
    %c129_108 = arith.constant 129 : index
    %158 = vector.load %arg19[%c0_107, %c129_108] : memref<16x165xbf16, #tpu.memory_space<vmem>>, vector<16x32xbf16>
    %c5_109 = arith.constant 5 : index
    %c0_110 = arith.constant 0 : index
    %c0_111 = arith.constant 0 : index
    %159 = vector.load %arg12[%c5_109, %c0_110, %c0_111] : memref<9x8x16xbf16, #tpu.memory_space<vmem>>, vector<1x8x16xbf16>
    %160 = vector.shape_cast %159 : vector<1x8x16xbf16> to vector<8x16xbf16>
    %cst_112 = arith.constant dense<0.000000e+00> : vector<8x32xf32>
    %161 = tpu.matmul %160, %158, %cst_112 {dimension_numbers = #tpu.dot_dimension_numbers<[1], [0], [0], [1], [0, 0, 1, 1], [], []>} : vector<8x16xbf16>, vector<16x32xbf16>, vector<8x32xf32> -> vector<8x32xf32>
    %162 = vector.extract_strided_slice %4 {offsets = [5, 0], sizes = [1, 32], strides = [1, 1]} : vector<9x32xf32> to vector<1x32xf32>
    %163 = vector.broadcast %162 : vector<1x32xf32> to vector<8x32xf32>
    %164 = arith.mulf %161, %163 : vector<8x32xf32>
    %165 = arith.addf %157, %164 : vector<8x32xf32>
    %c0_113 = arith.constant 0 : index
    %c131_114 = arith.constant 131 : index
    %166 = vector.load %arg19[%c0_113, %c131_114] : memref<16x165xbf16, #tpu.memory_space<vmem>>, vector<16x32xbf16>
    %c6_115 = arith.constant 6 : index
    %c0_116 = arith.constant 0 : index
    %c0_117 = arith.constant 0 : index
    %167 = vector.load %arg12[%c6_115, %c0_116, %c0_117] : memref<9x8x16xbf16, #tpu.memory_space<vmem>>, vector<1x8x16xbf16>
    %168 = vector.shape_cast %167 : vector<1x8x16xbf16> to vector<8x16xbf16>
    %cst_118 = arith.constant dense<0.000000e+00> : vector<8x32xf32>
    %169 = tpu.matmul %168, %166, %cst_118 {dimension_numbers = #tpu.dot_dimension_numbers<[1], [0], [0], [1], [0, 0, 1, 1], [], []>} : vector<8x16xbf16>, vector<16x32xbf16>, vector<8x32xf32> -> vector<8x32xf32>
    %170 = vector.extract_strided_slice %4 {offsets = [6, 0], sizes = [1, 32], strides = [1, 1]} : vector<9x32xf32> to vector<1x32xf32>
    %171 = vector.broadcast %170 : vector<1x32xf32> to vector<8x32xf32>
    %172 = arith.mulf %169, %171 : vector<8x32xf32>
    %173 = arith.addf %165, %172 : vector<8x32xf32>
    %c0_119 = arith.constant 0 : index
    %c132_120 = arith.constant 132 : index
    %174 = vector.load %arg19[%c0_119, %c132_120] : memref<16x165xbf16, #tpu.memory_space<vmem>>, vector<16x32xbf16>
    %c7_121 = arith.constant 7 : index
    %c0_122 = arith.constant 0 : index
    %c0_123 = arith.constant 0 : index
    %175 = vector.load %arg12[%c7_121, %c0_122, %c0_123] : memref<9x8x16xbf16, #tpu.memory_space<vmem>>, vector<1x8x16xbf16>
    %176 = vector.shape_cast %175 : vector<1x8x16xbf16> to vector<8x16xbf16>
    %cst_124 = arith.constant dense<0.000000e+00> : vector<8x32xf32>
    %177 = tpu.matmul %176, %174, %cst_124 {dimension_numbers = #tpu.dot_dimension_numbers<[1], [0], [0], [1], [0, 0, 1, 1], [], []>} : vector<8x16xbf16>, vector<16x32xbf16>, vector<8x32xf32> -> vector<8x32xf32>
    %178 = vector.extract_strided_slice %4 {offsets = [7, 0], sizes = [1, 32], strides = [1, 1]} : vector<9x32xf32> to vector<1x32xf32>
    %179 = vector.broadcast %178 : vector<1x32xf32> to vector<8x32xf32>
    %180 = arith.mulf %177, %179 : vector<8x32xf32>
    %181 = arith.addf %173, %180 : vector<8x32xf32>
    %c0_125 = arith.constant 0 : index
    %c133_126 = arith.constant 133 : index
    %182 = vector.load %arg19[%c0_125, %c133_126] : memref<16x165xbf16, #tpu.memory_space<vmem>>, vector<16x32xbf16>
    %c8_127 = arith.constant 8 : index
    %c0_128 = arith.constant 0 : index
    %c0_129 = arith.constant 0 : index
    %183 = vector.load %arg12[%c8_127, %c0_128, %c0_129] : memref<9x8x16xbf16, #tpu.memory_space<vmem>>, vector<1x8x16xbf16>
    %184 = vector.shape_cast %183 : vector<1x8x16xbf16> to vector<8x16xbf16>
    %cst_130 = arith.constant dense<0.000000e+00> : vector<8x32xf32>
    %185 = tpu.matmul %184, %182, %cst_130 {dimension_numbers = #tpu.dot_dimension_numbers<[1], [0], [0], [1], [0, 0, 1, 1], [], []>} : vector<8x16xbf16>, vector<16x32xbf16>, vector<8x32xf32> -> vector<8x32xf32>
    %186 = vector.extract_strided_slice %4 {offsets = [8, 0], sizes = [1, 32], strides = [1, 1]} : vector<9x32xf32> to vector<1x32xf32>
    %187 = vector.broadcast %186 : vector<1x32xf32> to vector<8x32xf32>
    %188 = arith.mulf %185, %187 : vector<8x32xf32>
    %189 = arith.addf %181, %188 : vector<8x32xf32>
    %c24 = arith.constant 24 : index
    %c0_131 = arith.constant 0 : index
    %190 = vector.load %arg18[%c24, %c0_131] : memref<32x32xf32, #tpu.memory_space<vmem>>, vector<8x32xf32>
    tpu.vector_store %arg18[%c24, %c0_131], %189 {strides = array<i32>} : memref<32x32xf32, #tpu.memory_space<vmem>>, vector<8x32xf32>,
    %c0_132 = arith.constant 0 : index
    %c0_133 = arith.constant 0 : index
    %191 = vector.load %arg18[%c0_132, %c0_133] : memref<32x32xf32, #tpu.memory_space<vmem>>, vector<32x32xf32>
    %c0_134 = arith.constant 0 : index
    %c0_135 = arith.constant 0 : index
    %192 = vector.load %arg13[%c0_134, %c0_135] : memref<32x1xf32, #tpu.memory_space<vmem>>, vector<32x1xf32>
    %193 = vector.broadcast %192 : vector<32x1xf32> to vector<32x32xf32>
    %194 = arith.mulf %191, %193 : vector<32x32xf32>
    %c0_136 = arith.constant 0 : index
    %c0_137 = arith.constant 0 : index
    %195 = vector.load %arg14[%c0_136, %c0_137] : memref<32x1xf32, #tpu.memory_space<vmem>>, vector<32x1xf32>
    %196 = vector.broadcast %195 : vector<32x1xf32> to vector<32x32xf32>
    %197 = arith.addf %194, %196 : vector<32x32xf32>
    %cst_138 = arith.constant 0.000000e+00 : f32
    %198 = vector.broadcast %cst_138 : f32 to vector<32x32xf32>
    %199 = arith.maximumf %197, %198 : vector<32x32xf32>
    %c0_139 = arith.constant 0 : index
    %c0_140 = arith.constant 0 : index
    %200 = vector.load %arg15[%c0_139, %c0_140] : memref<16x32xbf16, #tpu.memory_space<vmem>>, vector<16x32xbf16>
    %201 = arith.truncf %199 : vector<32x32xf32> to vector<32x32xbf16>
    %cst_141 = arith.constant dense<0.000000e+00> : vector<16x32xf32>
    %202 = tpu.matmul %200, %201, %cst_141 {dimension_numbers = #tpu.dot_dimension_numbers<[1], [0], [0], [1], [0, 0, 1, 1], [], []>} : vector<16x32xbf16>, vector<32x32xbf16>, vector<16x32xf32> -> vector<16x32xf32>
    %203 = arith.truncf %202 : vector<16x32xf32> to vector<16x32xbf16>
    %c0_142 = arith.constant 0 : index
    %c0_143 = arith.constant 0 : index
    %204 = vector.load %arg16[%c0_142, %c0_143] : memref<32x8xbf16, #tpu.memory_space<vmem>>, vector<32x8xbf16>
    %cst_144 = arith.constant dense<0.000000e+00> : vector<16x8xf32>
    %205 = tpu.matmul %203, %204, %cst_144 {dimension_numbers = #tpu.dot_dimension_numbers<[1], [0], [0], [1], [0, 0, 1, 1], [], []>} : vector<16x32xbf16>, vector<32x8xbf16>, vector<16x8xf32> -> vector<16x8xf32>
    %c0_145 = arith.constant 0 : index
    %c0_146 = arith.constant 0 : index
    %206 = vector.load %arg17[%c0_145, %c0_146] : memref<16x8xf32, #tpu.memory_space<vmem>>, vector<16x8xf32>
    tpu.vector_store %arg17[%c0_145, %c0_146], %205 {strides = array<i32>} : memref<16x8xf32, #tpu.memory_space<vmem>>, vector<16x8xf32>,
    return
  }
  func.func @transform_0(%arg0: i32) -> (i32, i32) {
    %c0_i32 = arith.constant 0 : i32
    %c0_i32_0 = arith.constant 0 : i32
    %c0_i32_1 = arith.constant 0 : i32
    return %c0_i32, %c0_i32_0 : i32, i32
  }
  func.func @transform_1(%arg0: i32) -> (i32, i32) {
    %c0_i32 = arith.constant 0 : i32
    %c0_i32_0 = arith.constant 0 : i32
    %c0_i32_1 = arith.constant 0 : i32
    return %c0_i32, %c0_i32_0 : i32, i32
  }
  func.func @transform_2(%arg0: i32) -> (i32, i32) {
    %c0_i32 = arith.constant 0 : i32
    %c0_i32_0 = arith.constant 0 : i32
    %c0_i32_1 = arith.constant 0 : i32
    return %c0_i32, %c0_i32_0 : i32, i32
  }
  func.func @transform_3(%arg0: i32) -> (i32, i32) {
    %c0_i32 = arith.constant 0 : i32
    %c0_i32_0 = arith.constant 0 : i32
    %c0_i32_1 = arith.constant 0 : i32
    return %c0_i32, %c0_i32_0 : i32, i32
  }
  func.func @transform_4(%arg0: i32) -> (i32, i32) {
    %c0_i32 = arith.constant 0 : i32
    %c0_i32_0 = arith.constant 0 : i32
    %c0_i32_1 = arith.constant 0 : i32
    return %c0_i32, %c0_i32_0 : i32, i32
  }
  func.func @transform_5(%arg0: i32) -> (i32, i32) {
    %c0_i32 = arith.constant 0 : i32
    %c0_i32_0 = arith.constant 0 : i32
    %c0_i32_1 = arith.constant 0 : i32
    return %c0_i32, %c0_i32_0 : i32, i32
  }
  func.func @transform_6(%arg0: i32) -> (i32, i32, i32) {
    %c0_i32 = arith.constant 0 : i32
    %c0_i32_0 = arith.constant 0 : i32
    %c0_i32_1 = arith.constant 0 : i32
    %c0_i32_2 = arith.constant 0 : i32
    return %c0_i32, %c0_i32_0, %c0_i32_1 : i32, i32, i32
  }
  func.func @transform_7(%arg0: i32) -> (i32, i32) {
    %c0_i32 = arith.constant 0 : i32
    %c0_i32_0 = arith.constant 0 : i32
    %c0_i32_1 = arith.constant 0 : i32
    return %c0_i32, %c0_i32_0 : i32, i32
  }
  func.func @transform_8(%arg0: i32) -> (i32, i32) {
    %c0_i32 = arith.constant 0 : i32
    %c0_i32_0 = arith.constant 0 : i32
    %c0_i32_1 = arith.constant 0 : i32
    return %c0_i32, %c0_i32_0 : i32, i32
  }
  func.func @transform_9(%arg0: i32) -> (i32, i32) {
    %c0_i32 = arith.constant 0 : i32
    %c0_i32_0 = arith.constant 0 : i32
    %c0_i32_1 = arith.constant 0 : i32
    return %c0_i32, %c0_i32_0 : i32, i32
  }
  func.func @transform_10(%arg0: i32) -> (i32, i32) {
    %c0_i32 = arith.constant 0 : i32
    %c0_i32_0 = arith.constant 0 : i32
    %c0_i32_1 = arith.constant 0 : i32
    return %c0_i32, %c0_i32_0 : i32, i32
  }
  func.func @transform_11(%arg0: i32) -> (i32, i32, i32) {
    %c0_i32 = arith.constant 0 : i32
    %c0_i32_0 = arith.constant 0 : i32
    %c0_i32_1 = arith.constant 0 : i32
    %c0_i32_2 = arith.constant 0 : i32
    return %c0_i32, %c0_i32_0, %c0_i32_1 : i32, i32, i32
  }
  func.func @transform_12(%arg0: i32) -> (i32, i32) {
    %c0_i32 = arith.constant 0 : i32
    %c0_i32_0 = arith.constant 0 : i32
    %c0_i32_1 = arith.constant 0 : i32
    return %c0_i32, %c0_i32_0 : i32, i32
  }
  func.func @transform_13(%arg0: i32) -> (i32, i32) {
    %c0_i32 = arith.constant 0 : i32
    %c0_i32_0 = arith.constant 0 : i32
    %c0_i32_1 = arith.constant 0 : i32
    return %c0_i32, %c0_i32_0 : i32, i32
  }
  func.func @transform_14(%arg0: i32) -> (i32, i32) {
    %c0_i32 = arith.constant 0 : i32
    %c0_i32_0 = arith.constant 0 : i32
    %c0_i32_1 = arith.constant 0 : i32
    return %c0_i32, %c0_i32_0 : i32, i32
  }
  func.func @transform_15(%arg0: i32) -> (i32, i32) {
    %c0_i32 = arith.constant 0 : i32
    %c0_i32_0 = arith.constant 0 : i32
    %c0_i32_1 = arith.constant 0 : i32
    return %c0_i32, %c0_i32_0 : i32, i32
  }
  func.func @transform_16(%arg0: i32) -> (i32, i32) {
    %c0_i32 = arith.constant 0 : i32
    %c0_i32_0 = arith.constant 0 : i32
    %c0_i32_1 = arith.constant 0 : i32
    return %c0_i32, %c0_i32_0 : i32, i32
  }
}

module attributes {stable_mosaic.version = 11 : i64} {
  func.func @_dense_block_kernel(%arg0: i32, %arg1: memref<16x8xf32, #tpu.memory_space<vmem>>, %arg2: memref<9x8xf32, #tpu.memory_space<vmem>>, %arg3: memref<16x1xf32, #tpu.memory_space<vmem>>, %arg4: memref<16x1xf32, #tpu.memory_space<vmem>>, %arg5: memref<16x16xbf16, #tpu.memory_space<vmem>>, %arg6: memref<16x1xf32, #tpu.memory_space<vmem>>, %arg7: memref<9x8x16xbf16, #tpu.memory_space<vmem>>, %arg8: memref<24x1xf32, #tpu.memory_space<vmem>>, %arg9: memref<24x1xf32, #tpu.memory_space<vmem>>, %arg10: memref<16x24xbf16, #tpu.memory_space<vmem>>, %arg11: memref<16x1xf32, #tpu.memory_space<vmem>>, %arg12: memref<9x8x16xbf16, #tpu.memory_space<vmem>>, %arg13: memref<32x1xf32, #tpu.memory_space<vmem>>, %arg14: memref<32x1xf32, #tpu.memory_space<vmem>>, %arg15: memref<16x32xbf16, #tpu.memory_space<vmem>>, %arg16: memref<8x2xbf16, #tpu.memory_space<vmem>>, %arg17: memref<16x2xf32, #tpu.memory_space<vmem>>, %arg18: memref<32x8xf32, #tpu.memory_space<vmem>>, %arg19: memref<16x139xbf16, #tpu.memory_space<vmem>>) attributes {dimension_semantics = [#tpu.dimension_semantics<arbitrary>], iteration_bounds = array<i64: 1>, scalar_prefetch = 0 : i64, scratch_operands = 2 : i64, tpu.core_type = #tpu.core_type<tc>, window_params = [{pipeline_mode = #tpu.pipeline_mode<synchronous>, transform_indices = @transform_0, window_bounds = array<i64: 16, 8>}, {pipeline_mode = #tpu.pipeline_mode<synchronous>, transform_indices = @transform_1, window_bounds = array<i64: 9, 8>}, {pipeline_mode = #tpu.pipeline_mode<synchronous>, transform_indices = @transform_2, window_bounds = array<i64: 16, 1>}, {pipeline_mode = #tpu.pipeline_mode<synchronous>, transform_indices = @transform_3, window_bounds = array<i64: 16, 1>}, {pipeline_mode = #tpu.pipeline_mode<synchronous>, transform_indices = @transform_4, window_bounds = array<i64: 16, 16>}, {pipeline_mode = #tpu.pipeline_mode<synchronous>, transform_indices = @transform_5, window_bounds = array<i64: 16, 1>}, {pipeline_mode = #tpu.pipeline_mode<synchronous>, transform_indices = @transform_6, window_bounds = array<i64: 9, 8, 16>}, {pipeline_mode = #tpu.pipeline_mode<synchronous>, transform_indices = @transform_7, window_bounds = array<i64: 24, 1>}, {pipeline_mode = #tpu.pipeline_mode<synchronous>, transform_indices = @transform_8, window_bounds = array<i64: 24, 1>}, {pipeline_mode = #tpu.pipeline_mode<synchronous>, transform_indices = @transform_9, window_bounds = array<i64: 16, 24>}, {pipeline_mode = #tpu.pipeline_mode<synchronous>, transform_indices = @transform_10, window_bounds = array<i64: 16, 1>}, {pipeline_mode = #tpu.pipeline_mode<synchronous>, transform_indices = @transform_11, window_bounds = array<i64: 9, 8, 16>}, {pipeline_mode = #tpu.pipeline_mode<synchronous>, transform_indices = @transform_12, window_bounds = array<i64: 32, 1>}, {pipeline_mode = #tpu.pipeline_mode<synchronous>, transform_indices = @transform_13, window_bounds = array<i64: 32, 1>}, {pipeline_mode = #tpu.pipeline_mode<synchronous>, transform_indices = @transform_14, window_bounds = array<i64: 16, 32>}, {pipeline_mode = #tpu.pipeline_mode<synchronous>, transform_indices = @transform_15, window_bounds = array<i64: 8, 2>}, {pipeline_mode = #tpu.pipeline_mode<synchronous>, transform_indices = @transform_16, window_bounds = array<i64: 16, 2>}]} {
    %cst = arith.constant 0.000000e+00 : bf16
    %0 = vector.broadcast %cst : bf16 to vector<16x139xbf16>
    %c0 = arith.constant 0 : index
    %c0_0 = arith.constant 0 : index
    %1 = vector.load %arg19[%c0, %c0_0] : memref<16x139xbf16, #tpu.memory_space<vmem>>, vector<16x139xbf16>
    tpu.vector_store %arg19[%c0, %c0_0], %0 {strides = array<i32>} : memref<16x139xbf16, #tpu.memory_space<vmem>>, vector<16x139xbf16>,
    %c0_1 = arith.constant 0 : index
    %c0_2 = arith.constant 0 : index
    %2 = vector.load %arg1[%c0_1, %c0_2] : memref<16x8xf32, #tpu.memory_space<vmem>>, vector<16x8xf32>
    %c0_3 = arith.constant 0 : index
    %c0_4 = arith.constant 0 : index
    %3 = vector.load %arg18[%c0_3, %c0_4] : memref<32x8xf32, #tpu.memory_space<vmem>>, vector<16x8xf32>
    tpu.vector_store %arg18[%c0_3, %c0_4], %2 {strides = array<i32>} : memref<32x8xf32, #tpu.memory_space<vmem>>, vector<16x8xf32>,
    %c0_5 = arith.constant 0 : index
    %c0_6 = arith.constant 0 : index
    %4 = vector.load %arg2[%c0_5, %c0_6] : memref<9x8xf32, #tpu.memory_space<vmem>>, vector<9x8xf32>
    %c0_7 = arith.constant 0 : index
    %c0_8 = arith.constant 0 : index
    %5 = vector.load %arg18[%c0_7, %c0_8] : memref<32x8xf32, #tpu.memory_space<vmem>>, vector<16x8xf32>
    %c0_9 = arith.constant 0 : index
    %c0_10 = arith.constant 0 : index
    %6 = vector.load %arg3[%c0_9, %c0_10] : memref<16x1xf32, #tpu.memory_space<vmem>>, vector<16x1xf32>
    %7 = vector.broadcast %6 : vector<16x1xf32> to vector<16x8xf32>
    %8 = arith.mulf %5, %7 : vector<16x8xf32>
    %c0_11 = arith.constant 0 : index
    %c0_12 = arith.constant 0 : index
    %9 = vector.load %arg4[%c0_11, %c0_12] : memref<16x1xf32, #tpu.memory_space<vmem>>, vector<16x1xf32>
    %10 = vector.broadcast %9 : vector<16x1xf32> to vector<16x8xf32>
    %11 = arith.addf %8, %10 : vector<16x8xf32>
    %cst_13 = arith.constant 0.000000e+00 : f32
    %12 = vector.broadcast %cst_13 : f32 to vector<16x8xf32>
    %13 = arith.maximumf %11, %12 : vector<16x8xf32>
    %c0_14 = arith.constant 0 : index
    %c0_15 = arith.constant 0 : index
    %14 = vector.load %arg5[%c0_14, %c0_15] : memref<16x16xbf16, #tpu.memory_space<vmem>>, vector<16x16xbf16>
    %15 = arith.truncf %13 : vector<16x8xf32> to vector<16x8xbf16>
    %cst_16 = arith.constant dense<0.000000e+00> : vector<16x8xf32>
    %16 = tpu.matmul %14, %15, %cst_16 {dimension_numbers = #tpu.dot_dimension_numbers<[1], [0], [0], [1], [0, 0, 1, 1], [], []>} : vector<16x16xbf16>, vector<16x8xbf16>, vector<16x8xf32> -> vector<16x8xf32>
    %c0_17 = arith.constant 0 : index
    %c0_18 = arith.constant 0 : index
    %17 = vector.load %arg6[%c0_17, %c0_18] : memref<16x1xf32, #tpu.memory_space<vmem>>, vector<16x1xf32>
    %18 = vector.broadcast %17 : vector<16x1xf32> to vector<16x8xf32>
    %19 = arith.addf %16, %18 : vector<16x8xf32>
    %cst_19 = arith.constant 0.000000e+00 : f32
    %20 = vector.broadcast %cst_19 : f32 to vector<16x8xf32>
    %21 = arith.maximumf %19, %20 : vector<16x8xf32>
    %22 = arith.truncf %21 : vector<16x8xf32> to vector<16x8xbf16>
    %c0_20 = arith.constant 0 : index
    %c128 = arith.constant 128 : index
    %23 = vector.load %arg19[%c0_20, %c128] : memref<16x139xbf16, #tpu.memory_space<vmem>>, vector<16x8xbf16>
    tpu.vector_store %arg19[%c0_20, %c128], %22 {strides = array<i32>} : memref<16x139xbf16, #tpu.memory_space<vmem>>, vector<16x8xbf16>,
    %cst_21 = arith.constant 0.000000e+00 : f32
    %24 = vector.broadcast %cst_21 : f32 to vector<8x8xf32>
    %c0_22 = arith.constant 0 : index
    %c125 = arith.constant 125 : index
    %25 = vector.load %arg19[%c0_22, %c125] : memref<16x139xbf16, #tpu.memory_space<vmem>>, vector<16x8xbf16>
    %c0_23 = arith.constant 0 : index
    %c0_24 = arith.constant 0 : index
    %c0_25 = arith.constant 0 : index
    %26 = vector.load %arg7[%c0_23, %c0_24, %c0_25] : memref<9x8x16xbf16, #tpu.memory_space<vmem>>, vector<1x8x16xbf16>
    %27 = vector.shape_cast %26 : vector<1x8x16xbf16> to vector<8x16xbf16>
    %cst_26 = arith.constant dense<0.000000e+00> : vector<8x8xf32>
    %28 = tpu.matmul %27, %25, %cst_26 {dimension_numbers = #tpu.dot_dimension_numbers<[1], [0], [0], [1], [0, 0, 1, 1], [], []>} : vector<8x16xbf16>, vector<16x8xbf16>, vector<8x8xf32> -> vector<8x8xf32>
    %29 = vector.extract_strided_slice %4 {offsets = [0, 0], sizes = [1, 8], strides = [1, 1]} : vector<9x8xf32> to vector<1x8xf32>
    %30 = vector.broadcast %29 : vector<1x8xf32> to vector<8x8xf32>
    %31 = arith.mulf %28, %30 : vector<8x8xf32>
    %32 = arith.addf %24, %31 : vector<8x8xf32>
    %c0_27 = arith.constant 0 : index
    %c126 = arith.constant 126 : index
    %33 = vector.load %arg19[%c0_27, %c126] : memref<16x139xbf16, #tpu.memory_space<vmem>>, vector<16x8xbf16>
    %c1 = arith.constant 1 : index
    %c0_28 = arith.constant 0 : index
    %c0_29 = arith.constant 0 : index
    %34 = vector.load %arg7[%c1, %c0_28, %c0_29] : memref<9x8x16xbf16, #tpu.memory_space<vmem>>, vector<1x8x16xbf16>
    %35 = vector.shape_cast %34 : vector<1x8x16xbf16> to vector<8x16xbf16>
    %cst_30 = arith.constant dense<0.000000e+00> : vector<8x8xf32>
    %36 = tpu.matmul %35, %33, %cst_30 {dimension_numbers = #tpu.dot_dimension_numbers<[1], [0], [0], [1], [0, 0, 1, 1], [], []>} : vector<8x16xbf16>, vector<16x8xbf16>, vector<8x8xf32> -> vector<8x8xf32>
    %37 = vector.extract_strided_slice %4 {offsets = [1, 0], sizes = [1, 8], strides = [1, 1]} : vector<9x8xf32> to vector<1x8xf32>
    %38 = vector.broadcast %37 : vector<1x8xf32> to vector<8x8xf32>
    %39 = arith.mulf %36, %38 : vector<8x8xf32>
    %40 = arith.addf %32, %39 : vector<8x8xf32>
    %c0_31 = arith.constant 0 : index
    %c127 = arith.constant 127 : index
    %41 = vector.load %arg19[%c0_31, %c127] : memref<16x139xbf16, #tpu.memory_space<vmem>>, vector<16x8xbf16>
    %c2 = arith.constant 2 : index
    %c0_32 = arith.constant 0 : index
    %c0_33 = arith.constant 0 : index
    %42 = vector.load %arg7[%c2, %c0_32, %c0_33] : memref<9x8x16xbf16, #tpu.memory_space<vmem>>, vector<1x8x16xbf16>
    %43 = vector.shape_cast %42 : vector<1x8x16xbf16> to vector<8x16xbf16>
    %cst_34 = arith.constant dense<0.000000e+00> : vector<8x8xf32>
    %44 = tpu.matmul %43, %41, %cst_34 {dimension_numbers = #tpu.dot_dimension_numbers<[1], [0], [0], [1], [0, 0, 1, 1], [], []>} : vector<8x16xbf16>, vector<16x8xbf16>, vector<8x8xf32> -> vector<8x8xf32>
    %45 = vector.extract_strided_slice %4 {offsets = [2, 0], sizes = [1, 8], strides = [1, 1]} : vector<9x8xf32> to vector<1x8xf32>
    %46 = vector.broadcast %45 : vector<1x8xf32> to vector<8x8xf32>
    %47 = arith.mulf %44, %46 : vector<8x8xf32>
    %48 = arith.addf %40, %47 : vector<8x8xf32>
    %c0_35 = arith.constant 0 : index
    %c127_36 = arith.constant 127 : index
    %49 = vector.load %arg19[%c0_35, %c127_36] : memref<16x139xbf16, #tpu.memory_space<vmem>>, vector<16x8xbf16>
    %c3 = arith.constant 3 : index
    %c0_37 = arith.constant 0 : index
    %c0_38 = arith.constant 0 : index
    %50 = vector.load %arg7[%c3, %c0_37, %c0_38] : memref<9x8x16xbf16, #tpu.memory_space<vmem>>, vector<1x8x16xbf16>
    %51 = vector.shape_cast %50 : vector<1x8x16xbf16> to vector<8x16xbf16>
    %cst_39 = arith.constant dense<0.000000e+00> : vector<8x8xf32>
    %52 = tpu.matmul %51, %49, %cst_39 {dimension_numbers = #tpu.dot_dimension_numbers<[1], [0], [0], [1], [0, 0, 1, 1], [], []>} : vector<8x16xbf16>, vector<16x8xbf16>, vector<8x8xf32> -> vector<8x8xf32>
    %53 = vector.extract_strided_slice %4 {offsets = [3, 0], sizes = [1, 8], strides = [1, 1]} : vector<9x8xf32> to vector<1x8xf32>
    %54 = vector.broadcast %53 : vector<1x8xf32> to vector<8x8xf32>
    %55 = arith.mulf %52, %54 : vector<8x8xf32>
    %56 = arith.addf %48, %55 : vector<8x8xf32>
    %c0_40 = arith.constant 0 : index
    %c128_41 = arith.constant 128 : index
    %57 = vector.load %arg19[%c0_40, %c128_41] : memref<16x139xbf16, #tpu.memory_space<vmem>>, vector<16x8xbf16>
    %c4 = arith.constant 4 : index
    %c0_42 = arith.constant 0 : index
    %c0_43 = arith.constant 0 : index
    %58 = vector.load %arg7[%c4, %c0_42, %c0_43] : memref<9x8x16xbf16, #tpu.memory_space<vmem>>, vector<1x8x16xbf16>
    %59 = vector.shape_cast %58 : vector<1x8x16xbf16> to vector<8x16xbf16>
    %cst_44 = arith.constant dense<0.000000e+00> : vector<8x8xf32>
    %60 = tpu.matmul %59, %57, %cst_44 {dimension_numbers = #tpu.dot_dimension_numbers<[1], [0], [0], [1], [0, 0, 1, 1], [], []>} : vector<8x16xbf16>, vector<16x8xbf16>, vector<8x8xf32> -> vector<8x8xf32>
    %61 = vector.extract_strided_slice %4 {offsets = [4, 0], sizes = [1, 8], strides = [1, 1]} : vector<9x8xf32> to vector<1x8xf32>
    %62 = vector.broadcast %61 : vector<1x8xf32> to vector<8x8xf32>
    %63 = arith.mulf %60, %62 : vector<8x8xf32>
    %64 = arith.addf %56, %63 : vector<8x8xf32>
    %c0_45 = arith.constant 0 : index
    %c129 = arith.constant 129 : index
    %65 = vector.load %arg19[%c0_45, %c129] : memref<16x139xbf16, #tpu.memory_space<vmem>>, vector<16x8xbf16>
    %c5 = arith.constant 5 : index
    %c0_46 = arith.constant 0 : index
    %c0_47 = arith.constant 0 : index
    %66 = vector.load %arg7[%c5, %c0_46, %c0_47] : memref<9x8x16xbf16, #tpu.memory_space<vmem>>, vector<1x8x16xbf16>
    %67 = vector.shape_cast %66 : vector<1x8x16xbf16> to vector<8x16xbf16>
    %cst_48 = arith.constant dense<0.000000e+00> : vector<8x8xf32>
    %68 = tpu.matmul %67, %65, %cst_48 {dimension_numbers = #tpu.dot_dimension_numbers<[1], [0], [0], [1], [0, 0, 1, 1], [], []>} : vector<8x16xbf16>, vector<16x8xbf16>, vector<8x8xf32> -> vector<8x8xf32>
    %69 = vector.extract_strided_slice %4 {offsets = [5, 0], sizes = [1, 8], strides = [1, 1]} : vector<9x8xf32> to vector<1x8xf32>
    %70 = vector.broadcast %69 : vector<1x8xf32> to vector<8x8xf32>
    %71 = arith.mulf %68, %70 : vector<8x8xf32>
    %72 = arith.addf %64, %71 : vector<8x8xf32>
    %c0_49 = arith.constant 0 : index
    %c129_50 = arith.constant 129 : index
    %73 = vector.load %arg19[%c0_49, %c129_50] : memref<16x139xbf16, #tpu.memory_space<vmem>>, vector<16x8xbf16>
    %c6 = arith.constant 6 : index
    %c0_51 = arith.constant 0 : index
    %c0_52 = arith.constant 0 : index
    %74 = vector.load %arg7[%c6, %c0_51, %c0_52] : memref<9x8x16xbf16, #tpu.memory_space<vmem>>, vector<1x8x16xbf16>
    %75 = vector.shape_cast %74 : vector<1x8x16xbf16> to vector<8x16xbf16>
    %cst_53 = arith.constant dense<0.000000e+00> : vector<8x8xf32>
    %76 = tpu.matmul %75, %73, %cst_53 {dimension_numbers = #tpu.dot_dimension_numbers<[1], [0], [0], [1], [0, 0, 1, 1], [], []>} : vector<8x16xbf16>, vector<16x8xbf16>, vector<8x8xf32> -> vector<8x8xf32>
    %77 = vector.extract_strided_slice %4 {offsets = [6, 0], sizes = [1, 8], strides = [1, 1]} : vector<9x8xf32> to vector<1x8xf32>
    %78 = vector.broadcast %77 : vector<1x8xf32> to vector<8x8xf32>
    %79 = arith.mulf %76, %78 : vector<8x8xf32>
    %80 = arith.addf %72, %79 : vector<8x8xf32>
    %c0_54 = arith.constant 0 : index
    %c130 = arith.constant 130 : index
    %81 = vector.load %arg19[%c0_54, %c130] : memref<16x139xbf16, #tpu.memory_space<vmem>>, vector<16x8xbf16>
    %c7 = arith.constant 7 : index
    %c0_55 = arith.constant 0 : index
    %c0_56 = arith.constant 0 : index
    %82 = vector.load %arg7[%c7, %c0_55, %c0_56] : memref<9x8x16xbf16, #tpu.memory_space<vmem>>, vector<1x8x16xbf16>
    %83 = vector.shape_cast %82 : vector<1x8x16xbf16> to vector<8x16xbf16>
    %cst_57 = arith.constant dense<0.000000e+00> : vector<8x8xf32>
    %84 = tpu.matmul %83, %81, %cst_57 {dimension_numbers = #tpu.dot_dimension_numbers<[1], [0], [0], [1], [0, 0, 1, 1], [], []>} : vector<8x16xbf16>, vector<16x8xbf16>, vector<8x8xf32> -> vector<8x8xf32>
    %85 = vector.extract_strided_slice %4 {offsets = [7, 0], sizes = [1, 8], strides = [1, 1]} : vector<9x8xf32> to vector<1x8xf32>
    %86 = vector.broadcast %85 : vector<1x8xf32> to vector<8x8xf32>
    %87 = arith.mulf %84, %86 : vector<8x8xf32>
    %88 = arith.addf %80, %87 : vector<8x8xf32>
    %c0_58 = arith.constant 0 : index
    %c131 = arith.constant 131 : index
    %89 = vector.load %arg19[%c0_58, %c131] : memref<16x139xbf16, #tpu.memory_space<vmem>>, vector<16x8xbf16>
    %c8 = arith.constant 8 : index
    %c0_59 = arith.constant 0 : index
    %c0_60 = arith.constant 0 : index
    %90 = vector.load %arg7[%c8, %c0_59, %c0_60] : memref<9x8x16xbf16, #tpu.memory_space<vmem>>, vector<1x8x16xbf16>
    %91 = vector.shape_cast %90 : vector<1x8x16xbf16> to vector<8x16xbf16>
    %cst_61 = arith.constant dense<0.000000e+00> : vector<8x8xf32>
    %92 = tpu.matmul %91, %89, %cst_61 {dimension_numbers = #tpu.dot_dimension_numbers<[1], [0], [0], [1], [0, 0, 1, 1], [], []>} : vector<8x16xbf16>, vector<16x8xbf16>, vector<8x8xf32> -> vector<8x8xf32>
    %93 = vector.extract_strided_slice %4 {offsets = [8, 0], sizes = [1, 8], strides = [1, 1]} : vector<9x8xf32> to vector<1x8xf32>
    %94 = vector.broadcast %93 : vector<1x8xf32> to vector<8x8xf32>
    %95 = arith.mulf %92, %94 : vector<8x8xf32>
    %96 = arith.addf %88, %95 : vector<8x8xf32>
    %c16 = arith.constant 16 : index
    %c0_62 = arith.constant 0 : index
    %97 = vector.load %arg18[%c16, %c0_62] : memref<32x8xf32, #tpu.memory_space<vmem>>, vector<8x8xf32>
    tpu.vector_store %arg18[%c16, %c0_62], %96 {strides = array<i32>} : memref<32x8xf32, #tpu.memory_space<vmem>>, vector<8x8xf32>,
    %c0_63 = arith.constant 0 : index
    %c0_64 = arith.constant 0 : index
    %98 = vector.load %arg18[%c0_63, %c0_64] : memref<32x8xf32, #tpu.memory_space<vmem>>, vector<24x8xf32>
    %c0_65 = arith.constant 0 : index
    %c0_66 = arith.constant 0 : index
    %99 = vector.load %arg8[%c0_65, %c0_66] : memref<24x1xf32, #tpu.memory_space<vmem>>, vector<24x1xf32>
    %100 = vector.broadcast %99 : vector<24x1xf32> to vector<24x8xf32>
    %101 = arith.mulf %98, %100 : vector<24x8xf32>
    %c0_67 = arith.constant 0 : index
    %c0_68 = arith.constant 0 : index
    %102 = vector.load %arg9[%c0_67, %c0_68] : memref<24x1xf32, #tpu.memory_space<vmem>>, vector<24x1xf32>
    %103 = vector.broadcast %102 : vector<24x1xf32> to vector<24x8xf32>
    %104 = arith.addf %101, %103 : vector<24x8xf32>
    %cst_69 = arith.constant 0.000000e+00 : f32
    %105 = vector.broadcast %cst_69 : f32 to vector<24x8xf32>
    %106 = arith.maximumf %104, %105 : vector<24x8xf32>
    %c0_70 = arith.constant 0 : index
    %c0_71 = arith.constant 0 : index
    %107 = vector.load %arg10[%c0_70, %c0_71] : memref<16x24xbf16, #tpu.memory_space<vmem>>, vector<16x24xbf16>
    %108 = arith.truncf %106 : vector<24x8xf32> to vector<24x8xbf16>
    %cst_72 = arith.constant dense<0.000000e+00> : vector<16x8xf32>
    %109 = tpu.matmul %107, %108, %cst_72 {dimension_numbers = #tpu.dot_dimension_numbers<[1], [0], [0], [1], [0, 0, 1, 1], [], []>} : vector<16x24xbf16>, vector<24x8xbf16>, vector<16x8xf32> -> vector<16x8xf32>
    %c0_73 = arith.constant 0 : index
    %c0_74 = arith.constant 0 : index
    %110 = vector.load %arg11[%c0_73, %c0_74] : memref<16x1xf32, #tpu.memory_space<vmem>>, vector<16x1xf32>
    %111 = vector.broadcast %110 : vector<16x1xf32> to vector<16x8xf32>
    %112 = arith.addf %109, %111 : vector<16x8xf32>
    %cst_75 = arith.constant 0.000000e+00 : f32
    %113 = vector.broadcast %cst_75 : f32 to vector<16x8xf32>
    %114 = arith.maximumf %112, %113 : vector<16x8xf32>
    %115 = arith.truncf %114 : vector<16x8xf32> to vector<16x8xbf16>
    %c0_76 = arith.constant 0 : index
    %c128_77 = arith.constant 128 : index
    %116 = vector.load %arg19[%c0_76, %c128_77] : memref<16x139xbf16, #tpu.memory_space<vmem>>, vector<16x8xbf16>
    tpu.vector_store %arg19[%c0_76, %c128_77], %115 {strides = array<i32>} : memref<16x139xbf16, #tpu.memory_space<vmem>>, vector<16x8xbf16>,
    %cst_78 = arith.constant 0.000000e+00 : f32
    %117 = vector.broadcast %cst_78 : f32 to vector<8x8xf32>
    %c0_79 = arith.constant 0 : index
    %c125_80 = arith.constant 125 : index
    %118 = vector.load %arg19[%c0_79, %c125_80] : memref<16x139xbf16, #tpu.memory_space<vmem>>, vector<16x8xbf16>
    %c0_81 = arith.constant 0 : index
    %c0_82 = arith.constant 0 : index
    %c0_83 = arith.constant 0 : index
    %119 = vector.load %arg12[%c0_81, %c0_82, %c0_83] : memref<9x8x16xbf16, #tpu.memory_space<vmem>>, vector<1x8x16xbf16>
    %120 = vector.shape_cast %119 : vector<1x8x16xbf16> to vector<8x16xbf16>
    %cst_84 = arith.constant dense<0.000000e+00> : vector<8x8xf32>
    %121 = tpu.matmul %120, %118, %cst_84 {dimension_numbers = #tpu.dot_dimension_numbers<[1], [0], [0], [1], [0, 0, 1, 1], [], []>} : vector<8x16xbf16>, vector<16x8xbf16>, vector<8x8xf32> -> vector<8x8xf32>
    %122 = vector.extract_strided_slice %4 {offsets = [0, 0], sizes = [1, 8], strides = [1, 1]} : vector<9x8xf32> to vector<1x8xf32>
    %123 = vector.broadcast %122 : vector<1x8xf32> to vector<8x8xf32>
    %124 = arith.mulf %121, %123 : vector<8x8xf32>
    %125 = arith.addf %117, %124 : vector<8x8xf32>
    %c0_85 = arith.constant 0 : index
    %c126_86 = arith.constant 126 : index
    %126 = vector.load %arg19[%c0_85, %c126_86] : memref<16x139xbf16, #tpu.memory_space<vmem>>, vector<16x8xbf16>
    %c1_87 = arith.constant 1 : index
    %c0_88 = arith.constant 0 : index
    %c0_89 = arith.constant 0 : index
    %127 = vector.load %arg12[%c1_87, %c0_88, %c0_89] : memref<9x8x16xbf16, #tpu.memory_space<vmem>>, vector<1x8x16xbf16>
    %128 = vector.shape_cast %127 : vector<1x8x16xbf16> to vector<8x16xbf16>
    %cst_90 = arith.constant dense<0.000000e+00> : vector<8x8xf32>
    %129 = tpu.matmul %128, %126, %cst_90 {dimension_numbers = #tpu.dot_dimension_numbers<[1], [0], [0], [1], [0, 0, 1, 1], [], []>} : vector<8x16xbf16>, vector<16x8xbf16>, vector<8x8xf32> -> vector<8x8xf32>
    %130 = vector.extract_strided_slice %4 {offsets = [1, 0], sizes = [1, 8], strides = [1, 1]} : vector<9x8xf32> to vector<1x8xf32>
    %131 = vector.broadcast %130 : vector<1x8xf32> to vector<8x8xf32>
    %132 = arith.mulf %129, %131 : vector<8x8xf32>
    %133 = arith.addf %125, %132 : vector<8x8xf32>
    %c0_91 = arith.constant 0 : index
    %c127_92 = arith.constant 127 : index
    %134 = vector.load %arg19[%c0_91, %c127_92] : memref<16x139xbf16, #tpu.memory_space<vmem>>, vector<16x8xbf16>
    %c2_93 = arith.constant 2 : index
    %c0_94 = arith.constant 0 : index
    %c0_95 = arith.constant 0 : index
    %135 = vector.load %arg12[%c2_93, %c0_94, %c0_95] : memref<9x8x16xbf16, #tpu.memory_space<vmem>>, vector<1x8x16xbf16>
    %136 = vector.shape_cast %135 : vector<1x8x16xbf16> to vector<8x16xbf16>
    %cst_96 = arith.constant dense<0.000000e+00> : vector<8x8xf32>
    %137 = tpu.matmul %136, %134, %cst_96 {dimension_numbers = #tpu.dot_dimension_numbers<[1], [0], [0], [1], [0, 0, 1, 1], [], []>} : vector<8x16xbf16>, vector<16x8xbf16>, vector<8x8xf32> -> vector<8x8xf32>
    %138 = vector.extract_strided_slice %4 {offsets = [2, 0], sizes = [1, 8], strides = [1, 1]} : vector<9x8xf32> to vector<1x8xf32>
    %139 = vector.broadcast %138 : vector<1x8xf32> to vector<8x8xf32>
    %140 = arith.mulf %137, %139 : vector<8x8xf32>
    %141 = arith.addf %133, %140 : vector<8x8xf32>
    %c0_97 = arith.constant 0 : index
    %c127_98 = arith.constant 127 : index
    %142 = vector.load %arg19[%c0_97, %c127_98] : memref<16x139xbf16, #tpu.memory_space<vmem>>, vector<16x8xbf16>
    %c3_99 = arith.constant 3 : index
    %c0_100 = arith.constant 0 : index
    %c0_101 = arith.constant 0 : index
    %143 = vector.load %arg12[%c3_99, %c0_100, %c0_101] : memref<9x8x16xbf16, #tpu.memory_space<vmem>>, vector<1x8x16xbf16>
    %144 = vector.shape_cast %143 : vector<1x8x16xbf16> to vector<8x16xbf16>
    %cst_102 = arith.constant dense<0.000000e+00> : vector<8x8xf32>
    %145 = tpu.matmul %144, %142, %cst_102 {dimension_numbers = #tpu.dot_dimension_numbers<[1], [0], [0], [1], [0, 0, 1, 1], [], []>} : vector<8x16xbf16>, vector<16x8xbf16>, vector<8x8xf32> -> vector<8x8xf32>
    %146 = vector.extract_strided_slice %4 {offsets = [3, 0], sizes = [1, 8], strides = [1, 1]} : vector<9x8xf32> to vector<1x8xf32>
    %147 = vector.broadcast %146 : vector<1x8xf32> to vector<8x8xf32>
    %148 = arith.mulf %145, %147 : vector<8x8xf32>
    %149 = arith.addf %141, %148 : vector<8x8xf32>
    %c0_103 = arith.constant 0 : index
    %c128_104 = arith.constant 128 : index
    %150 = vector.load %arg19[%c0_103, %c128_104] : memref<16x139xbf16, #tpu.memory_space<vmem>>, vector<16x8xbf16>
    %c4_105 = arith.constant 4 : index
    %c0_106 = arith.constant 0 : index
    %c0_107 = arith.constant 0 : index
    %151 = vector.load %arg12[%c4_105, %c0_106, %c0_107] : memref<9x8x16xbf16, #tpu.memory_space<vmem>>, vector<1x8x16xbf16>
    %152 = vector.shape_cast %151 : vector<1x8x16xbf16> to vector<8x16xbf16>
    %cst_108 = arith.constant dense<0.000000e+00> : vector<8x8xf32>
    %153 = tpu.matmul %152, %150, %cst_108 {dimension_numbers = #tpu.dot_dimension_numbers<[1], [0], [0], [1], [0, 0, 1, 1], [], []>} : vector<8x16xbf16>, vector<16x8xbf16>, vector<8x8xf32> -> vector<8x8xf32>
    %154 = vector.extract_strided_slice %4 {offsets = [4, 0], sizes = [1, 8], strides = [1, 1]} : vector<9x8xf32> to vector<1x8xf32>
    %155 = vector.broadcast %154 : vector<1x8xf32> to vector<8x8xf32>
    %156 = arith.mulf %153, %155 : vector<8x8xf32>
    %157 = arith.addf %149, %156 : vector<8x8xf32>
    %c0_109 = arith.constant 0 : index
    %c129_110 = arith.constant 129 : index
    %158 = vector.load %arg19[%c0_109, %c129_110] : memref<16x139xbf16, #tpu.memory_space<vmem>>, vector<16x8xbf16>
    %c5_111 = arith.constant 5 : index
    %c0_112 = arith.constant 0 : index
    %c0_113 = arith.constant 0 : index
    %159 = vector.load %arg12[%c5_111, %c0_112, %c0_113] : memref<9x8x16xbf16, #tpu.memory_space<vmem>>, vector<1x8x16xbf16>
    %160 = vector.shape_cast %159 : vector<1x8x16xbf16> to vector<8x16xbf16>
    %cst_114 = arith.constant dense<0.000000e+00> : vector<8x8xf32>
    %161 = tpu.matmul %160, %158, %cst_114 {dimension_numbers = #tpu.dot_dimension_numbers<[1], [0], [0], [1], [0, 0, 1, 1], [], []>} : vector<8x16xbf16>, vector<16x8xbf16>, vector<8x8xf32> -> vector<8x8xf32>
    %162 = vector.extract_strided_slice %4 {offsets = [5, 0], sizes = [1, 8], strides = [1, 1]} : vector<9x8xf32> to vector<1x8xf32>
    %163 = vector.broadcast %162 : vector<1x8xf32> to vector<8x8xf32>
    %164 = arith.mulf %161, %163 : vector<8x8xf32>
    %165 = arith.addf %157, %164 : vector<8x8xf32>
    %c0_115 = arith.constant 0 : index
    %c129_116 = arith.constant 129 : index
    %166 = vector.load %arg19[%c0_115, %c129_116] : memref<16x139xbf16, #tpu.memory_space<vmem>>, vector<16x8xbf16>
    %c6_117 = arith.constant 6 : index
    %c0_118 = arith.constant 0 : index
    %c0_119 = arith.constant 0 : index
    %167 = vector.load %arg12[%c6_117, %c0_118, %c0_119] : memref<9x8x16xbf16, #tpu.memory_space<vmem>>, vector<1x8x16xbf16>
    %168 = vector.shape_cast %167 : vector<1x8x16xbf16> to vector<8x16xbf16>
    %cst_120 = arith.constant dense<0.000000e+00> : vector<8x8xf32>
    %169 = tpu.matmul %168, %166, %cst_120 {dimension_numbers = #tpu.dot_dimension_numbers<[1], [0], [0], [1], [0, 0, 1, 1], [], []>} : vector<8x16xbf16>, vector<16x8xbf16>, vector<8x8xf32> -> vector<8x8xf32>
    %170 = vector.extract_strided_slice %4 {offsets = [6, 0], sizes = [1, 8], strides = [1, 1]} : vector<9x8xf32> to vector<1x8xf32>
    %171 = vector.broadcast %170 : vector<1x8xf32> to vector<8x8xf32>
    %172 = arith.mulf %169, %171 : vector<8x8xf32>
    %173 = arith.addf %165, %172 : vector<8x8xf32>
    %c0_121 = arith.constant 0 : index
    %c130_122 = arith.constant 130 : index
    %174 = vector.load %arg19[%c0_121, %c130_122] : memref<16x139xbf16, #tpu.memory_space<vmem>>, vector<16x8xbf16>
    %c7_123 = arith.constant 7 : index
    %c0_124 = arith.constant 0 : index
    %c0_125 = arith.constant 0 : index
    %175 = vector.load %arg12[%c7_123, %c0_124, %c0_125] : memref<9x8x16xbf16, #tpu.memory_space<vmem>>, vector<1x8x16xbf16>
    %176 = vector.shape_cast %175 : vector<1x8x16xbf16> to vector<8x16xbf16>
    %cst_126 = arith.constant dense<0.000000e+00> : vector<8x8xf32>
    %177 = tpu.matmul %176, %174, %cst_126 {dimension_numbers = #tpu.dot_dimension_numbers<[1], [0], [0], [1], [0, 0, 1, 1], [], []>} : vector<8x16xbf16>, vector<16x8xbf16>, vector<8x8xf32> -> vector<8x8xf32>
    %178 = vector.extract_strided_slice %4 {offsets = [7, 0], sizes = [1, 8], strides = [1, 1]} : vector<9x8xf32> to vector<1x8xf32>
    %179 = vector.broadcast %178 : vector<1x8xf32> to vector<8x8xf32>
    %180 = arith.mulf %177, %179 : vector<8x8xf32>
    %181 = arith.addf %173, %180 : vector<8x8xf32>
    %c0_127 = arith.constant 0 : index
    %c131_128 = arith.constant 131 : index
    %182 = vector.load %arg19[%c0_127, %c131_128] : memref<16x139xbf16, #tpu.memory_space<vmem>>, vector<16x8xbf16>
    %c8_129 = arith.constant 8 : index
    %c0_130 = arith.constant 0 : index
    %c0_131 = arith.constant 0 : index
    %183 = vector.load %arg12[%c8_129, %c0_130, %c0_131] : memref<9x8x16xbf16, #tpu.memory_space<vmem>>, vector<1x8x16xbf16>
    %184 = vector.shape_cast %183 : vector<1x8x16xbf16> to vector<8x16xbf16>
    %cst_132 = arith.constant dense<0.000000e+00> : vector<8x8xf32>
    %185 = tpu.matmul %184, %182, %cst_132 {dimension_numbers = #tpu.dot_dimension_numbers<[1], [0], [0], [1], [0, 0, 1, 1], [], []>} : vector<8x16xbf16>, vector<16x8xbf16>, vector<8x8xf32> -> vector<8x8xf32>
    %186 = vector.extract_strided_slice %4 {offsets = [8, 0], sizes = [1, 8], strides = [1, 1]} : vector<9x8xf32> to vector<1x8xf32>
    %187 = vector.broadcast %186 : vector<1x8xf32> to vector<8x8xf32>
    %188 = arith.mulf %185, %187 : vector<8x8xf32>
    %189 = arith.addf %181, %188 : vector<8x8xf32>
    %c24 = arith.constant 24 : index
    %c0_133 = arith.constant 0 : index
    %190 = vector.load %arg18[%c24, %c0_133] : memref<32x8xf32, #tpu.memory_space<vmem>>, vector<8x8xf32>
    tpu.vector_store %arg18[%c24, %c0_133], %189 {strides = array<i32>} : memref<32x8xf32, #tpu.memory_space<vmem>>, vector<8x8xf32>,
    %c0_134 = arith.constant 0 : index
    %c0_135 = arith.constant 0 : index
    %191 = vector.load %arg18[%c0_134, %c0_135] : memref<32x8xf32, #tpu.memory_space<vmem>>, vector<32x8xf32>
    %c0_136 = arith.constant 0 : index
    %c0_137 = arith.constant 0 : index
    %192 = vector.load %arg13[%c0_136, %c0_137] : memref<32x1xf32, #tpu.memory_space<vmem>>, vector<32x1xf32>
    %193 = vector.broadcast %192 : vector<32x1xf32> to vector<32x8xf32>
    %194 = arith.mulf %191, %193 : vector<32x8xf32>
    %c0_138 = arith.constant 0 : index
    %c0_139 = arith.constant 0 : index
    %195 = vector.load %arg14[%c0_138, %c0_139] : memref<32x1xf32, #tpu.memory_space<vmem>>, vector<32x1xf32>
    %196 = vector.broadcast %195 : vector<32x1xf32> to vector<32x8xf32>
    %197 = arith.addf %194, %196 : vector<32x8xf32>
    %cst_140 = arith.constant 0.000000e+00 : f32
    %198 = vector.broadcast %cst_140 : f32 to vector<32x8xf32>
    %199 = arith.maximumf %197, %198 : vector<32x8xf32>
    %c0_141 = arith.constant 0 : index
    %c0_142 = arith.constant 0 : index
    %200 = vector.load %arg15[%c0_141, %c0_142] : memref<16x32xbf16, #tpu.memory_space<vmem>>, vector<16x32xbf16>
    %201 = arith.truncf %199 : vector<32x8xf32> to vector<32x8xbf16>
    %cst_143 = arith.constant dense<0.000000e+00> : vector<16x8xf32>
    %202 = tpu.matmul %200, %201, %cst_143 {dimension_numbers = #tpu.dot_dimension_numbers<[1], [0], [0], [1], [0, 0, 1, 1], [], []>} : vector<16x32xbf16>, vector<32x8xbf16>, vector<16x8xf32> -> vector<16x8xf32>
    %203 = arith.truncf %202 : vector<16x8xf32> to vector<16x8xbf16>
    %c0_144 = arith.constant 0 : index
    %c0_145 = arith.constant 0 : index
    %204 = vector.load %arg16[%c0_144, %c0_145] : memref<8x2xbf16, #tpu.memory_space<vmem>>, vector<8x2xbf16>
    %cst_146 = arith.constant dense<0.000000e+00> : vector<16x2xf32>
    %205 = tpu.matmul %203, %204, %cst_146 {dimension_numbers = #tpu.dot_dimension_numbers<[1], [0], [0], [1], [0, 0, 1, 1], [], []>} : vector<16x8xbf16>, vector<8x2xbf16>, vector<16x2xf32> -> vector<16x2xf32>
    %c0_147 = arith.constant 0 : index
    %c0_148 = arith.constant 0 : index
    %206 = vector.load %arg17[%c0_147, %c0_148] : memref<16x2xf32, #tpu.memory_space<vmem>>, vector<16x2xf32>
    tpu.vector_store %arg17[%c0_147, %c0_148], %205 {strides = array<i32>} : memref<16x2xf32, #tpu.memory_space<vmem>>, vector<16x2xf32>,
    return
  }
  func.func @transform_0(%arg0: i32) -> (i32, i32) {
    %c0_i32 = arith.constant 0 : i32
    %c0_i32_0 = arith.constant 0 : i32
    %c0_i32_1 = arith.constant 0 : i32
    return %c0_i32, %c0_i32_0 : i32, i32
  }
  func.func @transform_1(%arg0: i32) -> (i32, i32) {
    %c0_i32 = arith.constant 0 : i32
    %c0_i32_0 = arith.constant 0 : i32
    %c0_i32_1 = arith.constant 0 : i32
    return %c0_i32, %c0_i32_0 : i32, i32
  }
  func.func @transform_2(%arg0: i32) -> (i32, i32) {
    %c0_i32 = arith.constant 0 : i32
    %c0_i32_0 = arith.constant 0 : i32
    %c0_i32_1 = arith.constant 0 : i32
    return %c0_i32, %c0_i32_0 : i32, i32
  }
  func.func @transform_3(%arg0: i32) -> (i32, i32) {
    %c0_i32 = arith.constant 0 : i32
    %c0_i32_0 = arith.constant 0 : i32
    %c0_i32_1 = arith.constant 0 : i32
    return %c0_i32, %c0_i32_0 : i32, i32
  }
  func.func @transform_4(%arg0: i32) -> (i32, i32) {
    %c0_i32 = arith.constant 0 : i32
    %c0_i32_0 = arith.constant 0 : i32
    %c0_i32_1 = arith.constant 0 : i32
    return %c0_i32, %c0_i32_0 : i32, i32
  }
  func.func @transform_5(%arg0: i32) -> (i32, i32) {
    %c0_i32 = arith.constant 0 : i32
    %c0_i32_0 = arith.constant 0 : i32
    %c0_i32_1 = arith.constant 0 : i32
    return %c0_i32, %c0_i32_0 : i32, i32
  }
  func.func @transform_6(%arg0: i32) -> (i32, i32, i32) {
    %c0_i32 = arith.constant 0 : i32
    %c0_i32_0 = arith.constant 0 : i32
    %c0_i32_1 = arith.constant 0 : i32
    %c0_i32_2 = arith.constant 0 : i32
    return %c0_i32, %c0_i32_0, %c0_i32_1 : i32, i32, i32
  }
  func.func @transform_7(%arg0: i32) -> (i32, i32) {
    %c0_i32 = arith.constant 0 : i32
    %c0_i32_0 = arith.constant 0 : i32
    %c0_i32_1 = arith.constant 0 : i32
    return %c0_i32, %c0_i32_0 : i32, i32
  }
  func.func @transform_8(%arg0: i32) -> (i32, i32) {
    %c0_i32 = arith.constant 0 : i32
    %c0_i32_0 = arith.constant 0 : i32
    %c0_i32_1 = arith.constant 0 : i32
    return %c0_i32, %c0_i32_0 : i32, i32
  }
  func.func @transform_9(%arg0: i32) -> (i32, i32) {
    %c0_i32 = arith.constant 0 : i32
    %c0_i32_0 = arith.constant 0 : i32
    %c0_i32_1 = arith.constant 0 : i32
    return %c0_i32, %c0_i32_0 : i32, i32
  }
  func.func @transform_10(%arg0: i32) -> (i32, i32) {
    %c0_i32 = arith.constant 0 : i32
    %c0_i32_0 = arith.constant 0 : i32
    %c0_i32_1 = arith.constant 0 : i32
    return %c0_i32, %c0_i32_0 : i32, i32
  }
  func.func @transform_11(%arg0: i32) -> (i32, i32, i32) {
    %c0_i32 = arith.constant 0 : i32
    %c0_i32_0 = arith.constant 0 : i32
    %c0_i32_1 = arith.constant 0 : i32
    %c0_i32_2 = arith.constant 0 : i32
    return %c0_i32, %c0_i32_0, %c0_i32_1 : i32, i32, i32
  }
  func.func @transform_12(%arg0: i32) -> (i32, i32) {
    %c0_i32 = arith.constant 0 : i32
    %c0_i32_0 = arith.constant 0 : i32
    %c0_i32_1 = arith.constant 0 : i32
    return %c0_i32, %c0_i32_0 : i32, i32
  }
  func.func @transform_13(%arg0: i32) -> (i32, i32) {
    %c0_i32 = arith.constant 0 : i32
    %c0_i32_0 = arith.constant 0 : i32
    %c0_i32_1 = arith.constant 0 : i32
    return %c0_i32, %c0_i32_0 : i32, i32
  }
  func.func @transform_14(%arg0: i32) -> (i32, i32) {
    %c0_i32 = arith.constant 0 : i32
    %c0_i32_0 = arith.constant 0 : i32
    %c0_i32_1 = arith.constant 0 : i32
    return %c0_i32, %c0_i32_0 : i32, i32
  }
  func.func @transform_15(%arg0: i32) -> (i32, i32) {
    %c0_i32 = arith.constant 0 : i32
    %c0_i32_0 = arith.constant 0 : i32
    %c0_i32_1 = arith.constant 0 : i32
    return %c0_i32, %c0_i32_0 : i32, i32
  }
  func.func @transform_16(%arg0: i32) -> (i32, i32) {
    %c0_i32 = arith.constant 0 : i32
    %c0_i32_0 = arith.constant 0 : i32
    %c0_i32_1 = arith.constant 0 : i32
    return %c0_i32, %c0_i32_0 : i32, i32
  }
}

module attributes {stable_mosaic.version = 11 : i64} {
  func.func @_dense_block_kernel(%arg0: i32, %arg1: memref<16x2xf32, #tpu.memory_space<vmem>>, %arg2: memref<9x2xf32, #tpu.memory_space<vmem>>, %arg3: memref<16x1xf32, #tpu.memory_space<vmem>>, %arg4: memref<16x1xf32, #tpu.memory_space<vmem>>, %arg5: memref<16x16xbf16, #tpu.memory_space<vmem>>, %arg6: memref<16x1xf32, #tpu.memory_space<vmem>>, %arg7: memref<9x8x16xbf16, #tpu.memory_space<vmem>>, %arg8: memref<24x1xf32, #tpu.memory_space<vmem>>, %arg9: memref<24x1xf32, #tpu.memory_space<vmem>>, %arg10: memref<16x24xbf16, #tpu.memory_space<vmem>>, %arg11: memref<16x1xf32, #tpu.memory_space<vmem>>, %arg12: memref<9x8x16xbf16, #tpu.memory_space<vmem>>, %arg13: memref<32x2xf32, #tpu.memory_space<vmem>>, %arg14: memref<32x2xf32, #tpu.memory_space<vmem>>, %arg15: memref<16x132xbf16, #tpu.memory_space<vmem>>) attributes {dimension_semantics = [#tpu.dimension_semantics<arbitrary>], iteration_bounds = array<i64: 1>, scalar_prefetch = 0 : i64, scratch_operands = 2 : i64, tpu.core_type = #tpu.core_type<tc>, window_params = [{pipeline_mode = #tpu.pipeline_mode<synchronous>, transform_indices = @transform_0, window_bounds = array<i64: 16, 2>}, {pipeline_mode = #tpu.pipeline_mode<synchronous>, transform_indices = @transform_1, window_bounds = array<i64: 9, 2>}, {pipeline_mode = #tpu.pipeline_mode<synchronous>, transform_indices = @transform_2, window_bounds = array<i64: 16, 1>}, {pipeline_mode = #tpu.pipeline_mode<synchronous>, transform_indices = @transform_3, window_bounds = array<i64: 16, 1>}, {pipeline_mode = #tpu.pipeline_mode<synchronous>, transform_indices = @transform_4, window_bounds = array<i64: 16, 16>}, {pipeline_mode = #tpu.pipeline_mode<synchronous>, transform_indices = @transform_5, window_bounds = array<i64: 16, 1>}, {pipeline_mode = #tpu.pipeline_mode<synchronous>, transform_indices = @transform_6, window_bounds = array<i64: 9, 8, 16>}, {pipeline_mode = #tpu.pipeline_mode<synchronous>, transform_indices = @transform_7, window_bounds = array<i64: 24, 1>}, {pipeline_mode = #tpu.pipeline_mode<synchronous>, transform_indices = @transform_8, window_bounds = array<i64: 24, 1>}, {pipeline_mode = #tpu.pipeline_mode<synchronous>, transform_indices = @transform_9, window_bounds = array<i64: 16, 24>}, {pipeline_mode = #tpu.pipeline_mode<synchronous>, transform_indices = @transform_10, window_bounds = array<i64: 16, 1>}, {pipeline_mode = #tpu.pipeline_mode<synchronous>, transform_indices = @transform_11, window_bounds = array<i64: 9, 8, 16>}, {pipeline_mode = #tpu.pipeline_mode<synchronous>, transform_indices = @transform_12, window_bounds = array<i64: 32, 2>}]} {
    %cst = arith.constant 0.000000e+00 : bf16
    %0 = vector.broadcast %cst : bf16 to vector<16x132xbf16>
    %c0 = arith.constant 0 : index
    %c0_0 = arith.constant 0 : index
    %1 = vector.load %arg15[%c0, %c0_0] : memref<16x132xbf16, #tpu.memory_space<vmem>>, vector<16x132xbf16>
    tpu.vector_store %arg15[%c0, %c0_0], %0 {strides = array<i32>} : memref<16x132xbf16, #tpu.memory_space<vmem>>, vector<16x132xbf16>,
    %c0_1 = arith.constant 0 : index
    %c0_2 = arith.constant 0 : index
    %2 = vector.load %arg1[%c0_1, %c0_2] : memref<16x2xf32, #tpu.memory_space<vmem>>, vector<16x2xf32>
    %c0_3 = arith.constant 0 : index
    %c0_4 = arith.constant 0 : index
    %3 = vector.load %arg14[%c0_3, %c0_4] : memref<32x2xf32, #tpu.memory_space<vmem>>, vector<16x2xf32>
    tpu.vector_store %arg14[%c0_3, %c0_4], %2 {strides = array<i32>} : memref<32x2xf32, #tpu.memory_space<vmem>>, vector<16x2xf32>,
    %c0_5 = arith.constant 0 : index
    %c0_6 = arith.constant 0 : index
    %4 = vector.load %arg2[%c0_5, %c0_6] : memref<9x2xf32, #tpu.memory_space<vmem>>, vector<9x2xf32>
    %c0_7 = arith.constant 0 : index
    %c0_8 = arith.constant 0 : index
    %5 = vector.load %arg14[%c0_7, %c0_8] : memref<32x2xf32, #tpu.memory_space<vmem>>, vector<16x2xf32>
    %c0_9 = arith.constant 0 : index
    %c0_10 = arith.constant 0 : index
    %6 = vector.load %arg3[%c0_9, %c0_10] : memref<16x1xf32, #tpu.memory_space<vmem>>, vector<16x1xf32>
    %7 = vector.broadcast %6 : vector<16x1xf32> to vector<16x2xf32>
    %8 = arith.mulf %5, %7 : vector<16x2xf32>
    %c0_11 = arith.constant 0 : index
    %c0_12 = arith.constant 0 : index
    %9 = vector.load %arg4[%c0_11, %c0_12] : memref<16x1xf32, #tpu.memory_space<vmem>>, vector<16x1xf32>
    %10 = vector.broadcast %9 : vector<16x1xf32> to vector<16x2xf32>
    %11 = arith.addf %8, %10 : vector<16x2xf32>
    %cst_13 = arith.constant 0.000000e+00 : f32
    %12 = vector.broadcast %cst_13 : f32 to vector<16x2xf32>
    %13 = arith.maximumf %11, %12 : vector<16x2xf32>
    %c0_14 = arith.constant 0 : index
    %c0_15 = arith.constant 0 : index
    %14 = vector.load %arg5[%c0_14, %c0_15] : memref<16x16xbf16, #tpu.memory_space<vmem>>, vector<16x16xbf16>
    %15 = arith.truncf %13 : vector<16x2xf32> to vector<16x2xbf16>
    %cst_16 = arith.constant dense<0.000000e+00> : vector<16x2xf32>
    %16 = tpu.matmul %14, %15, %cst_16 {dimension_numbers = #tpu.dot_dimension_numbers<[1], [0], [0], [1], [0, 0, 1, 1], [], []>} : vector<16x16xbf16>, vector<16x2xbf16>, vector<16x2xf32> -> vector<16x2xf32>
    %c0_17 = arith.constant 0 : index
    %c0_18 = arith.constant 0 : index
    %17 = vector.load %arg6[%c0_17, %c0_18] : memref<16x1xf32, #tpu.memory_space<vmem>>, vector<16x1xf32>
    %18 = vector.broadcast %17 : vector<16x1xf32> to vector<16x2xf32>
    %19 = arith.addf %16, %18 : vector<16x2xf32>
    %cst_19 = arith.constant 0.000000e+00 : f32
    %20 = vector.broadcast %cst_19 : f32 to vector<16x2xf32>
    %21 = arith.maximumf %19, %20 : vector<16x2xf32>
    %22 = arith.truncf %21 : vector<16x2xf32> to vector<16x2xbf16>
    %c0_20 = arith.constant 0 : index
    %c128 = arith.constant 128 : index
    %23 = vector.load %arg15[%c0_20, %c128] : memref<16x132xbf16, #tpu.memory_space<vmem>>, vector<16x2xbf16>
    tpu.vector_store %arg15[%c0_20, %c128], %22 {strides = array<i32>} : memref<16x132xbf16, #tpu.memory_space<vmem>>, vector<16x2xbf16>,
    %cst_21 = arith.constant 0.000000e+00 : f32
    %24 = vector.broadcast %cst_21 : f32 to vector<8x2xf32>
    %c0_22 = arith.constant 0 : index
    %c128_23 = arith.constant 128 : index
    %25 = vector.load %arg15[%c0_22, %c128_23] : memref<16x132xbf16, #tpu.memory_space<vmem>>, vector<16x2xbf16>
    %c4 = arith.constant 4 : index
    %c0_24 = arith.constant 0 : index
    %c0_25 = arith.constant 0 : index
    %26 = vector.load %arg7[%c4, %c0_24, %c0_25] : memref<9x8x16xbf16, #tpu.memory_space<vmem>>, vector<1x8x16xbf16>
    %27 = vector.shape_cast %26 : vector<1x8x16xbf16> to vector<8x16xbf16>
    %cst_26 = arith.constant dense<0.000000e+00> : vector<8x2xf32>
    %28 = tpu.matmul %27, %25, %cst_26 {dimension_numbers = #tpu.dot_dimension_numbers<[1], [0], [0], [1], [0, 0, 1, 1], [], []>} : vector<8x16xbf16>, vector<16x2xbf16>, vector<8x2xf32> -> vector<8x2xf32>
    %29 = vector.extract_strided_slice %4 {offsets = [4, 0], sizes = [1, 2], strides = [1, 1]} : vector<9x2xf32> to vector<1x2xf32>
    %30 = vector.broadcast %29 : vector<1x2xf32> to vector<8x2xf32>
    %31 = arith.mulf %28, %30 : vector<8x2xf32>
    %32 = arith.addf %24, %31 : vector<8x2xf32>
    %c16 = arith.constant 16 : index
    %c0_27 = arith.constant 0 : index
    %33 = vector.load %arg14[%c16, %c0_27] : memref<32x2xf32, #tpu.memory_space<vmem>>, vector<8x2xf32>
    tpu.vector_store %arg14[%c16, %c0_27], %32 {strides = array<i32>} : memref<32x2xf32, #tpu.memory_space<vmem>>, vector<8x2xf32>,
    %c0_28 = arith.constant 0 : index
    %c0_29 = arith.constant 0 : index
    %34 = vector.load %arg14[%c0_28, %c0_29] : memref<32x2xf32, #tpu.memory_space<vmem>>, vector<24x2xf32>
    %c0_30 = arith.constant 0 : index
    %c0_31 = arith.constant 0 : index
    %35 = vector.load %arg8[%c0_30, %c0_31] : memref<24x1xf32, #tpu.memory_space<vmem>>, vector<24x1xf32>
    %36 = vector.broadcast %35 : vector<24x1xf32> to vector<24x2xf32>
    %37 = arith.mulf %34, %36 : vector<24x2xf32>
    %c0_32 = arith.constant 0 : index
    %c0_33 = arith.constant 0 : index
    %38 = vector.load %arg9[%c0_32, %c0_33] : memref<24x1xf32, #tpu.memory_space<vmem>>, vector<24x1xf32>
    %39 = vector.broadcast %38 : vector<24x1xf32> to vector<24x2xf32>
    %40 = arith.addf %37, %39 : vector<24x2xf32>
    %cst_34 = arith.constant 0.000000e+00 : f32
    %41 = vector.broadcast %cst_34 : f32 to vector<24x2xf32>
    %42 = arith.maximumf %40, %41 : vector<24x2xf32>
    %c0_35 = arith.constant 0 : index
    %c0_36 = arith.constant 0 : index
    %43 = vector.load %arg10[%c0_35, %c0_36] : memref<16x24xbf16, #tpu.memory_space<vmem>>, vector<16x24xbf16>
    %44 = arith.truncf %42 : vector<24x2xf32> to vector<24x2xbf16>
    %cst_37 = arith.constant dense<0.000000e+00> : vector<16x2xf32>
    %45 = tpu.matmul %43, %44, %cst_37 {dimension_numbers = #tpu.dot_dimension_numbers<[1], [0], [0], [1], [0, 0, 1, 1], [], []>} : vector<16x24xbf16>, vector<24x2xbf16>, vector<16x2xf32> -> vector<16x2xf32>
    %c0_38 = arith.constant 0 : index
    %c0_39 = arith.constant 0 : index
    %46 = vector.load %arg11[%c0_38, %c0_39] : memref<16x1xf32, #tpu.memory_space<vmem>>, vector<16x1xf32>
    %47 = vector.broadcast %46 : vector<16x1xf32> to vector<16x2xf32>
    %48 = arith.addf %45, %47 : vector<16x2xf32>
    %cst_40 = arith.constant 0.000000e+00 : f32
    %49 = vector.broadcast %cst_40 : f32 to vector<16x2xf32>
    %50 = arith.maximumf %48, %49 : vector<16x2xf32>
    %51 = arith.truncf %50 : vector<16x2xf32> to vector<16x2xbf16>
    %c0_41 = arith.constant 0 : index
    %c128_42 = arith.constant 128 : index
    %52 = vector.load %arg15[%c0_41, %c128_42] : memref<16x132xbf16, #tpu.memory_space<vmem>>, vector<16x2xbf16>
    tpu.vector_store %arg15[%c0_41, %c128_42], %51 {strides = array<i32>} : memref<16x132xbf16, #tpu.memory_space<vmem>>, vector<16x2xbf16>,
    %cst_43 = arith.constant 0.000000e+00 : f32
    %53 = vector.broadcast %cst_43 : f32 to vector<8x2xf32>
    %c0_44 = arith.constant 0 : index
    %c128_45 = arith.constant 128 : index
    %54 = vector.load %arg15[%c0_44, %c128_45] : memref<16x132xbf16, #tpu.memory_space<vmem>>, vector<16x2xbf16>
    %c4_46 = arith.constant 4 : index
    %c0_47 = arith.constant 0 : index
    %c0_48 = arith.constant 0 : index
    %55 = vector.load %arg12[%c4_46, %c0_47, %c0_48] : memref<9x8x16xbf16, #tpu.memory_space<vmem>>, vector<1x8x16xbf16>
    %56 = vector.shape_cast %55 : vector<1x8x16xbf16> to vector<8x16xbf16>
    %cst_49 = arith.constant dense<0.000000e+00> : vector<8x2xf32>
    %57 = tpu.matmul %56, %54, %cst_49 {dimension_numbers = #tpu.dot_dimension_numbers<[1], [0], [0], [1], [0, 0, 1, 1], [], []>} : vector<8x16xbf16>, vector<16x2xbf16>, vector<8x2xf32> -> vector<8x2xf32>
    %58 = vector.extract_strided_slice %4 {offsets = [4, 0], sizes = [1, 2], strides = [1, 1]} : vector<9x2xf32> to vector<1x2xf32>
    %59 = vector.broadcast %58 : vector<1x2xf32> to vector<8x2xf32>
    %60 = arith.mulf %57, %59 : vector<8x2xf32>
    %61 = arith.addf %53, %60 : vector<8x2xf32>
    %c24 = arith.constant 24 : index
    %c0_50 = arith.constant 0 : index
    %62 = vector.load %arg14[%c24, %c0_50] : memref<32x2xf32, #tpu.memory_space<vmem>>, vector<8x2xf32>
    tpu.vector_store %arg14[%c24, %c0_50], %61 {strides = array<i32>} : memref<32x2xf32, #tpu.memory_space<vmem>>, vector<8x2xf32>,
    %c0_51 = arith.constant 0 : index
    %c0_52 = arith.constant 0 : index
    %63 = vector.load %arg14[%c0_51, %c0_52] : memref<32x2xf32, #tpu.memory_space<vmem>>, vector<32x2xf32>
    %c0_53 = arith.constant 0 : index
    %c0_54 = arith.constant 0 : index
    %64 = vector.load %arg13[%c0_53, %c0_54] : memref<32x2xf32, #tpu.memory_space<vmem>>, vector<32x2xf32>
    tpu.vector_store %arg13[%c0_53, %c0_54], %63 {strides = array<i32>} : memref<32x2xf32, #tpu.memory_space<vmem>>, vector<32x2xf32>,
    return
  }
  func.func @transform_0(%arg0: i32) -> (i32, i32) {
    %c0_i32 = arith.constant 0 : i32
    %c0_i32_0 = arith.constant 0 : i32
    %c0_i32_1 = arith.constant 0 : i32
    return %c0_i32, %c0_i32_0 : i32, i32
  }
  func.func @transform_1(%arg0: i32) -> (i32, i32) {
    %c0_i32 = arith.constant 0 : i32
    %c0_i32_0 = arith.constant 0 : i32
    %c0_i32_1 = arith.constant 0 : i32
    return %c0_i32, %c0_i32_0 : i32, i32
  }
  func.func @transform_2(%arg0: i32) -> (i32, i32) {
    %c0_i32 = arith.constant 0 : i32
    %c0_i32_0 = arith.constant 0 : i32
    %c0_i32_1 = arith.constant 0 : i32
    return %c0_i32, %c0_i32_0 : i32, i32
  }
  func.func @transform_3(%arg0: i32) -> (i32, i32) {
    %c0_i32 = arith.constant 0 : i32
    %c0_i32_0 = arith.constant 0 : i32
    %c0_i32_1 = arith.constant 0 : i32
    return %c0_i32, %c0_i32_0 : i32, i32
  }
  func.func @transform_4(%arg0: i32) -> (i32, i32) {
    %c0_i32 = arith.constant 0 : i32
    %c0_i32_0 = arith.constant 0 : i32
    %c0_i32_1 = arith.constant 0 : i32
    return %c0_i32, %c0_i32_0 : i32, i32
  }
  func.func @transform_5(%arg0: i32) -> (i32, i32) {
    %c0_i32 = arith.constant 0 : i32
    %c0_i32_0 = arith.constant 0 : i32
    %c0_i32_1 = arith.constant 0 : i32
    return %c0_i32, %c0_i32_0 : i32, i32
  }
  func.func @transform_6(%arg0: i32) -> (i32, i32, i32) {
    %c0_i32 = arith.constant 0 : i32
    %c0_i32_0 = arith.constant 0 : i32
    %c0_i32_1 = arith.constant 0 : i32
    %c0_i32_2 = arith.constant 0 : i32
    return %c0_i32, %c0_i32_0, %c0_i32_1 : i32, i32, i32
  }
  func.func @transform_7(%arg0: i32) -> (i32, i32) {
    %c0_i32 = arith.constant 0 : i32
    %c0_i32_0 = arith.constant 0 : i32
    %c0_i32_1 = arith.constant 0 : i32
    return %c0_i32, %c0_i32_0 : i32, i32
  }
  func.func @transform_8(%arg0: i32) -> (i32, i32) {
    %c0_i32 = arith.constant 0 : i32
    %c0_i32_0 = arith.constant 0 : i32
    %c0_i32_1 = arith.constant 0 : i32
    return %c0_i32, %c0_i32_0 : i32, i32
  }
  func.func @transform_9(%arg0: i32) -> (i32, i32) {
    %c0_i32 = arith.constant 0 : i32
    %c0_i32_0 = arith.constant 0 : i32
    %c0_i32_1 = arith.constant 0 : i32
    return %c0_i32, %c0_i32_0 : i32, i32
  }
  func.func @transform_10(%arg0: i32) -> (i32, i32) {
    %c0_i32 = arith.constant 0 : i32
    %c0_i32_0 = arith.constant 0 : i32
    %c0_i32_1 = arith.constant 0 : i32
    return %c0_i32, %c0_i32_0 : i32, i32
  }
  func.func @transform_11(%arg0: i32) -> (i32, i32, i32) {
    %c0_i32 = arith.constant 0 : i32
    %c0_i32_0 = arith.constant 0 : i32
    %c0_i32_1 = arith.constant 0 : i32
    %c0_i32_2 = arith.constant 0 : i32
    return %c0_i32, %c0_i32_0, %c0_i32_1 : i32, i32, i32
  }
  func.func @transform_12(%arg0: i32) -> (i32, i32) {
    %c0_i32 = arith.constant 0 : i32
    %c0_i32_0 = arith.constant 0 : i32
    %c0_i32_1 = arith.constant 0 : i32
    return %c0_i32, %c0_i32_0 : i32, i32
  }
}

</mosaic_0001>

<llo_original>
// kernel: densenet_forward.5
$region0: #{densenet_forward.5}
  #allocation0 [shape = 'u32[]', space=smem, size = 0x4, offset = 0x4, fixed_abs, tag = 'smem constant byte address 0x4 - core index']
  #allocation1 [shape = 'u32[72,128]{1,0:T(1,128)}', space=vmem, size = 0x9000, scoped, tag = 'internal scratch']
  %s0 = inlined_call_operand.vmem [shape: bf16[16,147], index: 0, kind: input, shape index: {}]
  %s1 = inlined_call_operand.vmem [shape: bf16[147,512], index: 1, kind: input, shape index: {}]
  %s2 = inlined_call_operand.vmem [shape: f32[16,1], index: 2, kind: input, shape index: {}]
  %s3 = inlined_call_operand.vmem [shape: f32[16,512], index: 3, kind: output, shape index: {}]
  %s4 = sld [smem:[#allocation0]]
  $region22: #{densenet_forward.5} parent=0
    _
  %s6 = ssub.s32 1, %s4
  %s7 = scalar_select 0, %s6, %s4
  // Predicated region
  $region2: #{densenet_forward.5} parent=0 // pred_check
    _
  $region3: #{densenet_forward.5} parent=0 // pred_check_branch
    %9 = sbr.rel (0) target = $region5
  $region4: #{densenet_forward.5} parent=0 // pred_region
    _
  $region5: #{densenet_forward.5} parent=0 // pred_fallthru
    _
  // Predicated region
  $region6: #{densenet_forward.5} parent=0 // pred_check
    _
  $region7: #{densenet_forward.5} parent=0 // pred_check_branch
    %11 = sbr.rel (0) target = $region9
  $region8: #{densenet_forward.5} parent=0 // pred_region
    _
  $region9: #{densenet_forward.5} parent=0 // pred_fallthru
    _
  // Predicated region
  $region10: #{densenet_forward.5} parent=0 // pred_check
    _
  $region11: #{densenet_forward.5} parent=0 // pred_check_branch
    %13 = sbr.rel (0) target = $region13
  $region12: #{densenet_forward.5} parent=0 // pred_region
    _
  $region13: #{densenet_forward.5} parent=0 // pred_fallthru
    _
  %v15 = vld [vmem:[%s0] sm:$0xff]
  %v16 = vld [vmem:[%s0 + $0x8] sm:$0xff]
  %v17 = vld [vmem:[%s1] sm:$0xff]
  %v18 = vld [vmem:[%s1 + $0x8] sm:$0xff]
  %v19 = vld [vmem:[%s1 + $0x10] sm:$0xff]
  %v20 = vld [vmem:[%s1 + $0x18] sm:$0xff]
  %v21 = vld [vmem:[%s1 + $0x20] sm:$0xff]
  %v22 = vld [vmem:[%s1 + $0x28] sm:$0xff]
  %v23 = vld [vmem:[%s1 + $0x30] sm:$0xff]
  %v24 = vld [vmem:[%s1 + $0x38] sm:$0xff]
  %v25 = vld [vmem:[%s1 + $0x40] sm:$0xff]
  %v26 = vld [vmem:[%s1 + $0x48] sm:$0xff]
  %v27 = vld [vmem:[%s1 + $0x50] sm:$0xff]
  %v28 = vld [vmem:[%s1 + $0x58] sm:$0xff]
  %v29 = vld [vmem:[%s1 + $0x60] sm:$0xff]
  %v30 = vld [vmem:[%s1 + $0x68] sm:$0xff]
  %v31 = vld [vmem:[%s1 + $0x70] sm:$0xff]
  %v32 = vld [vmem:[%s1 + $0x78] sm:$0xff]
  %v33 = vld [vmem:[%s1 + $0x80] sm:$0xff]
  %v34 = vld [vmem:[%s1 + $0x88] sm:$0xff]
  %v35 = vld [vmem:[%s1 + $0x90] sm:$0xff]
  %v36 = vld [vmem:[%s1 + $0x98] sm:$0xff]
  %v37 = vld [vmem:[%s1 + $0xa0] sm:$0xff]
  %v38 = vld [vmem:[%s1 + $0xa8] sm:$0xff]
  %v39 = vld [vmem:[%s1 + $0xb0] sm:$0xff]
  %v40 = vld [vmem:[%s1 + $0xb8] sm:$0xff]
  %v41 = vld [vmem:[%s1 + $0xc0] sm:$0xff]
  %v42 = vld [vmem:[%s1 + $0xc8] sm:$0xff]
  %v43 = vld [vmem:[%s1 + $0xd0] sm:$0xff]
  %v44 = vld [vmem:[%s1 + $0xd8] sm:$0xff]
  %v45 = vld [vmem:[%s1 + $0xe0] sm:$0xff]
  %v46 = vld [vmem:[%s1 + $0xe8] sm:$0xff]
  %v47 = vld [vmem:[%s1 + $0xf0] sm:$0xff]
  %v48 = vld [vmem:[%s1 + $0xf8] sm:$0xff]
  %v49 = vld [vmem:[%s1 + $0x100] sm:$0xff]
  %v50 = vld [vmem:[%s1 + $0x108] sm:$0xff]
  %v51 = vld [vmem:[%s1 + $0x110] sm:$0xff]
  %v52 = vld [vmem:[%s1 + $0x118] sm:$0xff]
  %v53 = vld [vmem:[%s1 + $0x120] sm:$0x33]
  %v54 = vld [vmem:[%s1 + $0x128] sm:$0x33]
  %v55 = vld [vmem:[%s2] sm:$0xff]
  %v56 = vld [vmem:[%s2 + $0x8] sm:$0xff]
  %58 = vset.pattern.permute.xlu0 0
  %59 = vperm.xlu0 %58, %v55
  %v60 = vpop.permute.xlu0 %59
  %63 = vset.pattern.permute.xlu0 0
  %64 = vperm.xlu0 %63, %v56
  %v65 = vpop.permute.xlu0 %64
  %v69 = vunpack.c.l.b16 %v15
  %v70 = vunpack.c.h.b16 %v15
  %v71 = vunpack.c.l.b16 %v16
  %v72 = vunpack.c.h.b16 %v16
  %v73 = vpack.c.b16 %v71, %v69
  %v74 = vpack.c.b16 %v72, %v70
  %v114 = vunpack.c.l.b16 %v17
  %v115 = vunpack.c.h.b16 %v17
  %v116 = vunpack.c.l.b16 %v18
  %v117 = vunpack.c.h.b16 %v18
  %v118 = vunpack.c.l.b16 %v19
  %v119 = vunpack.c.h.b16 %v19
  %v120 = vunpack.c.l.b16 %v20
  %v121 = vunpack.c.h.b16 %v20
  %v122 = vunpack.c.l.b16 %v21
  %v123 = vunpack.c.h.b16 %v21
  %v124 = vunpack.c.l.b16 %v22
  %v125 = vunpack.c.h.b16 %v22
  %v126 = vunpack.c.l.b16 %v23
  %v127 = vunpack.c.h.b16 %v23
  %v128 = vunpack.c.l.b16 %v24
  %v129 = vunpack.c.h.b16 %v24
  %v130 = vunpack.c.l.b16 %v25
  %v131 = vunpack.c.h.b16 %v25
  %v132 = vunpack.c.l.b16 %v26
  %v133 = vunpack.c.h.b16 %v26
  %v134 = vunpack.c.l.b16 %v27
  %v135 = vunpack.c.h.b16 %v27
  %v136 = vunpack.c.l.b16 %v28
  %v137 = vunpack.c.h.b16 %v28
  %v138 = vunpack.c.l.b16 %v29
  %v139 = vunpack.c.h.b16 %v29
  %v140 = vunpack.c.l.b16 %v30
  %v141 = vunpack.c.h.b16 %v30
  %v142 = vunpack.c.l.b16 %v31
  %v143 = vunpack.c.h.b16 %v31
  %v144 = vunpack.c.l.b16 %v32
  %v145 = vunpack.c.h.b16 %v32
  %v146 = vunpack.c.l.b16 %v33
  %v147 = vunpack.c.h.b16 %v33
  %v148 = vunpack.c.l.b16 %v34
  %v149 = vunpack.c.h.b16 %v34
  %v150 = vunpack.c.l.b16 %v35
  %v151 = vunpack.c.h.b16 %v35
  %v152 = vunpack.c.l.b16 %v36
  %v153 = vunpack.c.h.b16 %v36
  %v154 = vunpack.c.l.b16 %v37
  %v155 = vunpack.c.h.b16 %v37
  %v156 = vunpack.c.l.b16 %v38
  %v157 = vunpack.c.h.b16 %v38
  %v158 = vunpack.c.l.b16 %v39
  %v159 = vunpack.c.h.b16 %v39
  %v160 = vunpack.c.l.b16 %v40
  %v161 = vunpack.c.h.b16 %v40
  %v162 = vunpack.c.l.b16 %v41
  %v163 = vunpack.c.h.b16 %v41
  %v164 = vunpack.c.l.b16 %v42
  %v165 = vunpack.c.h.b16 %v42
  %v166 = vunpack.c.l.b16 %v43
  %v167 = vunpack.c.h.b16 %v43
  %v168 = vunpack.c.l.b16 %v44
  %v169 = vunpack.c.h.b16 %v44
  %v170 = vunpack.c.l.b16 %v45
  %v171 = vunpack.c.h.b16 %v45
  %v172 = vunpack.c.l.b16 %v46
  %v173 = vunpack.c.h.b16 %v46
  %v174 = vunpack.c.l.b16 %v47
  %v175 = vunpack.c.h.b16 %v47
  %v176 = vunpack.c.l.b16 %v48
  %v177 = vunpack.c.h.b16 %v48
  %v178 = vunpack.c.l.b16 %v49
  %v179 = vunpack.c.h.b16 %v49
  %v180 = vunpack.c.l.b16 %v50
  %v181 = vunpack.c.h.b16 %v50
  %v182 = vunpack.c.l.b16 %v51
  %v183 = vunpack.c.h.b16 %v51
  %v184 = vunpack.c.l.b16 %v52
  %v185 = vunpack.c.h.b16 %v52
  %v186 = vunpack.c.l.b16 %v53
  %v187 = vunpack.c.h.b16 %v53
  %v188 = vunpack.c.l.b16 %v54
  %v189 = vunpack.c.h.b16 %v54
  %v190 = vpack.c.b16 %v118, %v114
  %v191 = vpack.c.b16 %v119, %v115
  %v192 = vpack.c.b16 %v120, %v116
  %v193 = vpack.c.b16 %v121, %v117
  %v194 = vpack.c.b16 %v126, %v122
  %v195 = vpack.c.b16 %v127, %v123
  %v196 = vpack.c.b16 %v128, %v124
  %v197 = vpack.c.b16 %v129, %v125
  %v198 = vpack.c.b16 %v134, %v130
  %v199 = vpack.c.b16 %v135, %v131
  %v200 = vpack.c.b16 %v136, %v132
  %v201 = vpack.c.b16 %v137, %v133
  %v202 = vpack.c.b16 %v142, %v138
  %v203 = vpack.c.b16 %v143, %v139
  %v204 = vpack.c.b16 %v144, %v140
  %v205 = vpack.c.b16 %v145, %v141
  %v206 = vpack.c.b16 %v150, %v146
  %v207 = vpack.c.b16 %v151, %v147
  %v208 = vpack.c.b16 %v152, %v148
  %v209 = vpack.c.b16 %v153, %v149
  %v210 = vpack.c.b16 %v158, %v154
  %v211 = vpack.c.b16 %v159, %v155
  %v212 = vpack.c.b16 %v160, %v156
  %v213 = vpack.c.b16 %v161, %v157
  %v214 = vpack.c.b16 %v166, %v162
  %v215 = vpack.c.b16 %v167, %v163
  %v216 = vpack.c.b16 %v168, %v164
  %v217 = vpack.c.b16 %v169, %v165
  %v218 = vpack.c.b16 %v174, %v170
  %v219 = vpack.c.b16 %v175, %v171
  %v220 = vpack.c.b16 %v176, %v172
  %v221 = vpack.c.b16 %v177, %v173
  %v222 = vpack.c.b16 %v182, %v178
  %v223 = vpack.c.b16 %v183, %v179
  %v224 = vpack.c.b16 %v184, %v180
  %v225 = vpack.c.b16 %v185, %v181
  %v226 = vpack.c.b16 %v186, %v186
  %v227 = vpack.c.b16 %v187, %v187
  %v228 = vpack.c.b16 %v188, %v188
  %v229 = vpack.c.b16 %v189, %v189
  %vm266 = vcmask 154624
  %v268 = vsel %vm266, %v74, 0
  %vm270 = vcmask 1040384
  %vm271 = vcmask 1041408
  %v272 = vsel %vm270, 4294967295, 65535
  %v273 = vsel %vm271, %v272, 0
  %v275 = vand.u32 %v226, %v273
  %v278 = vand.u32 %v227, %v273
  %v281 = vand.u32 %v228, %v273
  %v284 = vand.u32 %v229, %v273
  %286 = vmatpush.bf16.msra.mxu0 %v218
  %287 = vmatpush.bf16.msra.mxu0 %v214
  %288 = vmatpush.bf16.msra.mxu0 %v210
  %289 = vmatpush.bf16.msra.mxu0 %v206
  %290 = vmatpush.bf16.msra.mxu0 %v202
  %291 = vmatpush.bf16.msra.mxu0 %v198
  %292 = vmatpush.bf16.msra.mxu0 %v194
  %293 = vmatpush.bf16.msra.mxu0 %v190
  %294 = vmatmul.bf16.gmra.mxu0 %v73
  %v295 = vpop.f32.mrf.mxu0
  %v296 = vadd.f32 %v60, %v295
  %v297 = vpop.f32.mrf.mxu0
  %v298 = vadd.f32 %v65, %v297
  %299 = vdwg.mxu0
  %300 = vmatpush.bf16.msra.mxu0 0
  %301 = vmatpush.bf16.msra.mxu0 0
  %302 = vmatpush.bf16.msra.mxu0 0
  %303 = vmatpush.bf16.msra.mxu0 0
  %304 = vmatpush.bf16.msra.mxu0 0
  %305 = vmatpush.bf16.msra.mxu0 0
  %306 = vmatpush.bf16.msra.mxu0 %v275
  %307 = vmatpush.bf16.msra.mxu0 %v222
  %308 = vmatmul.bf16.gmra.mxu0 %v268
  %v309 = vpop.f32.mrf.mxu0
  %v310 = vadd.f32 %v296, %v309
  %v311 = vpop.f32.mrf.mxu0
  %v312 = vadd.f32 %v298, %v311
  %313 = vdwg.mxu0
  %314 = vmatpush.bf16.msra.mxu0 %v219
  %315 = vmatpush.bf16.msra.mxu0 %v215
  %316 = vmatpush.bf16.msra.mxu0 %v211
  %317 = vmatpush.bf16.msra.mxu0 %v207
  %318 = vmatpush.bf16.msra.mxu0 %v203
  %319 = vmatpush.bf16.msra.mxu0 %v199
  %320 = vmatpush.bf16.msra.mxu0 %v195
  %321 = vmatpush.bf16.msra.mxu0 %v191
  %322 = vmatmul.bf16.gmra.mxu0 %v73
  %v323 = vpop.f32.mrf.mxu0
  %v324 = vadd.f32 %v60, %v323
  %v325 = vpop.f32.mrf.mxu0
  %v326 = vadd.f32 %v65, %v325
  %327 = vdwg.mxu0
  %328 = vmatpush.bf16.msra.mxu0 0
  %329 = vmatpush.bf16.msra.mxu0 0
  %330 = vmatpush.bf16.msra.mxu0 0
  %331 = vmatpush.bf16.msra.mxu0 0
  %332 = vmatpush.bf16.msra.mxu0 0
  %333 = vmatpush.bf16.msra.mxu0 0
  %334 = vmatpush.bf16.msra.mxu0 %v278
  %335 = vmatpush.bf16.msra.mxu0 %v223
  %336 = vmatmul.bf16.gmra.mxu0 %v268
  %v337 = vpop.f32.mrf.mxu0
  %v338 = vadd.f32 %v324, %v337
  %v339 = vpop.f32.mrf.mxu0
  %v340 = vadd.f32 %v326, %v339
  %341 = vdwg.mxu0
  %342 = vmatpush.bf16.msra.mxu0 %v220
  %343 = vmatpush.bf16.msra.mxu0 %v216
  %344 = vmatpush.bf16.msra.mxu0 %v212
  %345 = vmatpush.bf16.msra.mxu0 %v208
  %346 = vmatpush.bf16.msra.mxu0 %v204
  %347 = vmatpush.bf16.msra.mxu0 %v200
  %348 = vmatpush.bf16.msra.mxu0 %v196
  %349 = vmatpush.bf16.msra.mxu0 %v192
  %350 = vmatmul.bf16.gmra.mxu0 %v73
  %v351 = vpop.f32.mrf.mxu0
  %v352 = vadd.f32 %v60, %v351
  %v353 = vpop.f32.mrf.mxu0
  %v354 = vadd.f32 %v65, %v353
  %355 = vdwg.mxu0
  %356 = vmatpush.bf16.msra.mxu0 0
  %357 = vmatpush.bf16.msra.mxu0 0
  %358 = vmatpush.bf16.msra.mxu0 0
  %359 = vmatpush.bf16.msra.mxu0 0
  %360 = vmatpush.bf16.msra.mxu0 0
  %361 = vmatpush.bf16.msra.mxu0 0
  %362 = vmatpush.bf16.msra.mxu0 %v281
  %363 = vmatpush.bf16.msra.mxu0 %v224
  %364 = vmatmul.bf16.gmra.mxu0 %v268
  %v365 = vpop.f32.mrf.mxu0
  %v366 = vadd.f32 %v352, %v365
  %v367 = vpop.f32.mrf.mxu0
  %v368 = vadd.f32 %v354, %v367
  %369 = vdwg.mxu0
  %370 = vmatpush.bf16.msra.mxu0 %v221
  %371 = vmatpush.bf16.msra.mxu0 %v217
  %372 = vmatpush.bf16.msra.mxu0 %v213
  %373 = vmatpush.bf16.msra.mxu0 %v209
  %374 = vmatpush.bf16.msra.mxu0 %v205
  %375 = vmatpush.bf16.msra.mxu0 %v201
  %376 = vmatpush.bf16.msra.mxu0 %v197
  %377 = vmatpush.bf16.msra.mxu0 %v193
  %378 = vmatmul.bf16.gmra.mxu0 %v73
  %v379 = vpop.f32.mrf.mxu0
  %v380 = vadd.f32 %v60, %v379
  %v381 = vpop.f32.mrf.mxu0
  %v382 = vadd.f32 %v65, %v381
  %383 = vdwg.mxu0
  %384 = vmatpush.bf16.msra.mxu0 0
  %385 = vmatpush.bf16.msra.mxu0 0
  %386 = vmatpush.bf16.msra.mxu0 0
  %387 = vmatpush.bf16.msra.mxu0 0
  %388 = vmatpush.bf16.msra.mxu0 0
  %389 = vmatpush.bf16.msra.mxu0 0
  %390 = vmatpush.bf16.msra.mxu0 %v284
  %391 = vmatpush.bf16.msra.mxu0 %v225
  %392 = vmatmul.bf16.gmra.mxu0 %v268
  %v393 = vpop.f32.mrf.mxu0
  %v394 = vadd.f32 %v380, %v393
  %v395 = vpop.f32.mrf.mxu0
  %v396 = vadd.f32 %v382, %v395
  %397 = vdwg.mxu0
  %v398 = vmax.f32 %v310, 0.0
  %v399 = vmax.f32 %v338, 0.0
  %v400 = vmax.f32 %v366, 0.0
  %v401 = vmax.f32 %v394, 0.0
  %v402 = vmax.f32 %v312, 0.0
  %v403 = vmax.f32 %v340, 0.0
  %v404 = vmax.f32 %v368, 0.0
  %v405 = vmax.f32 %v396, 0.0
  %406 = vst [vmem:[%s3] sm:$0xff] %v398
  %407 = vst [vmem:[%s3 + $0x8] sm:$0xff] %v399
  %408 = vst [vmem:[%s3 + $0x10] sm:$0xff] %v400
  %409 = vst [vmem:[%s3 + $0x18] sm:$0xff] %v401
  %410 = vst [vmem:[%s3 + $0x20] sm:$0xff] %v402
  %411 = vst [vmem:[%s3 + $0x28] sm:$0xff] %v403
  %412 = vst [vmem:[%s3 + $0x30] sm:$0xff] %v404
  %413 = vst [vmem:[%s3 + $0x38] sm:$0xff] %v405
  // Predicated region
  $region14: #{densenet_forward.5} parent=0 // pred_check
    _
  $region15: #{densenet_forward.5} parent=0 // pred_check_branch
    %415 = sbr.rel (0) target = $region17
  $region16: #{densenet_forward.5} parent=0 // pred_region
    _
  $region17: #{densenet_forward.5} parent=0 // pred_fallthru
    _
  // Predicated region
  $region18: #{densenet_forward.5} parent=0 // pred_check
    _
  $region19: #{densenet_forward.5} parent=0 // pred_check_branch
    %417 = sbr.rel (0) target = $region21
  $region20: #{densenet_forward.5} parent=0 // pred_region
    _
  $region21: #{densenet_forward.5} parent=0 // pred_fallthru
    _

// kernel: densenet_forward.6
$region0: #{densenet_forward.6}
  #allocation0 [shape = 'u32[]', space=smem, size = 0x4, offset = 0x4, fixed_abs, tag = 'smem constant byte address 0x4 - core index']
  #allocation1 [shape = 'u32[72,128]{1,0:T(1,128)}', space=vmem, size = 0x9000, scoped, tag = 'internal scratch']
  #allocation2 [shape = 'f32[32,128]{1,0:T(8,128)}', space=vmem, size = 0x4000, scoped, tag = 'scratch operand']
  #allocation3 [shape = 'bf16[16,265]{1,0:T(8,128)(2,1)}', space=vmem, size = 0x3000, scoped, tag = 'scratch operand']
  %s0 = inlined_call_operand.vmem [shape: f32[16,128], index: 0, kind: input, shape index: {}]
  %s1 = inlined_call_operand.vmem [shape: f32[9,128], index: 1, kind: input, shape index: {}]
  %s2 = inlined_call_operand.vmem [shape: f32[16,1], index: 2, kind: input, shape index: {}]
  %s3 = inlined_call_operand.vmem [shape: f32[16,1], index: 3, kind: input, shape index: {}]
  %s4 = inlined_call_operand.vmem [shape: bf16[16,16], index: 4, kind: input, shape index: {}]
  %s5 = inlined_call_operand.vmem [shape: f32[16,1], index: 5, kind: input, shape index: {}]
  %s6 = inlined_call_operand.vmem [shape: bf16[9,8,16], index: 6, kind: input, shape index: {}]
  %s7 = inlined_call_operand.vmem [shape: f32[24,1], index: 7, kind: input, shape index: {}]
  %s8 = inlined_call_operand.vmem [shape: f32[24,1], index: 8, kind: input, shape index: {}]
  %s9 = inlined_call_operand.vmem [shape: bf16[16,24], index: 9, kind: input, shape index: {}]
  %s10 = inlined_call_operand.vmem [shape: f32[16,1], index: 10, kind: input, shape index: {}]
  %s11 = inlined_call_operand.vmem [shape: bf16[9,8,16], index: 11, kind: input, shape index: {}]
  %s12 = inlined_call_operand.vmem [shape: f32[32,1], index: 12, kind: input, shape index: {}]
  %s13 = inlined_call_operand.vmem [shape: f32[32,1], index: 13, kind: input, shape index: {}]
  %s14 = inlined_call_operand.vmem [shape: bf16[16,32], index: 14, kind: input, shape index: {}]
  %s15 = inlined_call_operand.vmem [shape: bf16[128,32], index: 15, kind: input, shape index: {}]
  %s16 = inlined_call_operand.vmem [shape: f32[16,32], index: 16, kind: output, shape index: {}]
  %s17 = sld [smem:[#allocation0]]
  $region74: #{densenet_forward.6} parent=0
    _
  %s19 = ssub.s32 1, %s17
  %s20 = scalar_select 0, %s19, %s17
  // Predicated region
  $region2: #{densenet_forward.6} parent=0 // pred_check
    _
  $region3: #{densenet_forward.6} parent=0 // pred_check_branch
    %22 = sbr.rel (0) target = $region5
  $region4: #{densenet_forward.6} parent=0 // pred_region
    _
  $region5: #{densenet_forward.6} parent=0 // pred_fallthru
    _
  // Predicated region
  $region6: #{densenet_forward.6} parent=0 // pred_check
    _
  $region7: #{densenet_forward.6} parent=0 // pred_check_branch
    %24 = sbr.rel (0) target = $region9
  $region8: #{densenet_forward.6} parent=0 // pred_region
    _
  $region9: #{densenet_forward.6} parent=0 // pred_fallthru
    _
  // Predicated region
  $region10: #{densenet_forward.6} parent=0 // pred_check
    _
  $region11: #{densenet_forward.6} parent=0 // pred_check_branch
    %26 = sbr.rel (0) target = $region13
  $region12: #{densenet_forward.6} parent=0 // pred_region
    _
  $region13: #{densenet_forward.6} parent=0 // pred_fallthru
    _
  // Predicated region
  $region14: #{densenet_forward.6} parent=0 // pred_check
    _
  $region15: #{densenet_forward.6} parent=0 // pred_check_branch
    %28 = sbr.rel (0) target = $region17
  $region16: #{densenet_forward.6} parent=0 // pred_region
    _
  $region17: #{densenet_forward.6} parent=0 // pred_fallthru
    _
  // Predicated region
  $region18: #{densenet_forward.6} parent=0 // pred_check
    _
  $region19: #{densenet_forward.6} parent=0 // pred_check_branch
    %30 = sbr.rel (0) target = $region21
  $region20: #{densenet_forward.6} parent=0 // pred_region
    _
  $region21: #{densenet_forward.6} parent=0 // pred_fallthru
    _
  // Predicated region
  $region22: #{densenet_forward.6} parent=0 // pred_check
    _
  $region23: #{densenet_forward.6} parent=0 // pred_check_branch
    %32 = sbr.rel (0) target = $region25
  $region24: #{densenet_forward.6} parent=0 // pred_region
    _
  $region25: #{densenet_forward.6} parent=0 // pred_fallthru
    _
  // Predicated region
  $region26: #{densenet_forward.6} parent=0 // pred_check
    _
  $region27: #{densenet_forward.6} parent=0 // pred_check_branch
    %34 = sbr.rel (0) target = $region29
  $region28: #{densenet_forward.6} parent=0 // pred_region
    _
  $region29: #{densenet_forward.6} parent=0 // pred_fallthru
    _
  // Predicated region
  $region30: #{densenet_forward.6} parent=0 // pred_check
    _
  $region31: #{densenet_forward.6} parent=0 // pred_check_branch
    %36 = sbr.rel (0) target = $region33
  $region32: #{densenet_forward.6} parent=0 // pred_region
    _
  $region33: #{densenet_forward.6} parent=0 // pred_fallthru
    _
  // Predicated region
  $region34: #{densenet_forward.6} parent=0 // pred_check
    _
  $region35: #{densenet_forward.6} parent=0 // pred_check_branch
    %38 = sbr.rel (0) target = $region37
  $region36: #{densenet_forward.6} parent=0 // pred_region
    _
  $region37: #{densenet_forward.6} parent=0 // pred_fallthru
    _
  // Predicated region
  $region38: #{densenet_forward.6} parent=0 // pred_check
    _
  $region39: #{densenet_forward.6} parent=0 // pred_check_branch
    %40 = sbr.rel (0) target = $region41
  $region40: #{densenet_forward.6} parent=0 // pred_region
    _
  $region41: #{densenet_forward.6} parent=0 // pred_fallthru
    _
  // Predicated region
  $region42: #{densenet_forward.6} parent=0 // pred_check
    _
  $region43: #{densenet_forward.6} parent=0 // pred_check_branch
    %42 = sbr.rel (0) target = $region45
  $region44: #{densenet_forward.6} parent=0 // pred_region
    _
  $region45: #{densenet_forward.6} parent=0 // pred_fallthru
    _
  // Predicated region
  $region46: #{densenet_forward.6} parent=0 // pred_check
    _
  $region47: #{densenet_forward.6} parent=0 // pred_check_branch
    %44 = sbr.rel (0) target = $region49
  $region48: #{densenet_forward.6} parent=0 // pred_region
    _
  $region49: #{densenet_forward.6} parent=0 // pred_fallthru
    _
  // Predicated region
  $region50: #{densenet_forward.6} parent=0 // pred_check
    _
  $region51: #{densenet_forward.6} parent=0 // pred_check_branch
    %46 = sbr.rel (0) target = $region53
  $region52: #{densenet_forward.6} parent=0 // pred_region
    _
  $region53: #{densenet_forward.6} parent=0 // pred_fallthru
    _
  // Predicated region
  $region54: #{densenet_forward.6} parent=0 // pred_check
    _
  $region55: #{densenet_forward.6} parent=0 // pred_check_branch
    %48 = sbr.rel (0) target = $region57
  $region56: #{densenet_forward.6} parent=0 // pred_region
    _
  $region57: #{densenet_forward.6} parent=0 // pred_fallthru
    _
  // Predicated region
  $region58: #{densenet_forward.6} parent=0 // pred_check
    _
  $region59: #{densenet_forward.6} parent=0 // pred_check_branch
    %50 = sbr.rel (0) target = $region61
  $region60: #{densenet_forward.6} parent=0 // pred_region
    _
  $region61: #{densenet_forward.6} parent=0 // pred_fallthru
    _
  // Predicated region
  $region62: #{densenet_forward.6} parent=0 // pred_check
    _
  $region63: #{densenet_forward.6} parent=0 // pred_check_branch
    %52 = sbr.rel (0) target = $region65
  $region64: #{densenet_forward.6} parent=0 // pred_region
    _
  $region65: #{densenet_forward.6} parent=0 // pred_fallthru
    _
  %54 = vst [vmem:[#allocation3] sm:$0xff] 0
  %vm55 = vcmask 68608
  %56 = vst.msk [vmem:[#allocation3 + $0x8] sm:$0xf] %vm55, 0
  %57 = vst [vmem:[#allocation3 + $0xc] sm:$0xff] 0
  %58 = vst.msk [vmem:[#allocation3 + $0x14] sm:$0xf] %vm55, 0
  %v59 = vld [vmem:[%s0] sm:$0xff]
  %v60 = vld [vmem:[%s0 + $0x8] sm:$0xff]
  %61 = vst [vmem:[#allocation2] sm:$0xff] %v59
  %62 = vst [vmem:[#allocation2 + $0x8] sm:$0xff] %v60
  %v63 = vld [vmem:[%s1] sm:$0xff]
  %v64 = vld [vmem:[%s1 + $0x8] sm:$0x1]
  %v65 = vld [vmem:[#allocation2] sm:$0xff]
  %v66 = vld [vmem:[#allocation2 + $0x8] sm:$0xff]
  %v67 = vld [vmem:[%s2] sm:$0xff]
  %v68 = vld [vmem:[%s2 + $0x8] sm:$0xff]
  %70 = vset.pattern.permute.xlu0 0
  %71 = vperm.xlu0 %70, %v67
  %v72 = vpop.permute.xlu0 %71
  %75 = vset.pattern.permute.xlu0 0
  %76 = vperm.xlu0 %75, %v68
  %v77 = vpop.permute.xlu0 %76
  %v79 = vmul.f32 %v65, %v72
  %v80 = vmul.f32 %v66, %v77
  %v81 = vld [vmem:[%s3] sm:$0xff]
  %v82 = vld [vmem:[%s3 + $0x8] sm:$0xff]
  %84 = vset.pattern.permute.xlu0 0
  %85 = vperm.xlu0 %84, %v81
  %v86 = vpop.permute.xlu0 %85
  %89 = vset.pattern.permute.xlu0 0
  %90 = vperm.xlu0 %89, %v82
  %v91 = vpop.permute.xlu0 %90
  %v93 = vadd.f32 %v79, %v86
  %v94 = vadd.f32 %v80, %v91
  %v95 = vmax.f32 %v93, 0.0
  %v96 = vmax.f32 %v94, 0.0
  %v97 = vld [vmem:[%s4] sm:$0xf]
  %v98 = vld [vmem:[%s4 + $0x4] sm:$0xf]
  %v99 = vpack.c.bf16 %v96, %v95
  %v100 = vld [vmem:[%s5] sm:$0xff]
  %v101 = vld [vmem:[%s5 + $0x8] sm:$0xff]
  %103 = vset.pattern.permute.xlu0 0
  %104 = vperm.xlu0 %103, %v100
  %v105 = vpop.permute.xlu0 %104
  %108 = vset.pattern.permute.xlu0 0
  %109 = vperm.xlu0 %108, %v101
  %v110 = vpop.permute.xlu0 %109
  %v114 = vunpack.c.l.b16 %v97
  %v115 = vunpack.c.l.b16 %v98
  %v116 = vpack.c.b16 %v115, %v114
  %vm117 = vcmask 130048
  %v119 = vsel %vm117, %v116, 0
  %121 = vmatpush.bf16.msra.mxu0 0
  %122 = vmatpush.bf16.msra.mxu0 0
  %123 = vmatpush.bf16.msra.mxu0 0
  %124 = vmatpush.bf16.msra.mxu0 0
  %125 = vmatpush.bf16.msra.mxu0 0
  %126 = vmatpush.bf16.msra.mxu0 0
  %127 = vmatpush.bf16.msra.mxu0 0
  %128 = vmatpush.bf16.msra.mxu0 %v99
  %129 = vmatmul.bf16.gmra.mxu0 %v119
  %v130 = vpop.f32.mrf.mxu0
  %v131 = vadd.f32 %v105, %v130
  %v132 = vpop.f32.mrf.mxu0
  %v133 = vadd.f32 %v110, %v132
  %134 = vdwg.mxu0
  %v135 = vmax.f32 %v131, 0.0
  %v136 = vmax.f32 %v133, 0.0
  %v137 = vpack.c.bf16 %v135, %v135
  %v138 = vpack.c.bf16 %v136, %v136
  %139 = vst [vmem:[#allocation3 + $0x4] sm:$0xf] %v137
  %140 = vst [vmem:[#allocation3 + $0x10] sm:$0xf] %v138
  %v141 = vld [vmem:[#allocation3] sm:$0xff]
  %v142 = vld [vmem:[#allocation3 + $0xc] sm:$0xff]
  %v143 = vld [vmem:[%s6] sm:$0xf]
  %v146 = vunpack.c.l.b16 %v141
  %v147 = vunpack.c.h.b16 %v141
  %v148 = vunpack.c.l.b16 %v142
  %v149 = vunpack.c.h.b16 %v142
  %v150 = vpack.c.b16 %v148, %v146
  %v151 = vpack.c.b16 %v149, %v147
  %152 = vrot.lane.b32.xlu0 %v150, 9
  %v153 = vpop.permute.xlu0 %152
  %154 = vrot.lane.b32.xlu0 %v151, 9
  %v155 = vpop.permute.xlu0 %154
  %vm156 = vcmask 72704
  %v157 = vsel %vm156, %v153, %v155
  %v160 = vsel %vm117, %v143, 0
  %162 = vmatpush.bf16.msra.mxu0 0
  %163 = vmatpush.bf16.msra.mxu0 0
  %164 = vmatpush.bf16.msra.mxu0 0
  %165 = vmatpush.bf16.msra.mxu0 0
  %166 = vmatpush.bf16.msra.mxu0 0
  %167 = vmatpush.bf16.msra.mxu0 0
  %168 = vmatpush.bf16.msra.mxu0 0
  %169 = vmatpush.bf16.msra.mxu0 %v157
  %170 = vmatmul.bf16.gmra.mxu0 %v160
  %v171 = vpop.f32.mrf.mxu0
  %v172 = vadd.f32 0.0, %v171
  %v173 = vpop.f32.mrf.mxu0
  %174 = vdwg.mxu0
  %v175 = vperm.slane %v63, 0
  %v176 = vmul.f32 %v172, %v175
  %v177 = vadd.f32 %v176, 0.0
  %s178 = scalar_lea.vmem %s6, 4
  %v179 = vld [vmem:[%s178] sm:$0xf]
  %180 = vrot.lane.b32.xlu0 %v150, 8
  %v181 = vpop.permute.xlu0 %180
  %182 = vrot.lane.b32.xlu0 %v151, 8
  %v183 = vpop.permute.xlu0 %182
  %vm184 = vcmask 64512
  %v185 = vsel %vm184, %v181, %v183
  %v188 = vsel %vm117, %v179, 0
  %190 = vmatpush.bf16.msra.mxu0 0
  %191 = vmatpush.bf16.msra.mxu0 0
  %192 = vmatpush.bf16.msra.mxu0 0
  %193 = vmatpush.bf16.msra.mxu0 0
  %194 = vmatpush.bf16.msra.mxu0 0
  %195 = vmatpush.bf16.msra.mxu0 0
  %196 = vmatpush.bf16.msra.mxu0 0
  %197 = vmatpush.bf16.msra.mxu0 %v185
  %198 = vmatmul.bf16.gmra.mxu0 %v188
  %v199 = vpop.f32.mrf.mxu0
  %v200 = vadd.f32 0.0, %v199
  %v201 = vpop.f32.mrf.mxu0
  %202 = vdwg.mxu0
  %v203 = vperm.slane %v63, 1
  %v204 = vmul.f32 %v200, %v203
  %v205 = vadd.f32 %v177, %v204
  %s206 = scalar_lea.vmem %s6, 8
  %v207 = vld [vmem:[%s206] sm:$0xf]
  %208 = vrot.lane.b32.xlu0 %v150, 7
  %v209 = vpop.permute.xlu0 %208
  %210 = vrot.lane.b32.xlu0 %v151, 7
  %v211 = vpop.permute.xlu0 %210
  %vm212 = vcmask 56320
  %v213 = vsel %vm212, %v209, %v211
  %v216 = vsel %vm117, %v207, 0
  %218 = vmatpush.bf16.msra.mxu0 0
  %219 = vmatpush.bf16.msra.mxu0 0
  %220 = vmatpush.bf16.msra.mxu0 0
  %221 = vmatpush.bf16.msra.mxu0 0
  %222 = vmatpush.bf16.msra.mxu0 0
  %223 = vmatpush.bf16.msra.mxu0 0
  %224 = vmatpush.bf16.msra.mxu0 0
  %225 = vmatpush.bf16.msra.mxu0 %v213
  %226 = vmatmul.bf16.gmra.mxu0 %v216
  %v227 = vpop.f32.mrf.mxu0
  %v228 = vadd.f32 0.0, %v227
  %v229 = vpop.f32.mrf.mxu0
  %230 = vdwg.mxu0
  %v231 = vperm.slane %v63, 2
  %v232 = vmul.f32 %v228, %v231
  %v233 = vadd.f32 %v205, %v232
  %s234 = scalar_lea.vmem %s6, 12
  %v235 = vld [vmem:[%s234] sm:$0xf]
  %236 = vrot.lane.b32.xlu0 %v150, 1
  %v237 = vpop.permute.xlu0 %236
  %238 = vrot.lane.b32.xlu0 %v151, 1
  %v239 = vpop.permute.xlu0 %238
  %vm240 = vcmask 7168
  %v241 = vsel %vm240, %v237, %v239
  %v244 = vsel %vm117, %v235, 0
  %246 = vmatpush.bf16.msra.mxu0 0
  %247 = vmatpush.bf16.msra.mxu0 0
  %248 = vmatpush.bf16.msra.mxu0 0
  %249 = vmatpush.bf16.msra.mxu0 0
  %250 = vmatpush.bf16.msra.mxu0 0
  %251 = vmatpush.bf16.msra.mxu0 0
  %252 = vmatpush.bf16.msra.mxu0 0
  %253 = vmatpush.bf16.msra.mxu0 %v241
  %254 = vmatmul.bf16.gmra.mxu0 %v244
  %v255 = vpop.f32.mrf.mxu0
  %v256 = vadd.f32 0.0, %v255
  %v257 = vpop.f32.mrf.mxu0
  %258 = vdwg.mxu0
  %v259 = vperm.slane %v63, 3
  %v260 = vmul.f32 %v256, %v259
  %v261 = vadd.f32 %v233, %v260
  %v262 = vld [vmem:[#allocation3 + $0x4] sm:$0xf]
  %v263 = vld [vmem:[#allocation3 + $0x10] sm:$0xf]
  %s264 = scalar_lea.vmem %s6, 16
  %v265 = vld [vmem:[%s264] sm:$0xf]
  %v268 = vunpack.c.l.b16 %v262
  %v269 = vunpack.c.l.b16 %v263
  %v270 = vpack.c.b16 %v269, %v268
  %v273 = vsel %vm117, %v265, 0
  %275 = vmatpush.bf16.msra.mxu0 0
  %276 = vmatpush.bf16.msra.mxu0 0
  %277 = vmatpush.bf16.msra.mxu0 0
  %278 = vmatpush.bf16.msra.mxu0 0
  %279 = vmatpush.bf16.msra.mxu0 0
  %280 = vmatpush.bf16.msra.mxu0 0
  %281 = vmatpush.bf16.msra.mxu0 0
  %282 = vmatpush.bf16.msra.mxu0 %v270
  %283 = vmatmul.bf16.gmra.mxu0 %v273
  %v284 = vpop.f32.mrf.mxu0
  %v285 = vadd.f32 0.0, %v284
  %v286 = vpop.f32.mrf.mxu0
  %287 = vdwg.mxu0
  %v288 = vperm.slane %v63, 4
  %v289 = vmul.f32 %v285, %v288
  %v290 = vadd.f32 %v261, %v289
  %v291 = vld [vmem:[#allocation3 + $0x4] sm:$0xff]
  %v292 = vld [vmem:[#allocation3 + $0x10] sm:$0xff]
  %s293 = scalar_lea.vmem %s6, 20
  %v294 = vld [vmem:[%s293] sm:$0xf]
  %v297 = vunpack.c.l.b16 %v291
  %v298 = vunpack.c.h.b16 %v291
  %v299 = vunpack.c.l.b16 %v292
  %v300 = vunpack.c.h.b16 %v292
  %v301 = vpack.c.b16 %v299, %v297
  %v302 = vpack.c.b16 %v300, %v298
  %303 = vrot.lane.b32.xlu0 %v301, 127
  %v304 = vpop.permute.xlu0 %303
  %305 = vrot.lane.b32.xlu0 %v302, 127
  %v306 = vpop.permute.xlu0 %305
  %vm307 = vcmask 1039360
  %v308 = vsel %vm307, %v304, %v306
  %v311 = vsel %vm117, %v294, 0
  %313 = vmatpush.bf16.msra.mxu0 0
  %314 = vmatpush.bf16.msra.mxu0 0
  %315 = vmatpush.bf16.msra.mxu0 0
  %316 = vmatpush.bf16.msra.mxu0 0
  %317 = vmatpush.bf16.msra.mxu0 0
  %318 = vmatpush.bf16.msra.mxu0 0
  %319 = vmatpush.bf16.msra.mxu0 0
  %320 = vmatpush.bf16.msra.mxu0 %v308
  %321 = vmatmul.bf16.gmra.mxu0 %v311
  %v322 = vpop.f32.mrf.mxu0
  %v323 = vadd.f32 0.0, %v322
  %v324 = vpop.f32.mrf.mxu0
  %325 = vdwg.mxu0
  %v326 = vperm.slane %v63, 5
  %v327 = vmul.f32 %v323, %v326
  %v328 = vadd.f32 %v290, %v327
  %s329 = scalar_lea.vmem %s6, 24
  %v330 = vld [vmem:[%s329] sm:$0xf]
  %331 = vrot.lane.b32.xlu0 %v301, 121
  %v332 = vpop.permute.xlu0 %331
  %333 = vrot.lane.b32.xlu0 %v302, 121
  %v334 = vpop.permute.xlu0 %333
  %vm335 = vcmask 990208
  %v336 = vsel %vm335, %v332, %v334
  %v339 = vsel %vm117, %v330, 0
  %341 = vmatpush.bf16.msra.mxu0 0
  %342 = vmatpush.bf16.msra.mxu0 0
  %343 = vmatpush.bf16.msra.mxu0 0
  %344 = vmatpush.bf16.msra.mxu0 0
  %345 = vmatpush.bf16.msra.mxu0 0
  %346 = vmatpush.bf16.msra.mxu0 0
  %347 = vmatpush.bf16.msra.mxu0 0
  %348 = vmatpush.bf16.msra.mxu0 %v336
  %349 = vmatmul.bf16.gmra.mxu0 %v339
  %v350 = vpop.f32.mrf.mxu0
  %v351 = vadd.f32 0.0, %v350
  %v352 = vpop.f32.mrf.mxu0
  %353 = vdwg.mxu0
  %v354 = vperm.slane %v63, 6
  %v355 = vmul.f32 %v351, %v354
  %v356 = vadd.f32 %v328, %v355
  %s357 = scalar_lea.vmem %s6, 28
  %v358 = vld [vmem:[%s357] sm:$0xf]
  %359 = vrot.lane.b32.xlu0 %v301, 120
  %v360 = vpop.permute.xlu0 %359
  %361 = vrot.lane.b32.xlu0 %v302, 120
  %v362 = vpop.permute.xlu0 %361
  %vm363 = vcmask 982016
  %v364 = vsel %vm363, %v360, %v362
  %v367 = vsel %vm117, %v358, 0
  %369 = vmatpush.bf16.msra.mxu0 0
  %370 = vmatpush.bf16.msra.mxu0 0
  %371 = vmatpush.bf16.msra.mxu0 0
  %372 = vmatpush.bf16.msra.mxu0 0
  %373 = vmatpush.bf16.msra.mxu0 0
  %374 = vmatpush.bf16.msra.mxu0 0
  %375 = vmatpush.bf16.msra.mxu0 0
  %376 = vmatpush.bf16.msra.mxu0 %v364
  %377 = vmatmul.bf16.gmra.mxu0 %v367
  %v378 = vpop.f32.mrf.mxu0
  %v379 = vadd.f32 0.0, %v378
  %v380 = vpop.f32.mrf.mxu0
  %381 = vdwg.mxu0
  %v382 = vperm.slane %v63, 7
  %v383 = vmul.f32 %v379, %v382
  %v384 = vadd.f32 %v356, %v383
  %s385 = scalar_lea.vmem %s6, 32
  %v386 = vld [vmem:[%s385] sm:$0xf]
  %387 = vrot.lane.b32.xlu0 %v301, 119
  %v388 = vpop.permute.xlu0 %387
  %389 = vrot.lane.b32.xlu0 %v302, 119
  %v390 = vpop.permute.xlu0 %389
  %vm391 = vcmask 973824
  %v392 = vsel %vm391, %v388, %v390
  %v395 = vsel %vm117, %v386, 0
  %397 = vmatpush.bf16.msra.mxu0 0
  %398 = vmatpush.bf16.msra.mxu0 0
  %399 = vmatpush.bf16.msra.mxu0 0
  %400 = vmatpush.bf16.msra.mxu0 0
  %401 = vmatpush.bf16.msra.mxu0 0
  %402 = vmatpush.bf16.msra.mxu0 0
  %403 = vmatpush.bf16.msra.mxu0 0
  %404 = vmatpush.bf16.msra.mxu0 %v392
  %405 = vmatmul.bf16.gmra.mxu0 %v395
  %v406 = vpop.f32.mrf.mxu0
  %v407 = vadd.f32 0.0, %v406
  %v408 = vpop.f32.mrf.mxu0
  %409 = vdwg.mxu0
  %v410 = vperm.slane %v64, 0
  %v411 = vmul.f32 %v407, %v410
  %v412 = vadd.f32 %v384, %v411
  %413 = vst [vmem:[#allocation2 + $0x10] sm:$0xff] %v412
  %v414 = vld [vmem:[#allocation2] sm:$0xff]
  %v415 = vld [vmem:[#allocation2 + $0x8] sm:$0xff]
  %v416 = vld [vmem:[#allocation2 + $0x10] sm:$0xff]
  %v417 = vld [vmem:[%s7] sm:$0xff]
  %v418 = vld [vmem:[%s7 + $0x8] sm:$0xff]
  %v419 = vld [vmem:[%s7 + $0x10] sm:$0xff]
  %421 = vset.pattern.permute.xlu0 0
  %422 = vperm.xlu0 %421, %v417
  %v423 = vpop.permute.xlu0 %422
  %426 = vset.pattern.permute.xlu0 0
  %427 = vperm.xlu0 %426, %v418
  %v428 = vpop.permute.xlu0 %427
  %431 = vset.pattern.permute.xlu0 0
  %432 = vperm.xlu0 %431, %v419
  %v433 = vpop.permute.xlu0 %432
  %v435 = vmul.f32 %v414, %v423
  %v436 = vmul.f32 %v415, %v428
  %v437 = vmul.f32 %v416, %v433
  %v438 = vld [vmem:[%s8] sm:$0xff]
  %v439 = vld [vmem:[%s8 + $0x8] sm:$0xff]
  %v440 = vld [vmem:[%s8 + $0x10] sm:$0xff]
  %442 = vset.pattern.permute.xlu0 0
  %443 = vperm.xlu0 %442, %v438
  %v444 = vpop.permute.xlu0 %443
  %447 = vset.pattern.permute.xlu0 0
  %448 = vperm.xlu0 %447, %v439
  %v449 = vpop.permute.xlu0 %448
  %452 = vset.pattern.permute.xlu0 0
  %453 = vperm.xlu0 %452, %v440
  %v454 = vpop.permute.xlu0 %453
  %v456 = vadd.f32 %v435, %v444
  %v457 = vadd.f32 %v436, %v449
  %v458 = vadd.f32 %v437, %v454
  %v459 = vmax.f32 %v456, 0.0
  %v460 = vmax.f32 %v457, 0.0
  %v461 = vmax.f32 %v458, 0.0
  %v462 = vld [vmem:[%s9] sm:$0xf]
  %v463 = vld [vmem:[%s9 + $0x4] sm:$0xf]
  %v464 = vpack.c.bf16 %v460, %v459
  %v465 = vpack.c.bf16 %v461, %v461
  %v466 = vld [vmem:[%s10] sm:$0xff]
  %v467 = vld [vmem:[%s10 + $0x8] sm:$0xff]
  %469 = vset.pattern.permute.xlu0 0
  %470 = vperm.xlu0 %469, %v466
  %v471 = vpop.permute.xlu0 %470
  %474 = vset.pattern.permute.xlu0 0
  %475 = vperm.xlu0 %474, %v467
  %v476 = vpop.permute.xlu0 %475
  %v480 = vunpack.c.l.b16 %v462
  %v481 = vunpack.c.l.b16 %v463
  %v482 = vpack.c.b16 %v481, %v480
  %vm483 = vcmask 195584
  %v485 = vsel %vm483, %v482, 0
  %vm487 = vcmask 1043456
  %v489 = vsel %vm487, %v465, 0
  %491 = vmatpush.bf16.msra.mxu0 0
  %492 = vmatpush.bf16.msra.mxu0 0
  %493 = vmatpush.bf16.msra.mxu0 0
  %494 = vmatpush.bf16.msra.mxu0 0
  %495 = vmatpush.bf16.msra.mxu0 0
  %496 = vmatpush.bf16.msra.mxu0 0
  %497 = vmatpush.bf16.msra.mxu0 %v489
  %498 = vmatpush.bf16.msra.mxu0 %v464
  %499 = vmatmul.bf16.gmra.mxu0 %v485
  %v500 = vpop.f32.mrf.mxu0
  %v501 = vadd.f32 %v471, %v500
  %v502 = vpop.f32.mrf.mxu0
  %v503 = vadd.f32 %v476, %v502
  %504 = vdwg.mxu0
  %v505 = vmax.f32 %v501, 0.0
  %v506 = vmax.f32 %v503, 0.0
  %v507 = vpack.c.bf16 %v505, %v505
  %v508 = vpack.c.bf16 %v506, %v506
  %509 = vst [vmem:[#allocation3 + $0x4] sm:$0xf] %v507
  %510 = vst [vmem:[#allocation3 + $0x10] sm:$0xf] %v508
  %v511 = vld [vmem:[#allocation3] sm:$0xff]
  %v512 = vld [vmem:[#allocation3 + $0xc] sm:$0xff]
  %v513 = vld [vmem:[%s11] sm:$0xf]
  %v516 = vunpack.c.l.b16 %v511
  %v517 = vunpack.c.h.b16 %v511
  %v518 = vunpack.c.l.b16 %v512
  %v519 = vunpack.c.h.b16 %v512
  %v520 = vpack.c.b16 %v518, %v516
  %v521 = vpack.c.b16 %v519, %v517
  %522 = vrot.lane.b32.xlu0 %v520, 9
  %v523 = vpop.permute.xlu0 %522
  %524 = vrot.lane.b32.xlu0 %v521, 9
  %v525 = vpop.permute.xlu0 %524
  %v526 = vsel %vm156, %v523, %v525
  %v529 = vsel %vm117, %v513, 0
  %531 = vmatpush.bf16.msra.mxu0 0
  %532 = vmatpush.bf16.msra.mxu0 0
  %533 = vmatpush.bf16.msra.mxu0 0
  %534 = vmatpush.bf16.msra.mxu0 0
  %535 = vmatpush.bf16.msra.mxu0 0
  %536 = vmatpush.bf16.msra.mxu0 0
  %537 = vmatpush.bf16.msra.mxu0 0
  %538 = vmatpush.bf16.msra.mxu0 %v526
  %539 = vmatmul.bf16.gmra.mxu0 %v529
  %v540 = vpop.f32.mrf.mxu0
  %v541 = vadd.f32 0.0, %v540
  %v542 = vpop.f32.mrf.mxu0
  %543 = vdwg.mxu0
  %v544 = vmul.f32 %v541, %v175
  %v545 = vadd.f32 %v544, 0.0
  %s546 = scalar_lea.vmem %s11, 4
  %v547 = vld [vmem:[%s546] sm:$0xf]
  %548 = vrot.lane.b32.xlu0 %v520, 8
  %v549 = vpop.permute.xlu0 %548
  %550 = vrot.lane.b32.xlu0 %v521, 8
  %v551 = vpop.permute.xlu0 %550
  %v552 = vsel %vm184, %v549, %v551
  %v555 = vsel %vm117, %v547, 0
  %557 = vmatpush.bf16.msra.mxu0 0
  %558 = vmatpush.bf16.msra.mxu0 0
  %559 = vmatpush.bf16.msra.mxu0 0
  %560 = vmatpush.bf16.msra.mxu0 0
  %561 = vmatpush.bf16.msra.mxu0 0
  %562 = vmatpush.bf16.msra.mxu0 0
  %563 = vmatpush.bf16.msra.mxu0 0
  %564 = vmatpush.bf16.msra.mxu0 %v552
  %565 = vmatmul.bf16.gmra.mxu0 %v555
  %v566 = vpop.f32.mrf.mxu0
  %v567 = vadd.f32 0.0, %v566
  %v568 = vpop.f32.mrf.mxu0
  %569 = vdwg.mxu0
  %v570 = vmul.f32 %v567, %v203
  %v571 = vadd.f32 %v545, %v570
  %s572 = scalar_lea.vmem %s11, 8
  %v573 = vld [vmem:[%s572] sm:$0xf]
  %574 = vrot.lane.b32.xlu0 %v520, 7
  %v575 = vpop.permute.xlu0 %574
  %576 = vrot.lane.b32.xlu0 %v521, 7
  %v577 = vpop.permute.xlu0 %576
  %v578 = vsel %vm212, %v575, %v577
  %v581 = vsel %vm117, %v573, 0
  %583 = vmatpush.bf16.msra.mxu0 0
  %584 = vmatpush.bf16.msra.mxu0 0
  %585 = vmatpush.bf16.msra.mxu0 0
  %586 = vmatpush.bf16.msra.mxu0 0
  %587 = vmatpush.bf16.msra.mxu0 0
  %588 = vmatpush.bf16.msra.mxu0 0
  %589 = vmatpush.bf16.msra.mxu0 0
  %590 = vmatpush.bf16.msra.mxu0 %v578
  %591 = vmatmul.bf16.gmra.mxu0 %v581
  %v592 = vpop.f32.mrf.mxu0
  %v593 = vadd.f32 0.0, %v592
  %v594 = vpop.f32.mrf.mxu0
  %595 = vdwg.mxu0
  %v596 = vmul.f32 %v593, %v231
  %v597 = vadd.f32 %v571, %v596
  %s598 = scalar_lea.vmem %s11, 12
  %v599 = vld [vmem:[%s598] sm:$0xf]
  %600 = vrot.lane.b32.xlu0 %v520, 1
  %v601 = vpop.permute.xlu0 %600
  %602 = vrot.lane.b32.xlu0 %v521, 1
  %v603 = vpop.permute.xlu0 %602
  %v604 = vsel %vm240, %v601, %v603
  %v607 = vsel %vm117, %v599, 0
  %609 = vmatpush.bf16.msra.mxu0 0
  %610 = vmatpush.bf16.msra.mxu0 0
  %611 = vmatpush.bf16.msra.mxu0 0
  %612 = vmatpush.bf16.msra.mxu0 0
  %613 = vmatpush.bf16.msra.mxu0 0
  %614 = vmatpush.bf16.msra.mxu0 0
  %615 = vmatpush.bf16.msra.mxu0 0
  %616 = vmatpush.bf16.msra.mxu0 %v604
  %617 = vmatmul.bf16.gmra.mxu0 %v607
  %v618 = vpop.f32.mrf.mxu0
  %v619 = vadd.f32 0.0, %v618
  %v620 = vpop.f32.mrf.mxu0
  %621 = vdwg.mxu0
  %v622 = vmul.f32 %v619, %v259
  %v623 = vadd.f32 %v597, %v622
  %v624 = vld [vmem:[#allocation3 + $0x4] sm:$0xf]
  %v625 = vld [vmem:[#allocation3 + $0x10] sm:$0xf]
  %s626 = scalar_lea.vmem %s11, 16
  %v627 = vld [vmem:[%s626] sm:$0xf]
  %v630 = vunpack.c.l.b16 %v624
  %v631 = vunpack.c.l.b16 %v625
  %v632 = vpack.c.b16 %v631, %v630
  %v635 = vsel %vm117, %v627, 0
  %637 = vmatpush.bf16.msra.mxu0 0
  %638 = vmatpush.bf16.msra.mxu0 0
  %639 = vmatpush.bf16.msra.mxu0 0
  %640 = vmatpush.bf16.msra.mxu0 0
  %641 = vmatpush.bf16.msra.mxu0 0
  %642 = vmatpush.bf16.msra.mxu0 0
  %643 = vmatpush.bf16.msra.mxu0 0
  %644 = vmatpush.bf16.msra.mxu0 %v632
  %645 = vmatmul.bf16.gmra.mxu0 %v635
  %v646 = vpop.f32.mrf.mxu0
  %v647 = vadd.f32 0.0, %v646
  %v648 = vpop.f32.mrf.mxu0
  %649 = vdwg.mxu0
  %v650 = vmul.f32 %v647, %v288
  %v651 = vadd.f32 %v623, %v650
  %v652 = vld [vmem:[#allocation3 + $0x4] sm:$0xff]
  %v653 = vld [vmem:[#allocation3 + $0x10] sm:$0xff]
  %s654 = scalar_lea.vmem %s11, 20
  %v655 = vld [vmem:[%s654] sm:$0xf]
  %v658 = vunpack.c.l.b16 %v652
  %v659 = vunpack.c.h.b16 %v652
  %v660 = vunpack.c.l.b16 %v653
  %v661 = vunpack.c.h.b16 %v653
  %v662 = vpack.c.b16 %v660, %v658
  %v663 = vpack.c.b16 %v661, %v659
  %664 = vrot.lane.b32.xlu0 %v662, 127
  %v665 = vpop.permute.xlu0 %664
  %666 = vrot.lane.b32.xlu0 %v663, 127
  %v667 = vpop.permute.xlu0 %666
  %v668 = vsel %vm307, %v665, %v667
  %v671 = vsel %vm117, %v655, 0
  %673 = vmatpush.bf16.msra.mxu0 0
  %674 = vmatpush.bf16.msra.mxu0 0
  %675 = vmatpush.bf16.msra.mxu0 0
  %676 = vmatpush.bf16.msra.mxu0 0
  %677 = vmatpush.bf16.msra.mxu0 0
  %678 = vmatpush.bf16.msra.mxu0 0
  %679 = vmatpush.bf16.msra.mxu0 0
  %680 = vmatpush.bf16.msra.mxu0 %v668
  %681 = vmatmul.bf16.gmra.mxu0 %v671
  %v682 = vpop.f32.mrf.mxu0
  %v683 = vadd.f32 0.0, %v682
  %v684 = vpop.f32.mrf.mxu0
  %685 = vdwg.mxu0
  %v686 = vmul.f32 %v683, %v326
  %v687 = vadd.f32 %v651, %v686
  %s688 = scalar_lea.vmem %s11, 24
  %v689 = vld [vmem:[%s688] sm:$0xf]
  %690 = vrot.lane.b32.xlu0 %v662, 121
  %v691 = vpop.permute.xlu0 %690
  %692 = vrot.lane.b32.xlu0 %v663, 121
  %v693 = vpop.permute.xlu0 %692
  %v694 = vsel %vm335, %v691, %v693
  %v697 = vsel %vm117, %v689, 0
  %699 = vmatpush.bf16.msra.mxu0 0
  %700 = vmatpush.bf16.msra.mxu0 0
  %701 = vmatpush.bf16.msra.mxu0 0
  %702 = vmatpush.bf16.msra.mxu0 0
  %703 = vmatpush.bf16.msra.mxu0 0
  %704 = vmatpush.bf16.msra.mxu0 0
  %705 = vmatpush.bf16.msra.mxu0 0
  %706 = vmatpush.bf16.msra.mxu0 %v694
  %707 = vmatmul.bf16.gmra.mxu0 %v697
  %v708 = vpop.f32.mrf.mxu0
  %v709 = vadd.f32 0.0, %v708
  %v710 = vpop.f32.mrf.mxu0
  %711 = vdwg.mxu0
  %v712 = vmul.f32 %v709, %v354
  %v713 = vadd.f32 %v687, %v712
  %s714 = scalar_lea.vmem %s11, 28
  %v715 = vld [vmem:[%s714] sm:$0xf]
  %716 = vrot.lane.b32.xlu0 %v662, 120
  %v717 = vpop.permute.xlu0 %716
  %718 = vrot.lane.b32.xlu0 %v663, 120
  %v719 = vpop.permute.xlu0 %718
  %v720 = vsel %vm363, %v717, %v719
  %v723 = vsel %vm117, %v715, 0
  %725 = vmatpush.bf16.msra.mxu0 0
  %726 = vmatpush.bf16.msra.mxu0 0
  %727 = vmatpush.bf16.msra.mxu0 0
  %728 = vmatpush.bf16.msra.mxu0 0
  %729 = vmatpush.bf16.msra.mxu0 0
  %730 = vmatpush.bf16.msra.mxu0 0
  %731 = vmatpush.bf16.msra.mxu0 0
  %732 = vmatpush.bf16.msra.mxu0 %v720
  %733 = vmatmul.bf16.gmra.mxu0 %v723
  %v734 = vpop.f32.mrf.mxu0
  %v735 = vadd.f32 0.0, %v734
  %v736 = vpop.f32.mrf.mxu0
  %737 = vdwg.mxu0
  %v738 = vmul.f32 %v735, %v382
  %v739 = vadd.f32 %v713, %v738
  %s740 = scalar_lea.vmem %s11, 32
  %v741 = vld [vmem:[%s740] sm:$0xf]
  %742 = vrot.lane.b32.xlu0 %v662, 119
  %v743 = vpop.permute.xlu0 %742
  %744 = vrot.lane.b32.xlu0 %v663, 119
  %v745 = vpop.permute.xlu0 %744
  %v746 = vsel %vm391, %v743, %v745
  %v749 = vsel %vm117, %v741, 0
  %751 = vmatpush.bf16.msra.mxu0 0
  %752 = vmatpush.bf16.msra.mxu0 0
  %753 = vmatpush.bf16.msra.mxu0 0
  %754 = vmatpush.bf16.msra.mxu0 0
  %755 = vmatpush.bf16.msra.mxu0 0
  %756 = vmatpush.bf16.msra.mxu0 0
  %757 = vmatpush.bf16.msra.mxu0 0
  %758 = vmatpush.bf16.msra.mxu0 %v746
  %759 = vmatmul.bf16.gmra.mxu0 %v749
  %v760 = vpop.f32.mrf.mxu0
  %v761 = vadd.f32 0.0, %v760
  %v762 = vpop.f32.mrf.mxu0
  %763 = vdwg.mxu0
  %v764 = vmul.f32 %v761, %v410
  %v765 = vadd.f32 %v739, %v764
  %766 = vst [vmem:[#allocation2 + $0x18] sm:$0xff] %v765
  %v767 = vld [vmem:[#allocation2] sm:$0xff]
  %v768 = vld [vmem:[#allocation2 + $0x8] sm:$0xff]
  %v769 = vld [vmem:[#allocation2 + $0x10] sm:$0xff]
  %v770 = vld [vmem:[#allocation2 + $0x18] sm:$0xff]
  %v771 = vld [vmem:[%s12] sm:$0xff]
  %v772 = vld [vmem:[%s12 + $0x8] sm:$0xff]
  %v773 = vld [vmem:[%s12 + $0x10] sm:$0xff]
  %v774 = vld [vmem:[%s12 + $0x18] sm:$0xff]
  %776 = vset.pattern.permute.xlu0 0
  %777 = vperm.xlu0 %776, %v771
  %v778 = vpop.permute.xlu0 %777
  %781 = vset.pattern.permute.xlu0 0
  %782 = vperm.xlu0 %781, %v772
  %v783 = vpop.permute.xlu0 %782
  %786 = vset.pattern.permute.xlu0 0
  %787 = vperm.xlu0 %786, %v773
  %v788 = vpop.permute.xlu0 %787
  %791 = vset.pattern.permute.xlu0 0
  %792 = vperm.xlu0 %791, %v774
  %v793 = vpop.permute.xlu0 %792
  %v795 = vmul.f32 %v767, %v778
  %v796 = vmul.f32 %v768, %v783
  %v797 = vmul.f32 %v769, %v788
  %v798 = vmul.f32 %v770, %v793
  %v799 = vld [vmem:[%s13] sm:$0xff]
  %v800 = vld [vmem:[%s13 + $0x8] sm:$0xff]
  %v801 = vld [vmem:[%s13 + $0x10] sm:$0xff]
  %v802 = vld [vmem:[%s13 + $0x18] sm:$0xff]
  %804 = vset.pattern.permute.xlu0 0
  %805 = vperm.xlu0 %804, %v799
  %v806 = vpop.permute.xlu0 %805
  %809 = vset.pattern.permute.xlu0 0
  %810 = vperm.xlu0 %809, %v800
  %v811 = vpop.permute.xlu0 %810
  %814 = vset.pattern.permute.xlu0 0
  %815 = vperm.xlu0 %814, %v801
  %v816 = vpop.permute.xlu0 %815
  %819 = vset.pattern.permute.xlu0 0
  %820 = vperm.xlu0 %819, %v802
  %v821 = vpop.permute.xlu0 %820
  %v823 = vadd.f32 %v795, %v806
  %v824 = vadd.f32 %v796, %v811
  %v825 = vadd.f32 %v797, %v816
  %v826 = vadd.f32 %v798, %v821
  %v827 = vmax.f32 %v823, 0.0
  %v828 = vmax.f32 %v824, 0.0
  %v829 = vmax.f32 %v825, 0.0
  %v830 = vmax.f32 %v826, 0.0
  %v831 = vld [vmem:[%s14] sm:$0xf]
  %v832 = vld [vmem:[%s14 + $0x4] sm:$0xf]
  %v833 = vpack.c.bf16 %v828, %v827
  %v834 = vpack.c.bf16 %v830, %v829
  %v837 = vunpack.c.l.b16 %v831
  %v838 = vunpack.c.l.b16 %v832
  %v839 = vpack.c.b16 %v838, %v837
  %vm840 = vcmask 261120
  %v842 = vsel %vm840, %v839, 0
  %844 = vmatpush.bf16.msra.mxu0 0
  %845 = vmatpush.bf16.msra.mxu0 0
  %846 = vmatpush.bf16.msra.mxu0 0
  %847 = vmatpush.bf16.msra.mxu0 0
  %848 = vmatpush.bf16.msra.mxu0 0
  %849 = vmatpush.bf16.msra.mxu0 0
  %850 = vmatpush.bf16.msra.mxu0 %v834
  %851 = vmatpush.bf16.msra.mxu0 %v833
  %852 = vmatmul.bf16.gmra.mxu0 %v842
  %v853 = vpop.f32.mrf.mxu0
  %v854 = vadd.f32 0.0, %v853
  %v855 = vpop.f32.mrf.mxu0
  %v856 = vadd.f32 0.0, %v855
  %857 = vdwg.mxu0
  %v858 = vpack.c.bf16 %v856, %v854
  %v859 = vld [vmem:[%s15] sm:$0xf]
  %v860 = vld [vmem:[%s15 + $0x4] sm:$0xf]
  %v861 = vld [vmem:[%s15 + $0x8] sm:$0xf]
  %v862 = vld [vmem:[%s15 + $0xc] sm:$0xf]
  %v863 = vld [vmem:[%s15 + $0x10] sm:$0xf]
  %v864 = vld [vmem:[%s15 + $0x14] sm:$0xf]
  %v865 = vld [vmem:[%s15 + $0x18] sm:$0xf]
  %v866 = vld [vmem:[%s15 + $0x1c] sm:$0xf]
  %v867 = vld [vmem:[%s15 + $0x20] sm:$0xf]
  %v868 = vld [vmem:[%s15 + $0x24] sm:$0xf]
  %v869 = vld [vmem:[%s15 + $0x28] sm:$0xf]
  %v870 = vld [vmem:[%s15 + $0x2c] sm:$0xf]
  %v871 = vld [vmem:[%s15 + $0x30] sm:$0xf]
  %v872 = vld [vmem:[%s15 + $0x34] sm:$0xf]
  %v873 = vld [vmem:[%s15 + $0x38] sm:$0xf]
  %v874 = vld [vmem:[%s15 + $0x3c] sm:$0xf]
  %v891 = vunpack.c.l.b16 %v859
  %v892 = vunpack.c.l.b16 %v860
  %v893 = vunpack.c.l.b16 %v861
  %v894 = vunpack.c.l.b16 %v862
  %v895 = vunpack.c.l.b16 %v863
  %v896 = vunpack.c.l.b16 %v864
  %v897 = vunpack.c.l.b16 %v865
  %v898 = vunpack.c.l.b16 %v866
  %v899 = vunpack.c.l.b16 %v867
  %v900 = vunpack.c.l.b16 %v868
  %v901 = vunpack.c.l.b16 %v869
  %v902 = vunpack.c.l.b16 %v870
  %v903 = vunpack.c.l.b16 %v871
  %v904 = vunpack.c.l.b16 %v872
  %v905 = vunpack.c.l.b16 %v873
  %v906 = vunpack.c.l.b16 %v874
  %v907 = vpack.c.b16 %v892, %v891
  %v908 = vpack.c.b16 %v894, %v893
  %v909 = vpack.c.b16 %v896, %v895
  %v910 = vpack.c.b16 %v898, %v897
  %v911 = vpack.c.b16 %v900, %v899
  %v912 = vpack.c.b16 %v902, %v901
  %v913 = vpack.c.b16 %v904, %v903
  %v914 = vpack.c.b16 %v906, %v905
  %923 = vmatpush.bf16.msra.mxu0 %v914
  %924 = vmatpush.bf16.msra.mxu0 %v913
  %925 = vmatpush.bf16.msra.mxu0 %v912
  %926 = vmatpush.bf16.msra.mxu0 %v911
  %927 = vmatpush.bf16.msra.mxu0 %v910
  %928 = vmatpush.bf16.msra.mxu0 %v909
  %929 = vmatpush.bf16.msra.mxu0 %v908
  %930 = vmatpush.bf16.msra.mxu0 %v907
  %931 = vmatmul.bf16.gmra.mxu0 %v858
  %v932 = vpop.f32.mrf.mxu0
  %v933 = vadd.f32 0.0, %v932
  %v934 = vpop.f32.mrf.mxu0
  %v935 = vadd.f32 0.0, %v934
  %936 = vdwg.mxu0
  %937 = vst.msk [vmem:[%s16] sm:$0xff] %vm840, %v933
  %938 = vst.msk [vmem:[%s16 + $0x8] sm:$0xff] %vm840, %v935
  // Predicated region
  $region66: #{densenet_forward.6} parent=0 // pred_check
    _
  $region67: #{densenet_forward.6} parent=0 // pred_check_branch
    %940 = sbr.rel (0) target = $region69
  $region68: #{densenet_forward.6} parent=0 // pred_region
    _
  $region69: #{densenet_forward.6} parent=0 // pred_fallthru
    _
  // Predicated region
  $region70: #{densenet_forward.6} parent=0 // pred_check
    _
  $region71: #{densenet_forward.6} parent=0 // pred_check_branch
    %942 = sbr.rel (0) target = $region73
  $region72: #{densenet_forward.6} parent=0 // pred_region
    _
  $region73: #{densenet_forward.6} parent=0 // pred_fallthru
    _

// kernel: densenet_forward.7
$region0: #{densenet_forward.7}
  #allocation0 [shape = 'u32[]', space=smem, size = 0x4, offset = 0x4, fixed_abs, tag = 'smem constant byte address 0x4 - core index']
  #allocation1 [shape = 'u32[72,128]{1,0:T(1,128)}', space=vmem, size = 0x9000, scoped, tag = 'internal scratch']
  #allocation2 [shape = 'f32[32,32]{1,0:T(8,128)}', space=vmem, size = 0x4000, scoped, tag = 'scratch operand']
  #allocation3 [shape = 'bf16[16,165]{1,0:T(8,128)(2,1)}', space=vmem, size = 0x2000, scoped, tag = 'scratch operand']
  %s0 = inlined_call_operand.vmem [shape: f32[16,32], index: 0, kind: input, shape index: {}]
  %s1 = inlined_call_operand.vmem [shape: f32[9,32], index: 1, kind: input, shape index: {}]
  %s2 = inlined_call_operand.vmem [shape: f32[16,1], index: 2, kind: input, shape index: {}]
  %s3 = inlined_call_operand.vmem [shape: f32[16,1], index: 3, kind: input, shape index: {}]
  %s4 = inlined_call_operand.vmem [shape: bf16[16,16], index: 4, kind: input, shape index: {}]
  %s5 = inlined_call_operand.vmem [shape: f32[16,1], index: 5, kind: input, shape index: {}]
  %s6 = inlined_call_operand.vmem [shape: bf16[9,8,16], index: 6, kind: input, shape index: {}]
  %s7 = inlined_call_operand.vmem [shape: f32[24,1], index: 7, kind: input, shape index: {}]
  %s8 = inlined_call_operand.vmem [shape: f32[24,1], index: 8, kind: input, shape index: {}]
  %s9 = inlined_call_operand.vmem [shape: bf16[16,24], index: 9, kind: input, shape index: {}]
  %s10 = inlined_call_operand.vmem [shape: f32[16,1], index: 10, kind: input, shape index: {}]
  %s11 = inlined_call_operand.vmem [shape: bf16[9,8,16], index: 11, kind: input, shape index: {}]
  %s12 = inlined_call_operand.vmem [shape: f32[32,1], index: 12, kind: input, shape index: {}]
  %s13 = inlined_call_operand.vmem [shape: f32[32,1], index: 13, kind: input, shape index: {}]
  %s14 = inlined_call_operand.vmem [shape: bf16[16,32], index: 14, kind: input, shape index: {}]
  %s15 = inlined_call_operand.vmem [shape: bf16[32,8], index: 15, kind: input, shape index: {}]
  %s16 = inlined_call_operand.vmem [shape: f32[16,8], index: 16, kind: output, shape index: {}]
  %s17 = sld [smem:[#allocation0]]
  $region74: #{densenet_forward.7} parent=0
    _
  %s19 = ssub.s32 1, %s17
  %s20 = scalar_select 0, %s19, %s17
  // Predicated region
  $region2: #{densenet_forward.7} parent=0 // pred_check
    _
  $region3: #{densenet_forward.7} parent=0 // pred_check_branch
    %22 = sbr.rel (0) target = $region5
  $region4: #{densenet_forward.7} parent=0 // pred_region
    _
  $region5: #{densenet_forward.7} parent=0 // pred_fallthru
    _
  // Predicated region
  $region6: #{densenet_forward.7} parent=0 // pred_check
    _
  $region7: #{densenet_forward.7} parent=0 // pred_check_branch
    %24 = sbr.rel (0) target = $region9
  $region8: #{densenet_forward.7} parent=0 // pred_region
    _
  $region9: #{densenet_forward.7} parent=0 // pred_fallthru
    _
  // Predicated region
  $region10: #{densenet_forward.7} parent=0 // pred_check
    _
  $region11: #{densenet_forward.7} parent=0 // pred_check_branch
    %26 = sbr.rel (0) target = $region13
  $region12: #{densenet_forward.7} parent=0 // pred_region
    _
  $region13: #{densenet_forward.7} parent=0 // pred_fallthru
    _
  // Predicated region
  $region14: #{densenet_forward.7} parent=0 // pred_check
    _
  $region15: #{densenet_forward.7} parent=0 // pred_check_branch
    %28 = sbr.rel (0) target = $region17
  $region16: #{densenet_forward.7} parent=0 // pred_region
    _
  $region17: #{densenet_forward.7} parent=0 // pred_fallthru
    _
  // Predicated region
  $region18: #{densenet_forward.7} parent=0 // pred_check
    _
  $region19: #{densenet_forward.7} parent=0 // pred_check_branch
    %30 = sbr.rel (0) target = $region21
  $region20: #{densenet_forward.7} parent=0 // pred_region
    _
  $region21: #{densenet_forward.7} parent=0 // pred_fallthru
    _
  // Predicated region
  $region22: #{densenet_forward.7} parent=0 // pred_check
    _
  $region23: #{densenet_forward.7} parent=0 // pred_check_branch
    %32 = sbr.rel (0) target = $region25
  $region24: #{densenet_forward.7} parent=0 // pred_region
    _
  $region25: #{densenet_forward.7} parent=0 // pred_fallthru
    _
  // Predicated region
  $region26: #{densenet_forward.7} parent=0 // pred_check
    _
  $region27: #{densenet_forward.7} parent=0 // pred_check_branch
    %34 = sbr.rel (0) target = $region29
  $region28: #{densenet_forward.7} parent=0 // pred_region
    _
  $region29: #{densenet_forward.7} parent=0 // pred_fallthru
    _
  // Predicated region
  $region30: #{densenet_forward.7} parent=0 // pred_check
    _
  $region31: #{densenet_forward.7} parent=0 // pred_check_branch
    %36 = sbr.rel (0) target = $region33
  $region32: #{densenet_forward.7} parent=0 // pred_region
    _
  $region33: #{densenet_forward.7} parent=0 // pred_fallthru
    _
  // Predicated region
  $region34: #{densenet_forward.7} parent=0 // pred_check
    _
  $region35: #{densenet_forward.7} parent=0 // pred_check_branch
    %38 = sbr.rel (0) target = $region37
  $region36: #{densenet_forward.7} parent=0 // pred_region
    _
  $region37: #{densenet_forward.7} parent=0 // pred_fallthru
    _
  // Predicated region
  $region38: #{densenet_forward.7} parent=0 // pred_check
    _
  $region39: #{densenet_forward.7} parent=0 // pred_check_branch
    %40 = sbr.rel (0) target = $region41
  $region40: #{densenet_forward.7} parent=0 // pred_region
    _
  $region41: #{densenet_forward.7} parent=0 // pred_fallthru
    _
  // Predicated region
  $region42: #{densenet_forward.7} parent=0 // pred_check
    _
  $region43: #{densenet_forward.7} parent=0 // pred_check_branch
    %42 = sbr.rel (0) target = $region45
  $region44: #{densenet_forward.7} parent=0 // pred_region
    _
  $region45: #{densenet_forward.7} parent=0 // pred_fallthru
    _
  // Predicated region
  $region46: #{densenet_forward.7} parent=0 // pred_check
    _
  $region47: #{densenet_forward.7} parent=0 // pred_check_branch
    %44 = sbr.rel (0) target = $region49
  $region48: #{densenet_forward.7} parent=0 // pred_region
    _
  $region49: #{densenet_forward.7} parent=0 // pred_fallthru
    _
  // Predicated region
  $region50: #{densenet_forward.7} parent=0 // pred_check
    _
  $region51: #{densenet_forward.7} parent=0 // pred_check_branch
    %46 = sbr.rel (0) target = $region53
  $region52: #{densenet_forward.7} parent=0 // pred_region
    _
  $region53: #{densenet_forward.7} parent=0 // pred_fallthru
    _
  // Predicated region
  $region54: #{densenet_forward.7} parent=0 // pred_check
    _
  $region55: #{densenet_forward.7} parent=0 // pred_check_branch
    %48 = sbr.rel (0) target = $region57
  $region56: #{densenet_forward.7} parent=0 // pred_region
    _
  $region57: #{densenet_forward.7} parent=0 // pred_fallthru
    _
  // Predicated region
  $region58: #{densenet_forward.7} parent=0 // pred_check
    _
  $region59: #{densenet_forward.7} parent=0 // pred_check_branch
    %50 = sbr.rel (0) target = $region61
  $region60: #{densenet_forward.7} parent=0 // pred_region
    _
  $region61: #{densenet_forward.7} parent=0 // pred_fallthru
    _
  // Predicated region
  $region62: #{densenet_forward.7} parent=0 // pred_check
    _
  $region63: #{densenet_forward.7} parent=0 // pred_check_branch
    %52 = sbr.rel (0) target = $region65
  $region64: #{densenet_forward.7} parent=0 // pred_region
    _
  $region65: #{densenet_forward.7} parent=0 // pred_fallthru
    _
  %vm54 = vcmask 1043456
  %vm55 = vcmask 302084
  %vm56 = vmor %vm55, %vm54
  %57 = vst.msk [vmem:[#allocation3] sm:$0xff] %vm56, 0
  %58 = vst.msk [vmem:[#allocation3 + $0x8] sm:$0xff] %vm56, 0
  %v59 = vld [vmem:[%s0] sm:$0xff]
  %v60 = vld [vmem:[%s0 + $0x8] sm:$0xff]
  %vm61 = vcmask 261120
  %62 = vst.msk [vmem:[#allocation2] sm:$0xff] %vm61, %v59
  %63 = vst.msk [vmem:[#allocation2 + $0x8] sm:$0xff] %vm61, %v60
  %v64 = vld [vmem:[%s1] sm:$0xff]
  %v65 = vld [vmem:[%s1 + $0x8] sm:$0x1]
  %v66 = vld [vmem:[#allocation2] sm:$0xff]
  %v67 = vld [vmem:[#allocation2 + $0x8] sm:$0xff]
  %v68 = vld [vmem:[%s2] sm:$0xff]
  %v69 = vld [vmem:[%s2 + $0x8] sm:$0xff]
  %71 = vset.pattern.permute.xlu0 0
  %72 = vperm.xlu0 %71, %v68
  %v73 = vpop.permute.xlu0 %72
  %76 = vset.pattern.permute.xlu0 0
  %77 = vperm.xlu0 %76, %v69
  %v78 = vpop.permute.xlu0 %77
  %v80 = vmul.f32 %v66, %v73
  %v81 = vmul.f32 %v67, %v78
  %v82 = vld [vmem:[%s3] sm:$0xff]
  %v83 = vld [vmem:[%s3 + $0x8] sm:$0xff]
  %85 = vset.pattern.permute.xlu0 0
  %86 = vperm.xlu0 %85, %v82
  %v87 = vpop.permute.xlu0 %86
  %90 = vset.pattern.permute.xlu0 0
  %91 = vperm.xlu0 %90, %v83
  %v92 = vpop.permute.xlu0 %91
  %v94 = vadd.f32 %v80, %v87
  %v95 = vadd.f32 %v81, %v92
  %v96 = vmax.f32 %v94, 0.0
  %v97 = vmax.f32 %v95, 0.0
  %v98 = vld [vmem:[%s4] sm:$0xf]
  %v99 = vld [vmem:[%s4 + $0x4] sm:$0xf]
  %v100 = vpack.c.bf16 %v97, %v96
  %v101 = vld [vmem:[%s5] sm:$0xff]
  %v102 = vld [vmem:[%s5 + $0x8] sm:$0xff]
  %104 = vset.pattern.permute.xlu0 0
  %105 = vperm.xlu0 %104, %v101
  %v106 = vpop.permute.xlu0 %105
  %109 = vset.pattern.permute.xlu0 0
  %110 = vperm.xlu0 %109, %v102
  %v111 = vpop.permute.xlu0 %110
  %v115 = vunpack.c.l.b16 %v98
  %v116 = vunpack.c.l.b16 %v99
  %v117 = vpack.c.b16 %v116, %v115
  %vm118 = vcmask 130048
  %v120 = vsel %vm118, %v117, 0
  %122 = vmatpush.bf16.msra.mxu0 0
  %123 = vmatpush.bf16.msra.mxu0 0
  %124 = vmatpush.bf16.msra.mxu0 0
  %125 = vmatpush.bf16.msra.mxu0 0
  %126 = vmatpush.bf16.msra.mxu0 0
  %127 = vmatpush.bf16.msra.mxu0 0
  %128 = vmatpush.bf16.msra.mxu0 0
  %129 = vmatpush.bf16.msra.mxu0 %v100
  %130 = vmatmul.bf16.gmra.mxu0 %v120
  %v131 = vpop.f32.mrf.mxu0
  %v132 = vadd.f32 %v106, %v131
  %v133 = vpop.f32.mrf.mxu0
  %v134 = vadd.f32 %v111, %v133
  %135 = vdwg.mxu0
  %v136 = vmax.f32 %v132, 0.0
  %v137 = vmax.f32 %v134, 0.0
  %v138 = vpack.c.bf16 %v136, %v136
  %v139 = vpack.c.bf16 %v137, %v137
  %vm140 = vcmask 257024
  %141 = vst.msk [vmem:[#allocation3 + $0x4] sm:$0xf] %vm140, %v138
  %142 = vst.msk [vmem:[#allocation3 + $0xc] sm:$0xf] %vm140, %v139
  %v143 = vld [vmem:[#allocation3] sm:$0xff]
  %v144 = vld [vmem:[#allocation3 + $0x8] sm:$0xff]
  %v145 = vld [vmem:[%s6] sm:$0xf]
  %v148 = vunpack.c.l.b16 %v143
  %v149 = vunpack.c.h.b16 %v143
  %v150 = vunpack.c.l.b16 %v144
  %v151 = vunpack.c.h.b16 %v144
  %v152 = vpack.c.b16 %v150, %v148
  %v153 = vpack.c.b16 %v151, %v149
  %154 = vrot.lane.b32.xlu0 %v152, 5
  %v155 = vpop.permute.xlu0 %154
  %156 = vrot.lane.b32.xlu0 %v153, 5
  %v157 = vpop.permute.xlu0 %156
  %vm158 = vcmask 39936
  %v159 = vsel %vm158, %v155, %v157
  %v162 = vsel %vm118, %v145, 0
  %164 = vmatpush.bf16.msra.mxu0 0
  %165 = vmatpush.bf16.msra.mxu0 0
  %166 = vmatpush.bf16.msra.mxu0 0
  %167 = vmatpush.bf16.msra.mxu0 0
  %168 = vmatpush.bf16.msra.mxu0 0
  %169 = vmatpush.bf16.msra.mxu0 0
  %170 = vmatpush.bf16.msra.mxu0 0
  %171 = vmatpush.bf16.msra.mxu0 %v159
  %172 = vmatmul.bf16.gmra.mxu0 %v162
  %v173 = vpop.f32.mrf.mxu0
  %v174 = vadd.f32 0.0, %v173
  %v175 = vpop.f32.mrf.mxu0
  %176 = vdwg.mxu0
  %v177 = vperm.slane %v64, 0
  %v178 = vmul.f32 %v174, %v177
  %v179 = vadd.f32 %v178, 0.0
  %s180 = scalar_lea.vmem %s6, 4
  %v181 = vld [vmem:[%s180] sm:$0xf]
  %182 = vrot.lane.b32.xlu0 %v152, 4
  %v183 = vpop.permute.xlu0 %182
  %184 = vrot.lane.b32.xlu0 %v153, 4
  %v185 = vpop.permute.xlu0 %184
  %vm186 = vcmask 31744
  %v187 = vsel %vm186, %v183, %v185
  %v190 = vsel %vm118, %v181, 0
  %192 = vmatpush.bf16.msra.mxu0 0
  %193 = vmatpush.bf16.msra.mxu0 0
  %194 = vmatpush.bf16.msra.mxu0 0
  %195 = vmatpush.bf16.msra.mxu0 0
  %196 = vmatpush.bf16.msra.mxu0 0
  %197 = vmatpush.bf16.msra.mxu0 0
  %198 = vmatpush.bf16.msra.mxu0 0
  %199 = vmatpush.bf16.msra.mxu0 %v187
  %200 = vmatmul.bf16.gmra.mxu0 %v190
  %v201 = vpop.f32.mrf.mxu0
  %v202 = vadd.f32 0.0, %v201
  %v203 = vpop.f32.mrf.mxu0
  %204 = vdwg.mxu0
  %v205 = vperm.slane %v64, 1
  %v206 = vmul.f32 %v202, %v205
  %v207 = vadd.f32 %v179, %v206
  %s208 = scalar_lea.vmem %s6, 8
  %v209 = vld [vmem:[%s208] sm:$0xf]
  %210 = vrot.lane.b32.xlu0 %v152, 3
  %v211 = vpop.permute.xlu0 %210
  %212 = vrot.lane.b32.xlu0 %v153, 3
  %v213 = vpop.permute.xlu0 %212
  %vm214 = vcmask 23552
  %v215 = vsel %vm214, %v211, %v213
  %v218 = vsel %vm118, %v209, 0
  %220 = vmatpush.bf16.msra.mxu0 0
  %221 = vmatpush.bf16.msra.mxu0 0
  %222 = vmatpush.bf16.msra.mxu0 0
  %223 = vmatpush.bf16.msra.mxu0 0
  %224 = vmatpush.bf16.msra.mxu0 0
  %225 = vmatpush.bf16.msra.mxu0 0
  %226 = vmatpush.bf16.msra.mxu0 0
  %227 = vmatpush.bf16.msra.mxu0 %v215
  %228 = vmatmul.bf16.gmra.mxu0 %v218
  %v229 = vpop.f32.mrf.mxu0
  %v230 = vadd.f32 0.0, %v229
  %v231 = vpop.f32.mrf.mxu0
  %232 = vdwg.mxu0
  %v233 = vperm.slane %v64, 2
  %v234 = vmul.f32 %v230, %v233
  %v235 = vadd.f32 %v207, %v234
  %s236 = scalar_lea.vmem %s6, 12
  %v237 = vld [vmem:[%s236] sm:$0xf]
  %238 = vrot.lane.b32.xlu0 %v152, 1
  %v239 = vpop.permute.xlu0 %238
  %240 = vrot.lane.b32.xlu0 %v153, 1
  %v241 = vpop.permute.xlu0 %240
  %vm242 = vcmask 7168
  %v243 = vsel %vm242, %v239, %v241
  %v246 = vsel %vm118, %v237, 0
  %248 = vmatpush.bf16.msra.mxu0 0
  %249 = vmatpush.bf16.msra.mxu0 0
  %250 = vmatpush.bf16.msra.mxu0 0
  %251 = vmatpush.bf16.msra.mxu0 0
  %252 = vmatpush.bf16.msra.mxu0 0
  %253 = vmatpush.bf16.msra.mxu0 0
  %254 = vmatpush.bf16.msra.mxu0 0
  %255 = vmatpush.bf16.msra.mxu0 %v243
  %256 = vmatmul.bf16.gmra.mxu0 %v246
  %v257 = vpop.f32.mrf.mxu0
  %v258 = vadd.f32 0.0, %v257
  %v259 = vpop.f32.mrf.mxu0
  %260 = vdwg.mxu0
  %v261 = vperm.slane %v64, 3
  %v262 = vmul.f32 %v258, %v261
  %v263 = vadd.f32 %v235, %v262
  %v264 = vld [vmem:[#allocation3 + $0x4] sm:$0xf]
  %v265 = vld [vmem:[#allocation3 + $0xc] sm:$0xf]
  %s266 = scalar_lea.vmem %s6, 16
  %v267 = vld [vmem:[%s266] sm:$0xf]
  %v270 = vunpack.c.l.b16 %v264
  %v271 = vunpack.c.l.b16 %v265
  %v272 = vpack.c.b16 %v271, %v270
  %v275 = vsel %vm118, %v267, 0
  %277 = vmatpush.bf16.msra.mxu0 0
  %278 = vmatpush.bf16.msra.mxu0 0
  %279 = vmatpush.bf16.msra.mxu0 0
  %280 = vmatpush.bf16.msra.mxu0 0
  %281 = vmatpush.bf16.msra.mxu0 0
  %282 = vmatpush.bf16.msra.mxu0 0
  %283 = vmatpush.bf16.msra.mxu0 0
  %284 = vmatpush.bf16.msra.mxu0 %v272
  %285 = vmatmul.bf16.gmra.mxu0 %v275
  %v286 = vpop.f32.mrf.mxu0
  %v287 = vadd.f32 0.0, %v286
  %v288 = vpop.f32.mrf.mxu0
  %289 = vdwg.mxu0
  %v290 = vperm.slane %v64, 4
  %v291 = vmul.f32 %v287, %v290
  %v292 = vadd.f32 %v263, %v291
  %s293 = scalar_lea.vmem %s6, 20
  %v294 = vld [vmem:[%s293] sm:$0xf]
  %295 = vrot.lane.b32.xlu0 %v272, 127
  %v296 = vpop.permute.xlu0 %295
  %v299 = vsel %vm118, %v294, 0
  %301 = vmatpush.bf16.msra.mxu0 0
  %302 = vmatpush.bf16.msra.mxu0 0
  %303 = vmatpush.bf16.msra.mxu0 0
  %304 = vmatpush.bf16.msra.mxu0 0
  %305 = vmatpush.bf16.msra.mxu0 0
  %306 = vmatpush.bf16.msra.mxu0 0
  %307 = vmatpush.bf16.msra.mxu0 0
  %308 = vmatpush.bf16.msra.mxu0 %v296
  %309 = vmatmul.bf16.gmra.mxu0 %v299
  %v310 = vpop.f32.mrf.mxu0
  %v311 = vadd.f32 0.0, %v310
  %v312 = vpop.f32.mrf.mxu0
  %313 = vdwg.mxu0
  %v314 = vperm.slane %v64, 5
  %v315 = vmul.f32 %v311, %v314
  %v316 = vadd.f32 %v292, %v315
  %s317 = scalar_lea.vmem %s6, 24
  %v318 = vld [vmem:[%s317] sm:$0xf]
  %319 = vrot.lane.b32.xlu0 %v272, 125
  %v320 = vpop.permute.xlu0 %319
  %v323 = vsel %vm118, %v318, 0
  %325 = vmatpush.bf16.msra.mxu0 0
  %326 = vmatpush.bf16.msra.mxu0 0
  %327 = vmatpush.bf16.msra.mxu0 0
  %328 = vmatpush.bf16.msra.mxu0 0
  %329 = vmatpush.bf16.msra.mxu0 0
  %330 = vmatpush.bf16.msra.mxu0 0
  %331 = vmatpush.bf16.msra.mxu0 0
  %332 = vmatpush.bf16.msra.mxu0 %v320
  %333 = vmatmul.bf16.gmra.mxu0 %v323
  %v334 = vpop.f32.mrf.mxu0
  %v335 = vadd.f32 0.0, %v334
  %v336 = vpop.f32.mrf.mxu0
  %337 = vdwg.mxu0
  %v338 = vperm.slane %v64, 6
  %v339 = vmul.f32 %v335, %v338
  %v340 = vadd.f32 %v316, %v339
  %s341 = scalar_lea.vmem %s6, 28
  %v342 = vld [vmem:[%s341] sm:$0xf]
  %343 = vrot.lane.b32.xlu0 %v272, 124
  %v344 = vpop.permute.xlu0 %343
  %v347 = vsel %vm118, %v342, 0
  %349 = vmatpush.bf16.msra.mxu0 0
  %350 = vmatpush.bf16.msra.mxu0 0
  %351 = vmatpush.bf16.msra.mxu0 0
  %352 = vmatpush.bf16.msra.mxu0 0
  %353 = vmatpush.bf16.msra.mxu0 0
  %354 = vmatpush.bf16.msra.mxu0 0
  %355 = vmatpush.bf16.msra.mxu0 0
  %356 = vmatpush.bf16.msra.mxu0 %v344
  %357 = vmatmul.bf16.gmra.mxu0 %v347
  %v358 = vpop.f32.mrf.mxu0
  %v359 = vadd.f32 0.0, %v358
  %v360 = vpop.f32.mrf.mxu0
  %361 = vdwg.mxu0
  %v362 = vperm.slane %v64, 7
  %v363 = vmul.f32 %v359, %v362
  %v364 = vadd.f32 %v340, %v363
  %s365 = scalar_lea.vmem %s6, 32
  %v366 = vld [vmem:[%s365] sm:$0xf]
  %367 = vrot.lane.b32.xlu0 %v272, 123
  %v368 = vpop.permute.xlu0 %367
  %v371 = vsel %vm118, %v366, 0
  %373 = vmatpush.bf16.msra.mxu0 0
  %374 = vmatpush.bf16.msra.mxu0 0
  %375 = vmatpush.bf16.msra.mxu0 0
  %376 = vmatpush.bf16.msra.mxu0 0
  %377 = vmatpush.bf16.msra.mxu0 0
  %378 = vmatpush.bf16.msra.mxu0 0
  %379 = vmatpush.bf16.msra.mxu0 0
  %380 = vmatpush.bf16.msra.mxu0 %v368
  %381 = vmatmul.bf16.gmra.mxu0 %v371
  %v382 = vpop.f32.mrf.mxu0
  %v383 = vadd.f32 0.0, %v382
  %v384 = vpop.f32.mrf.mxu0
  %385 = vdwg.mxu0
  %v386 = vperm.slane %v65, 0
  %v387 = vmul.f32 %v383, %v386
  %v388 = vadd.f32 %v364, %v387
  %389 = vst.msk [vmem:[#allocation2 + $0x10] sm:$0xff] %vm61, %v388
  %v390 = vld [vmem:[#allocation2] sm:$0xff]
  %v391 = vld [vmem:[#allocation2 + $0x8] sm:$0xff]
  %v392 = vld [vmem:[#allocation2 + $0x10] sm:$0xff]
  %v393 = vld [vmem:[%s7] sm:$0xff]
  %v394 = vld [vmem:[%s7 + $0x8] sm:$0xff]
  %v395 = vld [vmem:[%s7 + $0x10] sm:$0xff]
  %397 = vset.pattern.permute.xlu0 0
  %398 = vperm.xlu0 %397, %v393
  %v399 = vpop.permute.xlu0 %398
  %402 = vset.pattern.permute.xlu0 0
  %403 = vperm.xlu0 %402, %v394
  %v404 = vpop.permute.xlu0 %403
  %407 = vset.pattern.permute.xlu0 0
  %408 = vperm.xlu0 %407, %v395
  %v409 = vpop.permute.xlu0 %408
  %v411 = vmul.f32 %v390, %v399
  %v412 = vmul.f32 %v391, %v404
  %v413 = vmul.f32 %v392, %v409
  %v414 = vld [vmem:[%s8] sm:$0xff]
  %v415 = vld [vmem:[%s8 + $0x8] sm:$0xff]
  %v416 = vld [vmem:[%s8 + $0x10] sm:$0xff]
  %418 = vset.pattern.permute.xlu0 0
  %419 = vperm.xlu0 %418, %v414
  %v420 = vpop.permute.xlu0 %419
  %423 = vset.pattern.permute.xlu0 0
  %424 = vperm.xlu0 %423, %v415
  %v425 = vpop.permute.xlu0 %424
  %428 = vset.pattern.permute.xlu0 0
  %429 = vperm.xlu0 %428, %v416
  %v430 = vpop.permute.xlu0 %429
  %v432 = vadd.f32 %v411, %v420
  %v433 = vadd.f32 %v412, %v425
  %v434 = vadd.f32 %v413, %v430
  %v435 = vmax.f32 %v432, 0.0
  %v436 = vmax.f32 %v433, 0.0
  %v437 = vmax.f32 %v434, 0.0
  %v438 = vld [vmem:[%s9] sm:$0xf]
  %v439 = vld [vmem:[%s9 + $0x4] sm:$0xf]
  %v440 = vpack.c.bf16 %v436, %v435
  %v441 = vpack.c.bf16 %v437, %v437
  %v442 = vld [vmem:[%s10] sm:$0xff]
  %v443 = vld [vmem:[%s10 + $0x8] sm:$0xff]
  %445 = vset.pattern.permute.xlu0 0
  %446 = vperm.xlu0 %445, %v442
  %v447 = vpop.permute.xlu0 %446
  %450 = vset.pattern.permute.xlu0 0
  %451 = vperm.xlu0 %450, %v443
  %v452 = vpop.permute.xlu0 %451
  %v456 = vunpack.c.l.b16 %v438
  %v457 = vunpack.c.l.b16 %v439
  %v458 = vpack.c.b16 %v457, %v456
  %vm459 = vcmask 195584
  %v461 = vsel %vm459, %v458, 0
  %v464 = vsel %vm54, %v441, 0
  %466 = vmatpush.bf16.msra.mxu0 0
  %467 = vmatpush.bf16.msra.mxu0 0
  %468 = vmatpush.bf16.msra.mxu0 0
  %469 = vmatpush.bf16.msra.mxu0 0
  %470 = vmatpush.bf16.msra.mxu0 0
  %471 = vmatpush.bf16.msra.mxu0 0
  %472 = vmatpush.bf16.msra.mxu0 %v464
  %473 = vmatpush.bf16.msra.mxu0 %v440
  %474 = vmatmul.bf16.gmra.mxu0 %v461
  %v475 = vpop.f32.mrf.mxu0
  %v476 = vadd.f32 %v447, %v475
  %v477 = vpop.f32.mrf.mxu0
  %v478 = vadd.f32 %v452, %v477
  %479 = vdwg.mxu0
  %v480 = vmax.f32 %v476, 0.0
  %v481 = vmax.f32 %v478, 0.0
  %v482 = vpack.c.bf16 %v480, %v480
  %v483 = vpack.c.bf16 %v481, %v481
  %484 = vst.msk [vmem:[#allocation3 + $0x4] sm:$0xf] %vm140, %v482
  %485 = vst.msk [vmem:[#allocation3 + $0xc] sm:$0xf] %vm140, %v483
  %v486 = vld [vmem:[#allocation3] sm:$0xff]
  %v487 = vld [vmem:[#allocation3 + $0x8] sm:$0xff]
  %v488 = vld [vmem:[%s11] sm:$0xf]
  %v491 = vunpack.c.l.b16 %v486
  %v492 = vunpack.c.h.b16 %v486
  %v493 = vunpack.c.l.b16 %v487
  %v494 = vunpack.c.h.b16 %v487
  %v495 = vpack.c.b16 %v493, %v491
  %v496 = vpack.c.b16 %v494, %v492
  %497 = vrot.lane.b32.xlu0 %v495, 5
  %v498 = vpop.permute.xlu0 %497
  %499 = vrot.lane.b32.xlu0 %v496, 5
  %v500 = vpop.permute.xlu0 %499
  %v501 = vsel %vm158, %v498, %v500
  %v504 = vsel %vm118, %v488, 0
  %506 = vmatpush.bf16.msra.mxu0 0
  %507 = vmatpush.bf16.msra.mxu0 0
  %508 = vmatpush.bf16.msra.mxu0 0
  %509 = vmatpush.bf16.msra.mxu0 0
  %510 = vmatpush.bf16.msra.mxu0 0
  %511 = vmatpush.bf16.msra.mxu0 0
  %512 = vmatpush.bf16.msra.mxu0 0
  %513 = vmatpush.bf16.msra.mxu0 %v501
  %514 = vmatmul.bf16.gmra.mxu0 %v504
  %v515 = vpop.f32.mrf.mxu0
  %v516 = vadd.f32 0.0, %v515
  %v517 = vpop.f32.mrf.mxu0
  %518 = vdwg.mxu0
  %v519 = vmul.f32 %v516, %v177
  %v520 = vadd.f32 %v519, 0.0
  %s521 = scalar_lea.vmem %s11, 4
  %v522 = vld [vmem:[%s521] sm:$0xf]
  %523 = vrot.lane.b32.xlu0 %v495, 4
  %v524 = vpop.permute.xlu0 %523
  %525 = vrot.lane.b32.xlu0 %v496, 4
  %v526 = vpop.permute.xlu0 %525
  %v527 = vsel %vm186, %v524, %v526
  %v530 = vsel %vm118, %v522, 0
  %532 = vmatpush.bf16.msra.mxu0 0
  %533 = vmatpush.bf16.msra.mxu0 0
  %534 = vmatpush.bf16.msra.mxu0 0
  %535 = vmatpush.bf16.msra.mxu0 0
  %536 = vmatpush.bf16.msra.mxu0 0
  %537 = vmatpush.bf16.msra.mxu0 0
  %538 = vmatpush.bf16.msra.mxu0 0
  %539 = vmatpush.bf16.msra.mxu0 %v527
  %540 = vmatmul.bf16.gmra.mxu0 %v530
  %v541 = vpop.f32.mrf.mxu0
  %v542 = vadd.f32 0.0, %v541
  %v543 = vpop.f32.mrf.mxu0
  %544 = vdwg.mxu0
  %v545 = vmul.f32 %v542, %v205
  %v546 = vadd.f32 %v520, %v545
  %s547 = scalar_lea.vmem %s11, 8
  %v548 = vld [vmem:[%s547] sm:$0xf]
  %549 = vrot.lane.b32.xlu0 %v495, 3
  %v550 = vpop.permute.xlu0 %549
  %551 = vrot.lane.b32.xlu0 %v496, 3
  %v552 = vpop.permute.xlu0 %551
  %v553 = vsel %vm214, %v550, %v552
  %v556 = vsel %vm118, %v548, 0
  %558 = vmatpush.bf16.msra.mxu0 0
  %559 = vmatpush.bf16.msra.mxu0 0
  %560 = vmatpush.bf16.msra.mxu0 0
  %561 = vmatpush.bf16.msra.mxu0 0
  %562 = vmatpush.bf16.msra.mxu0 0
  %563 = vmatpush.bf16.msra.mxu0 0
  %564 = vmatpush.bf16.msra.mxu0 0
  %565 = vmatpush.bf16.msra.mxu0 %v553
  %566 = vmatmul.bf16.gmra.mxu0 %v556
  %v567 = vpop.f32.mrf.mxu0
  %v568 = vadd.f32 0.0, %v567
  %v569 = vpop.f32.mrf.mxu0
  %570 = vdwg.mxu0
  %v571 = vmul.f32 %v568, %v233
  %v572 = vadd.f32 %v546, %v571
  %s573 = scalar_lea.vmem %s11, 12
  %v574 = vld [vmem:[%s573] sm:$0xf]
  %575 = vrot.lane.b32.xlu0 %v495, 1
  %v576 = vpop.permute.xlu0 %575
  %577 = vrot.lane.b32.xlu0 %v496, 1
  %v578 = vpop.permute.xlu0 %577
  %v579 = vsel %vm242, %v576, %v578
  %v582 = vsel %vm118, %v574, 0
  %584 = vmatpush.bf16.msra.mxu0 0
  %585 = vmatpush.bf16.msra.mxu0 0
  %586 = vmatpush.bf16.msra.mxu0 0
  %587 = vmatpush.bf16.msra.mxu0 0
  %588 = vmatpush.bf16.msra.mxu0 0
  %589 = vmatpush.bf16.msra.mxu0 0
  %590 = vmatpush.bf16.msra.mxu0 0
  %591 = vmatpush.bf16.msra.mxu0 %v579
  %592 = vmatmul.bf16.gmra.mxu0 %v582
  %v593 = vpop.f32.mrf.mxu0
  %v594 = vadd.f32 0.0, %v593
  %v595 = vpop.f32.mrf.mxu0
  %596 = vdwg.mxu0
  %v597 = vmul.f32 %v594, %v261
  %v598 = vadd.f32 %v572, %v597
  %v599 = vld [vmem:[#allocation3 + $0x4] sm:$0xf]
  %v600 = vld [vmem:[#allocation3 + $0xc] sm:$0xf]
  %s601 = scalar_lea.vmem %s11, 16
  %v602 = vld [vmem:[%s601] sm:$0xf]
  %v605 = vunpack.c.l.b16 %v599
  %v606 = vunpack.c.l.b16 %v600
  %v607 = vpack.c.b16 %v606, %v605
  %v610 = vsel %vm118, %v602, 0
  %612 = vmatpush.bf16.msra.mxu0 0
  %613 = vmatpush.bf16.msra.mxu0 0
  %614 = vmatpush.bf16.msra.mxu0 0
  %615 = vmatpush.bf16.msra.mxu0 0
  %616 = vmatpush.bf16.msra.mxu0 0
  %617 = vmatpush.bf16.msra.mxu0 0
  %618 = vmatpush.bf16.msra.mxu0 0
  %619 = vmatpush.bf16.msra.mxu0 %v607
  %620 = vmatmul.bf16.gmra.mxu0 %v610
  %v621 = vpop.f32.mrf.mxu0
  %v622 = vadd.f32 0.0, %v621
  %v623 = vpop.f32.mrf.mxu0
  %624 = vdwg.mxu0
  %v625 = vmul.f32 %v622, %v290
  %v626 = vadd.f32 %v598, %v625
  %s627 = scalar_lea.vmem %s11, 20
  %v628 = vld [vmem:[%s627] sm:$0xf]
  %629 = vrot.lane.b32.xlu0 %v607, 127
  %v630 = vpop.permute.xlu0 %629
  %v633 = vsel %vm118, %v628, 0
  %635 = vmatpush.bf16.msra.mxu0 0
  %636 = vmatpush.bf16.msra.mxu0 0
  %637 = vmatpush.bf16.msra.mxu0 0
  %638 = vmatpush.bf16.msra.mxu0 0
  %639 = vmatpush.bf16.msra.mxu0 0
  %640 = vmatpush.bf16.msra.mxu0 0
  %641 = vmatpush.bf16.msra.mxu0 0
  %642 = vmatpush.bf16.msra.mxu0 %v630
  %643 = vmatmul.bf16.gmra.mxu0 %v633
  %v644 = vpop.f32.mrf.mxu0
  %v645 = vadd.f32 0.0, %v644
  %v646 = vpop.f32.mrf.mxu0
  %647 = vdwg.mxu0
  %v648 = vmul.f32 %v645, %v314
  %v649 = vadd.f32 %v626, %v648
  %s650 = scalar_lea.vmem %s11, 24
  %v651 = vld [vmem:[%s650] sm:$0xf]
  %652 = vrot.lane.b32.xlu0 %v607, 125
  %v653 = vpop.permute.xlu0 %652
  %v656 = vsel %vm118, %v651, 0
  %658 = vmatpush.bf16.msra.mxu0 0
  %659 = vmatpush.bf16.msra.mxu0 0
  %660 = vmatpush.bf16.msra.mxu0 0
  %661 = vmatpush.bf16.msra.mxu0 0
  %662 = vmatpush.bf16.msra.mxu0 0
  %663 = vmatpush.bf16.msra.mxu0 0
  %664 = vmatpush.bf16.msra.mxu0 0
  %665 = vmatpush.bf16.msra.mxu0 %v653
  %666 = vmatmul.bf16.gmra.mxu0 %v656
  %v667 = vpop.f32.mrf.mxu0
  %v668 = vadd.f32 0.0, %v667
  %v669 = vpop.f32.mrf.mxu0
  %670 = vdwg.mxu0
  %v671 = vmul.f32 %v668, %v338
  %v672 = vadd.f32 %v649, %v671
  %s673 = scalar_lea.vmem %s11, 28
  %v674 = vld [vmem:[%s673] sm:$0xf]
  %675 = vrot.lane.b32.xlu0 %v607, 124
  %v676 = vpop.permute.xlu0 %675
  %v679 = vsel %vm118, %v674, 0
  %681 = vmatpush.bf16.msra.mxu0 0
  %682 = vmatpush.bf16.msra.mxu0 0
  %683 = vmatpush.bf16.msra.mxu0 0
  %684 = vmatpush.bf16.msra.mxu0 0
  %685 = vmatpush.bf16.msra.mxu0 0
  %686 = vmatpush.bf16.msra.mxu0 0
  %687 = vmatpush.bf16.msra.mxu0 0
  %688 = vmatpush.bf16.msra.mxu0 %v676
  %689 = vmatmul.bf16.gmra.mxu0 %v679
  %v690 = vpop.f32.mrf.mxu0
  %v691 = vadd.f32 0.0, %v690
  %v692 = vpop.f32.mrf.mxu0
  %693 = vdwg.mxu0
  %v694 = vmul.f32 %v691, %v362
  %v695 = vadd.f32 %v672, %v694
  %s696 = scalar_lea.vmem %s11, 32
  %v697 = vld [vmem:[%s696] sm:$0xf]
  %698 = vrot.lane.b32.xlu0 %v607, 123
  %v699 = vpop.permute.xlu0 %698
  %v702 = vsel %vm118, %v697, 0
  %704 = vmatpush.bf16.msra.mxu0 0
  %705 = vmatpush.bf16.msra.mxu0 0
  %706 = vmatpush.bf16.msra.mxu0 0
  %707 = vmatpush.bf16.msra.mxu0 0
  %708 = vmatpush.bf16.msra.mxu0 0
  %709 = vmatpush.bf16.msra.mxu0 0
  %710 = vmatpush.bf16.msra.mxu0 0
  %711 = vmatpush.bf16.msra.mxu0 %v699
  %712 = vmatmul.bf16.gmra.mxu0 %v702
  %v713 = vpop.f32.mrf.mxu0
  %v714 = vadd.f32 0.0, %v713
  %v715 = vpop.f32.mrf.mxu0
  %716 = vdwg.mxu0
  %v717 = vmul.f32 %v714, %v386
  %v718 = vadd.f32 %v695, %v717
  %719 = vst.msk [vmem:[#allocation2 + $0x18] sm:$0xff] %vm61, %v718
  %v720 = vld [vmem:[#allocation2] sm:$0xff]
  %v721 = vld [vmem:[#allocation2 + $0x8] sm:$0xff]
  %v722 = vld [vmem:[#allocation2 + $0x10] sm:$0xff]
  %v723 = vld [vmem:[#allocation2 + $0x18] sm:$0xff]
  %v724 = vld [vmem:[%s12] sm:$0xff]
  %v725 = vld [vmem:[%s12 + $0x8] sm:$0xff]
  %v726 = vld [vmem:[%s12 + $0x10] sm:$0xff]
  %v727 = vld [vmem:[%s12 + $0x18] sm:$0xff]
  %729 = vset.pattern.permute.xlu0 0
  %730 = vperm.xlu0 %729, %v724
  %v731 = vpop.permute.xlu0 %730
  %734 = vset.pattern.permute.xlu0 0
  %735 = vperm.xlu0 %734, %v725
  %v736 = vpop.permute.xlu0 %735
  %739 = vset.pattern.permute.xlu0 0
  %740 = vperm.xlu0 %739, %v726
  %v741 = vpop.permute.xlu0 %740
  %744 = vset.pattern.permute.xlu0 0
  %745 = vperm.xlu0 %744, %v727
  %v746 = vpop.permute.xlu0 %745
  %v748 = vmul.f32 %v720, %v731
  %v749 = vmul.f32 %v721, %v736
  %v750 = vmul.f32 %v722, %v741
  %v751 = vmul.f32 %v723, %v746
  %v752 = vld [vmem:[%s13] sm:$0xff]
  %v753 = vld [vmem:[%s13 + $0x8] sm:$0xff]
  %v754 = vld [vmem:[%s13 + $0x10] sm:$0xff]
  %v755 = vld [vmem:[%s13 + $0x18] sm:$0xff]
  %757 = vset.pattern.permute.xlu0 0
  %758 = vperm.xlu0 %757, %v752
  %v759 = vpop.permute.xlu0 %758
  %762 = vset.pattern.permute.xlu0 0
  %763 = vperm.xlu0 %762, %v753
  %v764 = vpop.permute.xlu0 %763
  %767 = vset.pattern.permute.xlu0 0
  %768 = vperm.xlu0 %767, %v754
  %v769 = vpop.permute.xlu0 %768
  %772 = vset.pattern.permute.xlu0 0
  %773 = vperm.xlu0 %772, %v755
  %v774 = vpop.permute.xlu0 %773
  %v776 = vadd.f32 %v748, %v759
  %v777 = vadd.f32 %v749, %v764
  %v778 = vadd.f32 %v750, %v769
  %v779 = vadd.f32 %v751, %v774
  %v780 = vmax.f32 %v776, 0.0
  %v781 = vmax.f32 %v777, 0.0
  %v782 = vmax.f32 %v778, 0.0
  %v783 = vmax.f32 %v779, 0.0
  %v784 = vld [vmem:[%s14] sm:$0xf]
  %v785 = vld [vmem:[%s14 + $0x4] sm:$0xf]
  %v786 = vpack.c.bf16 %v781, %v780
  %v787 = vpack.c.bf16 %v783, %v782
  %v790 = vunpack.c.l.b16 %v784
  %v791 = vunpack.c.l.b16 %v785
  %v792 = vpack.c.b16 %v791, %v790
  %v794 = vsel %vm61, %v792, 0
  %796 = vmatpush.bf16.msra.mxu0 0
  %797 = vmatpush.bf16.msra.mxu0 0
  %798 = vmatpush.bf16.msra.mxu0 0
  %799 = vmatpush.bf16.msra.mxu0 0
  %800 = vmatpush.bf16.msra.mxu0 0
  %801 = vmatpush.bf16.msra.mxu0 0
  %802 = vmatpush.bf16.msra.mxu0 %v787
  %803 = vmatpush.bf16.msra.mxu0 %v786
  %804 = vmatmul.bf16.gmra.mxu0 %v794
  %v805 = vpop.f32.mrf.mxu0
  %v806 = vadd.f32 0.0, %v805
  %v807 = vpop.f32.mrf.mxu0
  %v808 = vadd.f32 0.0, %v807
  %809 = vdwg.mxu0
  %v810 = vpack.c.bf16 %v808, %v806
  %v811 = vld [vmem:[%s15] sm:$0xf]
  %v812 = vld [vmem:[%s15 + $0x4] sm:$0xf]
  %v813 = vld [vmem:[%s15 + $0x8] sm:$0xf]
  %v814 = vld [vmem:[%s15 + $0xc] sm:$0xf]
  %v819 = vunpack.c.l.b16 %v811
  %v820 = vunpack.c.l.b16 %v812
  %v821 = vunpack.c.l.b16 %v813
  %v822 = vunpack.c.l.b16 %v814
  %v823 = vpack.c.b16 %v820, %v819
  %v824 = vpack.c.b16 %v822, %v821
  %v828 = vsel %vm61, %v810, 0
  %830 = vmatpush.bf16.msra.mxu0 0
  %831 = vmatpush.bf16.msra.mxu0 0
  %832 = vmatpush.bf16.msra.mxu0 0
  %833 = vmatpush.bf16.msra.mxu0 0
  %834 = vmatpush.bf16.msra.mxu0 0
  %835 = vmatpush.bf16.msra.mxu0 0
  %836 = vmatpush.bf16.msra.mxu0 %v824
  %837 = vmatpush.bf16.msra.mxu0 %v823
  %838 = vmatmul.bf16.gmra.mxu0 %v828
  %v839 = vpop.f32.mrf.mxu0
  %v840 = vadd.f32 0.0, %v839
  %v841 = vpop.f32.mrf.mxu0
  %v842 = vadd.f32 0.0, %v841
  %843 = vdwg.mxu0
  %vm844 = vcmask 64512
  %845 = vst.msk [vmem:[%s16] sm:$0xff] %vm844, %v840
  %846 = vst.msk [vmem:[%s16 + $0x8] sm:$0xff] %vm844, %v842
  // Predicated region
  $region66: #{densenet_forward.7} parent=0 // pred_check
    _
  $region67: #{densenet_forward.7} parent=0 // pred_check_branch
    %848 = sbr.rel (0) target = $region69
  $region68: #{densenet_forward.7} parent=0 // pred_region
    _
  $region69: #{densenet_forward.7} parent=0 // pred_fallthru
    _
  // Predicated region
  $region70: #{densenet_forward.7} parent=0 // pred_check
    _
  $region71: #{densenet_forward.7} parent=0 // pred_check_branch
    %850 = sbr.rel (0) target = $region73
  $region72: #{densenet_forward.7} parent=0 // pred_region
    _
  $region73: #{densenet_forward.7} parent=0 // pred_fallthru
    _

// kernel: densenet_forward.8
$region0: #{densenet_forward.8}
  #allocation0 [shape = 'u32[]', space=smem, size = 0x4, offset = 0x4, fixed_abs, tag = 'smem constant byte address 0x4 - core index']
  #allocation1 [shape = 'u32[72,128]{1,0:T(1,128)}', space=vmem, size = 0x9000, scoped, tag = 'internal scratch']
  #allocation2 [shape = 'f32[32,8]{1,0:T(8,128)}', space=vmem, size = 0x4000, scoped, tag = 'scratch operand']
  #allocation3 [shape = 'bf16[16,139]{1,0:T(8,128)(2,1)}', space=vmem, size = 0x2000, scoped, tag = 'scratch operand']
  %s0 = inlined_call_operand.vmem [shape: f32[16,8], index: 0, kind: input, shape index: {}]
  %s1 = inlined_call_operand.vmem [shape: f32[9,8], index: 1, kind: input, shape index: {}]
  %s2 = inlined_call_operand.vmem [shape: f32[16,1], index: 2, kind: input, shape index: {}]
  %s3 = inlined_call_operand.vmem [shape: f32[16,1], index: 3, kind: input, shape index: {}]
  %s4 = inlined_call_operand.vmem [shape: bf16[16,16], index: 4, kind: input, shape index: {}]
  %s5 = inlined_call_operand.vmem [shape: f32[16,1], index: 5, kind: input, shape index: {}]
  %s6 = inlined_call_operand.vmem [shape: bf16[9,8,16], index: 6, kind: input, shape index: {}]
  %s7 = inlined_call_operand.vmem [shape: f32[24,1], index: 7, kind: input, shape index: {}]
  %s8 = inlined_call_operand.vmem [shape: f32[24,1], index: 8, kind: input, shape index: {}]
  %s9 = inlined_call_operand.vmem [shape: bf16[16,24], index: 9, kind: input, shape index: {}]
  %s10 = inlined_call_operand.vmem [shape: f32[16,1], index: 10, kind: input, shape index: {}]
  %s11 = inlined_call_operand.vmem [shape: bf16[9,8,16], index: 11, kind: input, shape index: {}]
  %s12 = inlined_call_operand.vmem [shape: f32[32,1], index: 12, kind: input, shape index: {}]
  %s13 = inlined_call_operand.vmem [shape: f32[32,1], index: 13, kind: input, shape index: {}]
  %s14 = inlined_call_operand.vmem [shape: bf16[16,32], index: 14, kind: input, shape index: {}]
  %s15 = inlined_call_operand.vmem [shape: bf16[8,2], index: 15, kind: input, shape index: {}]
  %s16 = inlined_call_operand.vmem [shape: f32[16,2], index: 16, kind: output, shape index: {}]
  %s17 = sld [smem:[#allocation0]]
  $region74: #{densenet_forward.8} parent=0
    _
  %s19 = ssub.s32 1, %s17
  %s20 = scalar_select 0, %s19, %s17
  // Predicated region
  $region2: #{densenet_forward.8} parent=0 // pred_check
    _
  $region3: #{densenet_forward.8} parent=0 // pred_check_branch
    %22 = sbr.rel (0) target = $region5
  $region4: #{densenet_forward.8} parent=0 // pred_region
    _
  $region5: #{densenet_forward.8} parent=0 // pred_fallthru
    _
  // Predicated region
  $region6: #{densenet_forward.8} parent=0 // pred_check
    _
  $region7: #{densenet_forward.8} parent=0 // pred_check_branch
    %24 = sbr.rel (0) target = $region9
  $region8: #{densenet_forward.8} parent=0 // pred_region
    _
  $region9: #{densenet_forward.8} parent=0 // pred_fallthru
    _
  // Predicated region
  $region10: #{densenet_forward.8} parent=0 // pred_check
    _
  $region11: #{densenet_forward.8} parent=0 // pred_check_branch
    %26 = sbr.rel (0) target = $region13
  $region12: #{densenet_forward.8} parent=0 // pred_region
    _
  $region13: #{densenet_forward.8} parent=0 // pred_fallthru
    _
  // Predicated region
  $region14: #{densenet_forward.8} parent=0 // pred_check
    _
  $region15: #{densenet_forward.8} parent=0 // pred_check_branch
    %28 = sbr.rel (0) target = $region17
  $region16: #{densenet_forward.8} parent=0 // pred_region
    _
  $region17: #{densenet_forward.8} parent=0 // pred_fallthru
    _
  // Predicated region
  $region18: #{densenet_forward.8} parent=0 // pred_check
    _
  $region19: #{densenet_forward.8} parent=0 // pred_check_branch
    %30 = sbr.rel (0) target = $region21
  $region20: #{densenet_forward.8} parent=0 // pred_region
    _
  $region21: #{densenet_forward.8} parent=0 // pred_fallthru
    _
  // Predicated region
  $region22: #{densenet_forward.8} parent=0 // pred_check
    _
  $region23: #{densenet_forward.8} parent=0 // pred_check_branch
    %32 = sbr.rel (0) target = $region25
  $region24: #{densenet_forward.8} parent=0 // pred_region
    _
  $region25: #{densenet_forward.8} parent=0 // pred_fallthru
    _
  // Predicated region
  $region26: #{densenet_forward.8} parent=0 // pred_check
    _
  $region27: #{densenet_forward.8} parent=0 // pred_check_branch
    %34 = sbr.rel (0) target = $region29
  $region28: #{densenet_forward.8} parent=0 // pred_region
    _
  $region29: #{densenet_forward.8} parent=0 // pred_fallthru
    _
  // Predicated region
  $region30: #{densenet_forward.8} parent=0 // pred_check
    _
  $region31: #{densenet_forward.8} parent=0 // pred_check_branch
    %36 = sbr.rel (0) target = $region33
  $region32: #{densenet_forward.8} parent=0 // pred_region
    _
  $region33: #{densenet_forward.8} parent=0 // pred_fallthru
    _
  // Predicated region
  $region34: #{densenet_forward.8} parent=0 // pred_check
    _
  $region35: #{densenet_forward.8} parent=0 // pred_check_branch
    %38 = sbr.rel (0) target = $region37
  $region36: #{densenet_forward.8} parent=0 // pred_region
    _
  $region37: #{densenet_forward.8} parent=0 // pred_fallthru
    _
  // Predicated region
  $region38: #{densenet_forward.8} parent=0 // pred_check
    _
  $region39: #{densenet_forward.8} parent=0 // pred_check_branch
    %40 = sbr.rel (0) target = $region41
  $region40: #{densenet_forward.8} parent=0 // pred_region
    _
  $region41: #{densenet_forward.8} parent=0 // pred_fallthru
    _
  // Predicated region
  $region42: #{densenet_forward.8} parent=0 // pred_check
    _
  $region43: #{densenet_forward.8} parent=0 // pred_check_branch
    %42 = sbr.rel (0) target = $region45
  $region44: #{densenet_forward.8} parent=0 // pred_region
    _
  $region45: #{densenet_forward.8} parent=0 // pred_fallthru
    _
  // Predicated region
  $region46: #{densenet_forward.8} parent=0 // pred_check
    _
  $region47: #{densenet_forward.8} parent=0 // pred_check_branch
    %44 = sbr.rel (0) target = $region49
  $region48: #{densenet_forward.8} parent=0 // pred_region
    _
  $region49: #{densenet_forward.8} parent=0 // pred_fallthru
    _
  // Predicated region
  $region50: #{densenet_forward.8} parent=0 // pred_check
    _
  $region51: #{densenet_forward.8} parent=0 // pred_check_branch
    %46 = sbr.rel (0) target = $region53
  $region52: #{densenet_forward.8} parent=0 // pred_region
    _
  $region53: #{densenet_forward.8} parent=0 // pred_fallthru
    _
  // Predicated region
  $region54: #{densenet_forward.8} parent=0 // pred_check
    _
  $region55: #{densenet_forward.8} parent=0 // pred_check_branch
    %48 = sbr.rel (0) target = $region57
  $region56: #{densenet_forward.8} parent=0 // pred_region
    _
  $region57: #{densenet_forward.8} parent=0 // pred_fallthru
    _
  // Predicated region
  $region58: #{densenet_forward.8} parent=0 // pred_check
    _
  $region59: #{densenet_forward.8} parent=0 // pred_check_branch
    %50 = sbr.rel (0) target = $region61
  $region60: #{densenet_forward.8} parent=0 // pred_region
    _
  $region61: #{densenet_forward.8} parent=0 // pred_fallthru
    _
  // Predicated region
  $region62: #{densenet_forward.8} parent=0 // pred_check
    _
  $region63: #{densenet_forward.8} parent=0 // pred_check_branch
    %52 = sbr.rel (0) target = $region65
  $region64: #{densenet_forward.8} parent=0 // pred_region
    _
  $region65: #{densenet_forward.8} parent=0 // pred_fallthru
    _
  %vm54 = vcmask 1043456
  %vm55 = vcmask 89092
  %vm56 = vmor %vm55, %vm54
  %57 = vst.msk [vmem:[#allocation3] sm:$0xff] %vm56, 0
  %58 = vst.msk [vmem:[#allocation3 + $0x8] sm:$0xff] %vm56, 0
  %v59 = vld [vmem:[%s0] sm:$0xff]
  %v60 = vld [vmem:[%s0 + $0x8] sm:$0xff]
  %vm61 = vcmask 64512
  %62 = vst.msk [vmem:[#allocation2] sm:$0xff] %vm61, %v59
  %63 = vst.msk [vmem:[#allocation2 + $0x8] sm:$0xff] %vm61, %v60
  %v64 = vld [vmem:[%s1] sm:$0xff]
  %v65 = vld [vmem:[%s1 + $0x8] sm:$0x1]
  %v66 = vld [vmem:[#allocation2] sm:$0xff]
  %v67 = vld [vmem:[#allocation2 + $0x8] sm:$0xff]
  %v68 = vld [vmem:[%s2] sm:$0xff]
  %v69 = vld [vmem:[%s2 + $0x8] sm:$0xff]
  %71 = vset.pattern.permute.xlu0 0
  %72 = vperm.xlu0 %71, %v68
  %v73 = vpop.permute.xlu0 %72
  %76 = vset.pattern.permute.xlu0 0
  %77 = vperm.xlu0 %76, %v69
  %v78 = vpop.permute.xlu0 %77
  %v80 = vmul.f32 %v66, %v73
  %v81 = vmul.f32 %v67, %v78
  %v82 = vld [vmem:[%s3] sm:$0xff]
  %v83 = vld [vmem:[%s3 + $0x8] sm:$0xff]
  %85 = vset.pattern.permute.xlu0 0
  %86 = vperm.xlu0 %85, %v82
  %v87 = vpop.permute.xlu0 %86
  %90 = vset.pattern.permute.xlu0 0
  %91 = vperm.xlu0 %90, %v83
  %v92 = vpop.permute.xlu0 %91
  %v94 = vadd.f32 %v80, %v87
  %v95 = vadd.f32 %v81, %v92
  %v96 = vmax.f32 %v94, 0.0
  %v97 = vmax.f32 %v95, 0.0
  %v98 = vld [vmem:[%s4] sm:$0xf]
  %v99 = vld [vmem:[%s4 + $0x4] sm:$0xf]
  %v100 = vpack.c.bf16 %v97, %v96
  %v101 = vld [vmem:[%s5] sm:$0xff]
  %v102 = vld [vmem:[%s5 + $0x8] sm:$0xff]
  %104 = vset.pattern.permute.xlu0 0
  %105 = vperm.xlu0 %104, %v101
  %v106 = vpop.permute.xlu0 %105
  %109 = vset.pattern.permute.xlu0 0
  %110 = vperm.xlu0 %109, %v102
  %v111 = vpop.permute.xlu0 %110
  %v115 = vunpack.c.l.b16 %v98
  %v116 = vunpack.c.l.b16 %v99
  %v117 = vpack.c.b16 %v116, %v115
  %vm118 = vcmask 130048
  %v120 = vsel %vm118, %v117, 0
  %122 = vmatpush.bf16.msra.mxu0 0
  %123 = vmatpush.bf16.msra.mxu0 0
  %124 = vmatpush.bf16.msra.mxu0 0
  %125 = vmatpush.bf16.msra.mxu0 0
  %126 = vmatpush.bf16.msra.mxu0 0
  %127 = vmatpush.bf16.msra.mxu0 0
  %128 = vmatpush.bf16.msra.mxu0 0
  %129 = vmatpush.bf16.msra.mxu0 %v100
  %130 = vmatmul.bf16.gmra.mxu0 %v120
  %v131 = vpop.f32.mrf.mxu0
  %v132 = vadd.f32 %v106, %v131
  %v133 = vpop.f32.mrf.mxu0
  %v134 = vadd.f32 %v111, %v133
  %135 = vdwg.mxu0
  %v136 = vmax.f32 %v132, 0.0
  %v137 = vmax.f32 %v134, 0.0
  %v138 = vpack.c.bf16 %v136, %v136
  %v139 = vpack.c.bf16 %v137, %v137
  %vm140 = vcmask 60416
  %141 = vst.msk [vmem:[#allocation3 + $0x4] sm:$0xf] %vm140, %v138
  %142 = vst.msk [vmem:[#allocation3 + $0xc] sm:$0xf] %vm140, %v139
  %v143 = vld [vmem:[#allocation3] sm:$0xff]
  %v144 = vld [vmem:[#allocation3 + $0x8] sm:$0xff]
  %v145 = vld [vmem:[%s6] sm:$0xf]
  %v148 = vunpack.c.l.b16 %v143
  %v149 = vunpack.c.h.b16 %v143
  %v150 = vunpack.c.l.b16 %v144
  %v151 = vunpack.c.h.b16 %v144
  %v152 = vpack.c.b16 %v150, %v148
  %v153 = vpack.c.b16 %v151, %v149
  %154 = vrot.lane.b32.xlu0 %v152, 3
  %v155 = vpop.permute.xlu0 %154
  %156 = vrot.lane.b32.xlu0 %v153, 3
  %v157 = vpop.permute.xlu0 %156
  %vm158 = vcmask 23552
  %v159 = vsel %vm158, %v155, %v157
  %v162 = vsel %vm118, %v145, 0
  %164 = vmatpush.bf16.msra.mxu0 0
  %165 = vmatpush.bf16.msra.mxu0 0
  %166 = vmatpush.bf16.msra.mxu0 0
  %167 = vmatpush.bf16.msra.mxu0 0
  %168 = vmatpush.bf16.msra.mxu0 0
  %169 = vmatpush.bf16.msra.mxu0 0
  %170 = vmatpush.bf16.msra.mxu0 0
  %171 = vmatpush.bf16.msra.mxu0 %v159
  %172 = vmatmul.bf16.gmra.mxu0 %v162
  %v173 = vpop.f32.mrf.mxu0
  %v174 = vadd.f32 0.0, %v173
  %v175 = vpop.f32.mrf.mxu0
  %176 = vdwg.mxu0
  %v177 = vperm.slane %v64, 0
  %v178 = vmul.f32 %v174, %v177
  %v179 = vadd.f32 %v178, 0.0
  %s180 = scalar_lea.vmem %s6, 4
  %v181 = vld [vmem:[%s180] sm:$0xf]
  %182 = vrot.lane.b32.xlu0 %v152, 2
  %v183 = vpop.permute.xlu0 %182
  %184 = vrot.lane.b32.xlu0 %v153, 2
  %v185 = vpop.permute.xlu0 %184
  %vm186 = vcmask 15360
  %v187 = vsel %vm186, %v183, %v185
  %v190 = vsel %vm118, %v181, 0
  %192 = vmatpush.bf16.msra.mxu0 0
  %193 = vmatpush.bf16.msra.mxu0 0
  %194 = vmatpush.bf16.msra.mxu0 0
  %195 = vmatpush.bf16.msra.mxu0 0
  %196 = vmatpush.bf16.msra.mxu0 0
  %197 = vmatpush.bf16.msra.mxu0 0
  %198 = vmatpush.bf16.msra.mxu0 0
  %199 = vmatpush.bf16.msra.mxu0 %v187
  %200 = vmatmul.bf16.gmra.mxu0 %v190
  %v201 = vpop.f32.mrf.mxu0
  %v202 = vadd.f32 0.0, %v201
  %v203 = vpop.f32.mrf.mxu0
  %204 = vdwg.mxu0
  %v205 = vperm.slane %v64, 1
  %v206 = vmul.f32 %v202, %v205
  %v207 = vadd.f32 %v179, %v206
  %s208 = scalar_lea.vmem %s6, 8
  %v209 = vld [vmem:[%s208] sm:$0xf]
  %210 = vrot.lane.b32.xlu0 %v152, 1
  %v211 = vpop.permute.xlu0 %210
  %212 = vrot.lane.b32.xlu0 %v153, 1
  %v213 = vpop.permute.xlu0 %212
  %vm214 = vcmask 7168
  %v215 = vsel %vm214, %v211, %v213
  %v218 = vsel %vm118, %v209, 0
  %220 = vmatpush.bf16.msra.mxu0 0
  %221 = vmatpush.bf16.msra.mxu0 0
  %222 = vmatpush.bf16.msra.mxu0 0
  %223 = vmatpush.bf16.msra.mxu0 0
  %224 = vmatpush.bf16.msra.mxu0 0
  %225 = vmatpush.bf16.msra.mxu0 0
  %226 = vmatpush.bf16.msra.mxu0 0
  %227 = vmatpush.bf16.msra.mxu0 %v215
  %228 = vmatmul.bf16.gmra.mxu0 %v218
  %v229 = vpop.f32.mrf.mxu0
  %v230 = vadd.f32 0.0, %v229
  %v231 = vpop.f32.mrf.mxu0
  %232 = vdwg.mxu0
  %v233 = vperm.slane %v64, 2
  %v234 = vmul.f32 %v230, %v233
  %v235 = vadd.f32 %v207, %v234
  %s236 = scalar_lea.vmem %s6, 12
  %v237 = vld [vmem:[%s236] sm:$0xf]
  %v239 = vsel %vm118, %v237, 0
  %241 = vmatpush.bf16.msra.mxu0 0
  %242 = vmatpush.bf16.msra.mxu0 0
  %243 = vmatpush.bf16.msra.mxu0 0
  %244 = vmatpush.bf16.msra.mxu0 0
  %245 = vmatpush.bf16.msra.mxu0 0
  %246 = vmatpush.bf16.msra.mxu0 0
  %247 = vmatpush.bf16.msra.mxu0 0
  %248 = vmatpush.bf16.msra.mxu0 %v215
  %249 = vmatmul.bf16.gmra.mxu0 %v239
  %v250 = vpop.f32.mrf.mxu0
  %v251 = vadd.f32 0.0, %v250
  %v252 = vpop.f32.mrf.mxu0
  %253 = vdwg.mxu0
  %v254 = vperm.slane %v64, 3
  %v255 = vmul.f32 %v251, %v254
  %v256 = vadd.f32 %v235, %v255
  %v257 = vld [vmem:[#allocation3 + $0x4] sm:$0xf]
  %v258 = vld [vmem:[#allocation3 + $0xc] sm:$0xf]
  %s259 = scalar_lea.vmem %s6, 16
  %v260 = vld [vmem:[%s259] sm:$0xf]
  %v263 = vunpack.c.l.b16 %v257
  %v264 = vunpack.c.l.b16 %v258
  %v265 = vpack.c.b16 %v264, %v263
  %v268 = vsel %vm118, %v260, 0
  %270 = vmatpush.bf16.msra.mxu0 0
  %271 = vmatpush.bf16.msra.mxu0 0
  %272 = vmatpush.bf16.msra.mxu0 0
  %273 = vmatpush.bf16.msra.mxu0 0
  %274 = vmatpush.bf16.msra.mxu0 0
  %275 = vmatpush.bf16.msra.mxu0 0
  %276 = vmatpush.bf16.msra.mxu0 0
  %277 = vmatpush.bf16.msra.mxu0 %v265
  %278 = vmatmul.bf16.gmra.mxu0 %v268
  %v279 = vpop.f32.mrf.mxu0
  %v280 = vadd.f32 0.0, %v279
  %v281 = vpop.f32.mrf.mxu0
  %282 = vdwg.mxu0
  %v283 = vperm.slane %v64, 4
  %v284 = vmul.f32 %v280, %v283
  %v285 = vadd.f32 %v256, %v284
  %s286 = scalar_lea.vmem %s6, 20
  %v287 = vld [vmem:[%s286] sm:$0xf]
  %288 = vrot.lane.b32.xlu0 %v265, 127
  %v289 = vpop.permute.xlu0 %288
  %v292 = vsel %vm118, %v287, 0
  %294 = vmatpush.bf16.msra.mxu0 0
  %295 = vmatpush.bf16.msra.mxu0 0
  %296 = vmatpush.bf16.msra.mxu0 0
  %297 = vmatpush.bf16.msra.mxu0 0
  %298 = vmatpush.bf16.msra.mxu0 0
  %299 = vmatpush.bf16.msra.mxu0 0
  %300 = vmatpush.bf16.msra.mxu0 0
  %301 = vmatpush.bf16.msra.mxu0 %v289
  %302 = vmatmul.bf16.gmra.mxu0 %v292
  %v303 = vpop.f32.mrf.mxu0
  %v304 = vadd.f32 0.0, %v303
  %v305 = vpop.f32.mrf.mxu0
  %306 = vdwg.mxu0
  %v307 = vperm.slane %v64, 5
  %v308 = vmul.f32 %v304, %v307
  %v309 = vadd.f32 %v285, %v308
  %s310 = scalar_lea.vmem %s6, 24
  %v311 = vld [vmem:[%s310] sm:$0xf]
  %v313 = vsel %vm118, %v311, 0
  %315 = vmatpush.bf16.msra.mxu0 0
  %316 = vmatpush.bf16.msra.mxu0 0
  %317 = vmatpush.bf16.msra.mxu0 0
  %318 = vmatpush.bf16.msra.mxu0 0
  %319 = vmatpush.bf16.msra.mxu0 0
  %320 = vmatpush.bf16.msra.mxu0 0
  %321 = vmatpush.bf16.msra.mxu0 0
  %322 = vmatpush.bf16.msra.mxu0 %v289
  %323 = vmatmul.bf16.gmra.mxu0 %v313
  %v324 = vpop.f32.mrf.mxu0
  %v325 = vadd.f32 0.0, %v324
  %v326 = vpop.f32.mrf.mxu0
  %327 = vdwg.mxu0
  %v328 = vperm.slane %v64, 6
  %v329 = vmul.f32 %v325, %v328
  %v330 = vadd.f32 %v309, %v329
  %s331 = scalar_lea.vmem %s6, 28
  %v332 = vld [vmem:[%s331] sm:$0xf]
  %333 = vrot.lane.b32.xlu0 %v265, 126
  %v334 = vpop.permute.xlu0 %333
  %v337 = vsel %vm118, %v332, 0
  %339 = vmatpush.bf16.msra.mxu0 0
  %340 = vmatpush.bf16.msra.mxu0 0
  %341 = vmatpush.bf16.msra.mxu0 0
  %342 = vmatpush.bf16.msra.mxu0 0
  %343 = vmatpush.bf16.msra.mxu0 0
  %344 = vmatpush.bf16.msra.mxu0 0
  %345 = vmatpush.bf16.msra.mxu0 0
  %346 = vmatpush.bf16.msra.mxu0 %v334
  %347 = vmatmul.bf16.gmra.mxu0 %v337
  %v348 = vpop.f32.mrf.mxu0
  %v349 = vadd.f32 0.0, %v348
  %v350 = vpop.f32.mrf.mxu0
  %351 = vdwg.mxu0
  %v352 = vperm.slane %v64, 7
  %v353 = vmul.f32 %v349, %v352
  %v354 = vadd.f32 %v330, %v353
  %s355 = scalar_lea.vmem %s6, 32
  %v356 = vld [vmem:[%s355] sm:$0xf]
  %357 = vrot.lane.b32.xlu0 %v265, 125
  %v358 = vpop.permute.xlu0 %357
  %v361 = vsel %vm118, %v356, 0
  %363 = vmatpush.bf16.msra.mxu0 0
  %364 = vmatpush.bf16.msra.mxu0 0
  %365 = vmatpush.bf16.msra.mxu0 0
  %366 = vmatpush.bf16.msra.mxu0 0
  %367 = vmatpush.bf16.msra.mxu0 0
  %368 = vmatpush.bf16.msra.mxu0 0
  %369 = vmatpush.bf16.msra.mxu0 0
  %370 = vmatpush.bf16.msra.mxu0 %v358
  %371 = vmatmul.bf16.gmra.mxu0 %v361
  %v372 = vpop.f32.mrf.mxu0
  %v373 = vadd.f32 0.0, %v372
  %v374 = vpop.f32.mrf.mxu0
  %375 = vdwg.mxu0
  %v376 = vperm.slane %v65, 0
  %v377 = vmul.f32 %v373, %v376
  %v378 = vadd.f32 %v354, %v377
  %379 = vst.msk [vmem:[#allocation2 + $0x10] sm:$0xff] %vm61, %v378
  %v380 = vld [vmem:[#allocation2] sm:$0xff]
  %v381 = vld [vmem:[#allocation2 + $0x8] sm:$0xff]
  %v382 = vld [vmem:[#allocation2 + $0x10] sm:$0xff]
  %v383 = vld [vmem:[%s7] sm:$0xff]
  %v384 = vld [vmem:[%s7 + $0x8] sm:$0xff]
  %v385 = vld [vmem:[%s7 + $0x10] sm:$0xff]
  %387 = vset.pattern.permute.xlu0 0
  %388 = vperm.xlu0 %387, %v383
  %v389 = vpop.permute.xlu0 %388
  %392 = vset.pattern.permute.xlu0 0
  %393 = vperm.xlu0 %392, %v384
  %v394 = vpop.permute.xlu0 %393
  %397 = vset.pattern.permute.xlu0 0
  %398 = vperm.xlu0 %397, %v385
  %v399 = vpop.permute.xlu0 %398
  %v401 = vmul.f32 %v380, %v389
  %v402 = vmul.f32 %v381, %v394
  %v403 = vmul.f32 %v382, %v399
  %v404 = vld [vmem:[%s8] sm:$0xff]
  %v405 = vld [vmem:[%s8 + $0x8] sm:$0xff]
  %v406 = vld [vmem:[%s8 + $0x10] sm:$0xff]
  %408 = vset.pattern.permute.xlu0 0
  %409 = vperm.xlu0 %408, %v404
  %v410 = vpop.permute.xlu0 %409
  %413 = vset.pattern.permute.xlu0 0
  %414 = vperm.xlu0 %413, %v405
  %v415 = vpop.permute.xlu0 %414
  %418 = vset.pattern.permute.xlu0 0
  %419 = vperm.xlu0 %418, %v406
  %v420 = vpop.permute.xlu0 %419
  %v422 = vadd.f32 %v401, %v410
  %v423 = vadd.f32 %v402, %v415
  %v424 = vadd.f32 %v403, %v420
  %v425 = vmax.f32 %v422, 0.0
  %v426 = vmax.f32 %v423, 0.0
  %v427 = vmax.f32 %v424, 0.0
  %v428 = vld [vmem:[%s9] sm:$0xf]
  %v429 = vld [vmem:[%s9 + $0x4] sm:$0xf]
  %v430 = vpack.c.bf16 %v426, %v425
  %v431 = vpack.c.bf16 %v427, %v427
  %v432 = vld [vmem:[%s10] sm:$0xff]
  %v433 = vld [vmem:[%s10 + $0x8] sm:$0xff]
  %435 = vset.pattern.permute.xlu0 0
  %436 = vperm.xlu0 %435, %v432
  %v437 = vpop.permute.xlu0 %436
  %440 = vset.pattern.permute.xlu0 0
  %441 = vperm.xlu0 %440, %v433
  %v442 = vpop.permute.xlu0 %441
  %v446 = vunpack.c.l.b16 %v428
  %v447 = vunpack.c.l.b16 %v429
  %v448 = vpack.c.b16 %v447, %v446
  %vm449 = vcmask 195584
  %v451 = vsel %vm449, %v448, 0
  %v454 = vsel %vm54, %v431, 0
  %456 = vmatpush.bf16.msra.mxu0 0
  %457 = vmatpush.bf16.msra.mxu0 0
  %458 = vmatpush.bf16.msra.mxu0 0
  %459 = vmatpush.bf16.msra.mxu0 0
  %460 = vmatpush.bf16.msra.mxu0 0
  %461 = vmatpush.bf16.msra.mxu0 0
  %462 = vmatpush.bf16.msra.mxu0 %v454
  %463 = vmatpush.bf16.msra.mxu0 %v430
  %464 = vmatmul.bf16.gmra.mxu0 %v451
  %v465 = vpop.f32.mrf.mxu0
  %v466 = vadd.f32 %v437, %v465
  %v467 = vpop.f32.mrf.mxu0
  %v468 = vadd.f32 %v442, %v467
  %469 = vdwg.mxu0
  %v470 = vmax.f32 %v466, 0.0
  %v471 = vmax.f32 %v468, 0.0
  %v472 = vpack.c.bf16 %v470, %v470
  %v473 = vpack.c.bf16 %v471, %v471
  %474 = vst.msk [vmem:[#allocation3 + $0x4] sm:$0xf] %vm140, %v472
  %475 = vst.msk [vmem:[#allocation3 + $0xc] sm:$0xf] %vm140, %v473
  %v476 = vld [vmem:[#allocation3] sm:$0xff]
  %v477 = vld [vmem:[#allocation3 + $0x8] sm:$0xff]
  %v478 = vld [vmem:[%s11] sm:$0xf]
  %v481 = vunpack.c.l.b16 %v476
  %v482 = vunpack.c.h.b16 %v476
  %v483 = vunpack.c.l.b16 %v477
  %v484 = vunpack.c.h.b16 %v477
  %v485 = vpack.c.b16 %v483, %v481
  %v486 = vpack.c.b16 %v484, %v482
  %487 = vrot.lane.b32.xlu0 %v485, 3
  %v488 = vpop.permute.xlu0 %487
  %489 = vrot.lane.b32.xlu0 %v486, 3
  %v490 = vpop.permute.xlu0 %489
  %v491 = vsel %vm158, %v488, %v490
  %v494 = vsel %vm118, %v478, 0
  %496 = vmatpush.bf16.msra.mxu0 0
  %497 = vmatpush.bf16.msra.mxu0 0
  %498 = vmatpush.bf16.msra.mxu0 0
  %499 = vmatpush.bf16.msra.mxu0 0
  %500 = vmatpush.bf16.msra.mxu0 0
  %501 = vmatpush.bf16.msra.mxu0 0
  %502 = vmatpush.bf16.msra.mxu0 0
  %503 = vmatpush.bf16.msra.mxu0 %v491
  %504 = vmatmul.bf16.gmra.mxu0 %v494
  %v505 = vpop.f32.mrf.mxu0
  %v506 = vadd.f32 0.0, %v505
  %v507 = vpop.f32.mrf.mxu0
  %508 = vdwg.mxu0
  %v509 = vmul.f32 %v506, %v177
  %v510 = vadd.f32 %v509, 0.0
  %s511 = scalar_lea.vmem %s11, 4
  %v512 = vld [vmem:[%s511] sm:$0xf]
  %513 = vrot.lane.b32.xlu0 %v485, 2
  %v514 = vpop.permute.xlu0 %513
  %515 = vrot.lane.b32.xlu0 %v486, 2
  %v516 = vpop.permute.xlu0 %515
  %v517 = vsel %vm186, %v514, %v516
  %v520 = vsel %vm118, %v512, 0
  %522 = vmatpush.bf16.msra.mxu0 0
  %523 = vmatpush.bf16.msra.mxu0 0
  %524 = vmatpush.bf16.msra.mxu0 0
  %525 = vmatpush.bf16.msra.mxu0 0
  %526 = vmatpush.bf16.msra.mxu0 0
  %527 = vmatpush.bf16.msra.mxu0 0
  %528 = vmatpush.bf16.msra.mxu0 0
  %529 = vmatpush.bf16.msra.mxu0 %v517
  %530 = vmatmul.bf16.gmra.mxu0 %v520
  %v531 = vpop.f32.mrf.mxu0
  %v532 = vadd.f32 0.0, %v531
  %v533 = vpop.f32.mrf.mxu0
  %534 = vdwg.mxu0
  %v535 = vmul.f32 %v532, %v205
  %v536 = vadd.f32 %v510, %v535
  %s537 = scalar_lea.vmem %s11, 8
  %v538 = vld [vmem:[%s537] sm:$0xf]
  %539 = vrot.lane.b32.xlu0 %v485, 1
  %v540 = vpop.permute.xlu0 %539
  %541 = vrot.lane.b32.xlu0 %v486, 1
  %v542 = vpop.permute.xlu0 %541
  %v543 = vsel %vm214, %v540, %v542
  %v546 = vsel %vm118, %v538, 0
  %548 = vmatpush.bf16.msra.mxu0 0
  %549 = vmatpush.bf16.msra.mxu0 0
  %550 = vmatpush.bf16.msra.mxu0 0
  %551 = vmatpush.bf16.msra.mxu0 0
  %552 = vmatpush.bf16.msra.mxu0 0
  %553 = vmatpush.bf16.msra.mxu0 0
  %554 = vmatpush.bf16.msra.mxu0 0
  %555 = vmatpush.bf16.msra.mxu0 %v543
  %556 = vmatmul.bf16.gmra.mxu0 %v546
  %v557 = vpop.f32.mrf.mxu0
  %v558 = vadd.f32 0.0, %v557
  %v559 = vpop.f32.mrf.mxu0
  %560 = vdwg.mxu0
  %v561 = vmul.f32 %v558, %v233
  %v562 = vadd.f32 %v536, %v561
  %s563 = scalar_lea.vmem %s11, 12
  %v564 = vld [vmem:[%s563] sm:$0xf]
  %v566 = vsel %vm118, %v564, 0
  %568 = vmatpush.bf16.msra.mxu0 0
  %569 = vmatpush.bf16.msra.mxu0 0
  %570 = vmatpush.bf16.msra.mxu0 0
  %571 = vmatpush.bf16.msra.mxu0 0
  %572 = vmatpush.bf16.msra.mxu0 0
  %573 = vmatpush.bf16.msra.mxu0 0
  %574 = vmatpush.bf16.msra.mxu0 0
  %575 = vmatpush.bf16.msra.mxu0 %v543
  %576 = vmatmul.bf16.gmra.mxu0 %v566
  %v577 = vpop.f32.mrf.mxu0
  %v578 = vadd.f32 0.0, %v577
  %v579 = vpop.f32.mrf.mxu0
  %580 = vdwg.mxu0
  %v581 = vmul.f32 %v578, %v254
  %v582 = vadd.f32 %v562, %v581
  %v583 = vld [vmem:[#allocation3 + $0x4] sm:$0xf]
  %v584 = vld [vmem:[#allocation3 + $0xc] sm:$0xf]
  %s585 = scalar_lea.vmem %s11, 16
  %v586 = vld [vmem:[%s585] sm:$0xf]
  %v589 = vunpack.c.l.b16 %v583
  %v590 = vunpack.c.l.b16 %v584
  %v591 = vpack.c.b16 %v590, %v589
  %v594 = vsel %vm118, %v586, 0
  %596 = vmatpush.bf16.msra.mxu0 0
  %597 = vmatpush.bf16.msra.mxu0 0
  %598 = vmatpush.bf16.msra.mxu0 0
  %599 = vmatpush.bf16.msra.mxu0 0
  %600 = vmatpush.bf16.msra.mxu0 0
  %601 = vmatpush.bf16.msra.mxu0 0
  %602 = vmatpush.bf16.msra.mxu0 0
  %603 = vmatpush.bf16.msra.mxu0 %v591
  %604 = vmatmul.bf16.gmra.mxu0 %v594
  %v605 = vpop.f32.mrf.mxu0
  %v606 = vadd.f32 0.0, %v605
  %v607 = vpop.f32.mrf.mxu0
  %608 = vdwg.mxu0
  %v609 = vmul.f32 %v606, %v283
  %v610 = vadd.f32 %v582, %v609
  %s611 = scalar_lea.vmem %s11, 20
  %v612 = vld [vmem:[%s611] sm:$0xf]
  %613 = vrot.lane.b32.xlu0 %v591, 127
  %v614 = vpop.permute.xlu0 %613
  %v617 = vsel %vm118, %v612, 0
  %619 = vmatpush.bf16.msra.mxu0 0
  %620 = vmatpush.bf16.msra.mxu0 0
  %621 = vmatpush.bf16.msra.mxu0 0
  %622 = vmatpush.bf16.msra.mxu0 0
  %623 = vmatpush.bf16.msra.mxu0 0
  %624 = vmatpush.bf16.msra.mxu0 0
  %625 = vmatpush.bf16.msra.mxu0 0
  %626 = vmatpush.bf16.msra.mxu0 %v614
  %627 = vmatmul.bf16.gmra.mxu0 %v617
  %v628 = vpop.f32.mrf.mxu0
  %v629 = vadd.f32 0.0, %v628
  %v630 = vpop.f32.mrf.mxu0
  %631 = vdwg.mxu0
  %v632 = vmul.f32 %v629, %v307
  %v633 = vadd.f32 %v610, %v632
  %s634 = scalar_lea.vmem %s11, 24
  %v635 = vld [vmem:[%s634] sm:$0xf]
  %v637 = vsel %vm118, %v635, 0
  %639 = vmatpush.bf16.msra.mxu0 0
  %640 = vmatpush.bf16.msra.mxu0 0
  %641 = vmatpush.bf16.msra.mxu0 0
  %642 = vmatpush.bf16.msra.mxu0 0
  %643 = vmatpush.bf16.msra.mxu0 0
  %644 = vmatpush.bf16.msra.mxu0 0
  %645 = vmatpush.bf16.msra.mxu0 0
  %646 = vmatpush.bf16.msra.mxu0 %v614
  %647 = vmatmul.bf16.gmra.mxu0 %v637
  %v648 = vpop.f32.mrf.mxu0
  %v649 = vadd.f32 0.0, %v648
  %v650 = vpop.f32.mrf.mxu0
  %651 = vdwg.mxu0
  %v652 = vmul.f32 %v649, %v328
  %v653 = vadd.f32 %v633, %v652
  %s654 = scalar_lea.vmem %s11, 28
  %v655 = vld [vmem:[%s654] sm:$0xf]
  %656 = vrot.lane.b32.xlu0 %v591, 126
  %v657 = vpop.permute.xlu0 %656
  %v660 = vsel %vm118, %v655, 0
  %662 = vmatpush.bf16.msra.mxu0 0
  %663 = vmatpush.bf16.msra.mxu0 0
  %664 = vmatpush.bf16.msra.mxu0 0
  %665 = vmatpush.bf16.msra.mxu0 0
  %666 = vmatpush.bf16.msra.mxu0 0
  %667 = vmatpush.bf16.msra.mxu0 0
  %668 = vmatpush.bf16.msra.mxu0 0
  %669 = vmatpush.bf16.msra.mxu0 %v657
  %670 = vmatmul.bf16.gmra.mxu0 %v660
  %v671 = vpop.f32.mrf.mxu0
  %v672 = vadd.f32 0.0, %v671
  %v673 = vpop.f32.mrf.mxu0
  %674 = vdwg.mxu0
  %v675 = vmul.f32 %v672, %v352
  %v676 = vadd.f32 %v653, %v675
  %s677 = scalar_lea.vmem %s11, 32
  %v678 = vld [vmem:[%s677] sm:$0xf]
  %679 = vrot.lane.b32.xlu0 %v591, 125
  %v680 = vpop.permute.xlu0 %679
  %v683 = vsel %vm118, %v678, 0
  %685 = vmatpush.bf16.msra.mxu0 0
  %686 = vmatpush.bf16.msra.mxu0 0
  %687 = vmatpush.bf16.msra.mxu0 0
  %688 = vmatpush.bf16.msra.mxu0 0
  %689 = vmatpush.bf16.msra.mxu0 0
  %690 = vmatpush.bf16.msra.mxu0 0
  %691 = vmatpush.bf16.msra.mxu0 0
  %692 = vmatpush.bf16.msra.mxu0 %v680
  %693 = vmatmul.bf16.gmra.mxu0 %v683
  %v694 = vpop.f32.mrf.mxu0
  %v695 = vadd.f32 0.0, %v694
  %v696 = vpop.f32.mrf.mxu0
  %697 = vdwg.mxu0
  %v698 = vmul.f32 %v695, %v376
  %v699 = vadd.f32 %v676, %v698
  %700 = vst.msk [vmem:[#allocation2 + $0x18] sm:$0xff] %vm61, %v699
  %v701 = vld [vmem:[#allocation2] sm:$0xff]
  %v702 = vld [vmem:[#allocation2 + $0x8] sm:$0xff]
  %v703 = vld [vmem:[#allocation2 + $0x10] sm:$0xff]
  %v704 = vld [vmem:[#allocation2 + $0x18] sm:$0xff]
  %v705 = vld [vmem:[%s12] sm:$0xff]
  %v706 = vld [vmem:[%s12 + $0x8] sm:$0xff]
  %v707 = vld [vmem:[%s12 + $0x10] sm:$0xff]
  %v708 = vld [vmem:[%s12 + $0x18] sm:$0xff]
  %710 = vset.pattern.permute.xlu0 0
  %711 = vperm.xlu0 %710, %v705
  %v712 = vpop.permute.xlu0 %711
  %715 = vset.pattern.permute.xlu0 0
  %716 = vperm.xlu0 %715, %v706
  %v717 = vpop.permute.xlu0 %716
  %720 = vset.pattern.permute.xlu0 0
  %721 = vperm.xlu0 %720, %v707
  %v722 = vpop.permute.xlu0 %721
  %725 = vset.pattern.permute.xlu0 0
  %726 = vperm.xlu0 %725, %v708
  %v727 = vpop.permute.xlu0 %726
  %v729 = vmul.f32 %v701, %v712
  %v730 = vmul.f32 %v702, %v717
  %v731 = vmul.f32 %v703, %v722
  %v732 = vmul.f32 %v704, %v727
  %v733 = vld [vmem:[%s13] sm:$0xff]
  %v734 = vld [vmem:[%s13 + $0x8] sm:$0xff]
  %v735 = vld [vmem:[%s13 + $0x10] sm:$0xff]
  %v736 = vld [vmem:[%s13 + $0x18] sm:$0xff]
  %738 = vset.pattern.permute.xlu0 0
  %739 = vperm.xlu0 %738, %v733
  %v740 = vpop.permute.xlu0 %739
  %743 = vset.pattern.permute.xlu0 0
  %744 = vperm.xlu0 %743, %v734
  %v745 = vpop.permute.xlu0 %744
  %748 = vset.pattern.permute.xlu0 0
  %749 = vperm.xlu0 %748, %v735
  %v750 = vpop.permute.xlu0 %749
  %753 = vset.pattern.permute.xlu0 0
  %754 = vperm.xlu0 %753, %v736
  %v755 = vpop.permute.xlu0 %754
  %v757 = vadd.f32 %v729, %v740
  %v758 = vadd.f32 %v730, %v745
  %v759 = vadd.f32 %v731, %v750
  %v760 = vadd.f32 %v732, %v755
  %v761 = vmax.f32 %v757, 0.0
  %v762 = vmax.f32 %v758, 0.0
  %v763 = vmax.f32 %v759, 0.0
  %v764 = vmax.f32 %v760, 0.0
  %v765 = vld [vmem:[%s14] sm:$0xf]
  %v766 = vld [vmem:[%s14 + $0x4] sm:$0xf]
  %v767 = vpack.c.bf16 %v762, %v761
  %v768 = vpack.c.bf16 %v764, %v763
  %v771 = vunpack.c.l.b16 %v765
  %v772 = vunpack.c.l.b16 %v766
  %v773 = vpack.c.b16 %v772, %v771
  %vm774 = vcmask 261120
  %v776 = vsel %vm774, %v773, 0
  %778 = vmatpush.bf16.msra.mxu0 0
  %779 = vmatpush.bf16.msra.mxu0 0
  %780 = vmatpush.bf16.msra.mxu0 0
  %781 = vmatpush.bf16.msra.mxu0 0
  %782 = vmatpush.bf16.msra.mxu0 0
  %783 = vmatpush.bf16.msra.mxu0 0
  %784 = vmatpush.bf16.msra.mxu0 %v768
  %785 = vmatpush.bf16.msra.mxu0 %v767
  %786 = vmatmul.bf16.gmra.mxu0 %v776
  %v787 = vpop.f32.mrf.mxu0
  %v788 = vadd.f32 0.0, %v787
  %v789 = vpop.f32.mrf.mxu0
  %v790 = vadd.f32 0.0, %v789
  %791 = vdwg.mxu0
  %v792 = vpack.c.bf16 %v790, %v788
  %v793 = vld [vmem:[%s15] sm:$0xf]
  %v795 = vsel %vm61, %v792, 0
  %v798 = vsel %vm54, %v793, 0
  %800 = vmatpush.bf16.msra.mxu0 0
  %801 = vmatpush.bf16.msra.mxu0 0
  %802 = vmatpush.bf16.msra.mxu0 0
  %803 = vmatpush.bf16.msra.mxu0 0
  %804 = vmatpush.bf16.msra.mxu0 0
  %805 = vmatpush.bf16.msra.mxu0 0
  %806 = vmatpush.bf16.msra.mxu0 0
  %807 = vmatpush.bf16.msra.mxu0 %v798
  %808 = vmatmul.bf16.gmra.mxu0 %v795
  %v809 = vpop.f32.mrf.mxu0
  %v810 = vadd.f32 0.0, %v809
  %v811 = vpop.f32.mrf.mxu0
  %v812 = vadd.f32 0.0, %v811
  %813 = vdwg.mxu0
  %vm814 = vcmask 15360
  %815 = vst.msk [vmem:[%s16] sm:$0xff] %vm814, %v810
  %816 = vst.msk [vmem:[%s16 + $0x8] sm:$0xff] %vm814, %v812
  // Predicated region
  $region66: #{densenet_forward.8} parent=0 // pred_check
    _
  $region67: #{densenet_forward.8} parent=0 // pred_check_branch
    %818 = sbr.rel (0) target = $region69
  $region68: #{densenet_forward.8} parent=0 // pred_region
    _
  $region69: #{densenet_forward.8} parent=0 // pred_fallthru
    _
  // Predicated region
  $region70: #{densenet_forward.8} parent=0 // pred_check
    _
  $region71: #{densenet_forward.8} parent=0 // pred_check_branch
    %820 = sbr.rel (0) target = $region73
  $region72: #{densenet_forward.8} parent=0 // pred_region
    _
  $region73: #{densenet_forward.8} parent=0 // pred_fallthru
    _

// kernel: densenet_forward.9
$region0: #{densenet_forward.9}
  #allocation0 [shape = 'u32[]', space=smem, size = 0x4, offset = 0x4, fixed_abs, tag = 'smem constant byte address 0x4 - core index']
  #allocation1 [shape = 'u32[72,128]{1,0:T(1,128)}', space=vmem, size = 0x9000, scoped, tag = 'internal scratch']
  #allocation2 [shape = 'f32[32,2]{1,0:T(8,128)}', space=vmem, size = 0x4000, scoped, tag = 'scratch operand']
  #allocation3 [shape = 'bf16[16,132]{1,0:T(8,128)(2,1)}', space=vmem, size = 0x2000, scoped, tag = 'scratch operand']
  %s0 = inlined_call_operand.vmem [shape: f32[16,2], index: 0, kind: input, shape index: {}]
  %s1 = inlined_call_operand.vmem [shape: f32[9,2], index: 1, kind: input, shape index: {}]
  %s2 = inlined_call_operand.vmem [shape: f32[16,1], index: 2, kind: input, shape index: {}]
  %s3 = inlined_call_operand.vmem [shape: f32[16,1], index: 3, kind: input, shape index: {}]
  %s4 = inlined_call_operand.vmem [shape: bf16[16,16], index: 4, kind: input, shape index: {}]
  %s5 = inlined_call_operand.vmem [shape: f32[16,1], index: 5, kind: input, shape index: {}]
  %s6 = inlined_call_operand.vmem [shape: bf16[9,8,16], index: 6, kind: input, shape index: {}]
  %s7 = inlined_call_operand.vmem [shape: f32[24,1], index: 7, kind: input, shape index: {}]
  %s8 = inlined_call_operand.vmem [shape: f32[24,1], index: 8, kind: input, shape index: {}]
  %s9 = inlined_call_operand.vmem [shape: bf16[16,24], index: 9, kind: input, shape index: {}]
  %s10 = inlined_call_operand.vmem [shape: f32[16,1], index: 10, kind: input, shape index: {}]
  %s11 = inlined_call_operand.vmem [shape: bf16[9,8,16], index: 11, kind: input, shape index: {}]
  %s12 = inlined_call_operand.vmem [shape: f32[32,2], index: 12, kind: output, shape index: {}]
  %s13 = sld [smem:[#allocation0]]
  $region58: #{densenet_forward.9} parent=0
    _
  %s15 = ssub.s32 1, %s13
  %s16 = scalar_select 0, %s15, %s13
  // Predicated region
  $region2: #{densenet_forward.9} parent=0 // pred_check
    _
  $region3: #{densenet_forward.9} parent=0 // pred_check_branch
    %18 = sbr.rel (0) target = $region5
  $region4: #{densenet_forward.9} parent=0 // pred_region
    _
  $region5: #{densenet_forward.9} parent=0 // pred_fallthru
    _
  // Predicated region
  $region6: #{densenet_forward.9} parent=0 // pred_check
    _
  $region7: #{densenet_forward.9} parent=0 // pred_check_branch
    %20 = sbr.rel (0) target = $region9
  $region8: #{densenet_forward.9} parent=0 // pred_region
    _
  $region9: #{densenet_forward.9} parent=0 // pred_fallthru
    _
  // Predicated region
  $region10: #{densenet_forward.9} parent=0 // pred_check
    _
  $region11: #{densenet_forward.9} parent=0 // pred_check_branch
    %22 = sbr.rel (0) target = $region13
  $region12: #{densenet_forward.9} parent=0 // pred_region
    _
  $region13: #{densenet_forward.9} parent=0 // pred_fallthru
    _
  // Predicated region
  $region14: #{densenet_forward.9} parent=0 // pred_check
    _
  $region15: #{densenet_forward.9} parent=0 // pred_check_branch
    %24 = sbr.rel (0) target = $region17
  $region16: #{densenet_forward.9} parent=0 // pred_region
    _
  $region17: #{densenet_forward.9} parent=0 // pred_fallthru
    _
  // Predicated region
  $region18: #{densenet_forward.9} parent=0 // pred_check
    _
  $region19: #{densenet_forward.9} parent=0 // pred_check_branch
    %26 = sbr.rel (0) target = $region21
  $region20: #{densenet_forward.9} parent=0 // pred_region
    _
  $region21: #{densenet_forward.9} parent=0 // pred_fallthru
    _
  // Predicated region
  $region22: #{densenet_forward.9} parent=0 // pred_check
    _
  $region23: #{densenet_forward.9} parent=0 // pred_check_branch
    %28 = sbr.rel (0) target = $region25
  $region24: #{densenet_forward.9} parent=0 // pred_region
    _
  $region25: #{densenet_forward.9} parent=0 // pred_fallthru
    _
  // Predicated region
  $region26: #{densenet_forward.9} parent=0 // pred_check
    _
  $region27: #{densenet_forward.9} parent=0 // pred_check_branch
    %30 = sbr.rel (0) target = $region29
  $region28: #{densenet_forward.9} parent=0 // pred_region
    _
  $region29: #{densenet_forward.9} parent=0 // pred_fallthru
    _
  // Predicated region
  $region30: #{densenet_forward.9} parent=0 // pred_check
    _
  $region31: #{densenet_forward.9} parent=0 // pred_check_branch
    %32 = sbr.rel (0) target = $region33
  $region32: #{densenet_forward.9} parent=0 // pred_region
    _
  $region33: #{densenet_forward.9} parent=0 // pred_fallthru
    _
  // Predicated region
  $region34: #{densenet_forward.9} parent=0 // pred_check
    _
  $region35: #{densenet_forward.9} parent=0 // pred_check_branch
    %34 = sbr.rel (0) target = $region37
  $region36: #{densenet_forward.9} parent=0 // pred_region
    _
  $region37: #{densenet_forward.9} parent=0 // pred_fallthru
    _
  // Predicated region
  $region38: #{densenet_forward.9} parent=0 // pred_check
    _
  $region39: #{densenet_forward.9} parent=0 // pred_check_branch
    %36 = sbr.rel (0) target = $region41
  $region40: #{densenet_forward.9} parent=0 // pred_region
    _
  $region41: #{densenet_forward.9} parent=0 // pred_fallthru
    _
  // Predicated region
  $region42: #{densenet_forward.9} parent=0 // pred_check
    _
  $region43: #{densenet_forward.9} parent=0 // pred_check_branch
    %38 = sbr.rel (0) target = $region45
  $region44: #{densenet_forward.9} parent=0 // pred_region
    _
  $region45: #{densenet_forward.9} parent=0 // pred_fallthru
    _
  // Predicated region
  $region46: #{densenet_forward.9} parent=0 // pred_check
    _
  $region47: #{densenet_forward.9} parent=0 // pred_check_branch
    %40 = sbr.rel (0) target = $region49
  $region48: #{densenet_forward.9} parent=0 // pred_region
    _
  $region49: #{densenet_forward.9} parent=0 // pred_fallthru
    _
  %vm42 = vcmask 1043456
  %vm43 = vcmask 31748
  %vm44 = vmor %vm43, %vm42
  %45 = vst.msk [vmem:[#allocation3] sm:$0xff] %vm44, 0
  %46 = vst.msk [vmem:[#allocation3 + $0x8] sm:$0xff] %vm44, 0
  %v47 = vld [vmem:[%s0] sm:$0xff]
  %v48 = vld [vmem:[%s0 + $0x8] sm:$0xff]
  %vm49 = vcmask 15360
  %50 = vst.msk [vmem:[#allocation2] sm:$0xff] %vm49, %v47
  %51 = vst.msk [vmem:[#allocation2 + $0x8] sm:$0xff] %vm49, %v48
  %v52 = vld [vmem:[%s1] sm:$0xff]
  %v53 = vld [vmem:[#allocation2] sm:$0xff]
  %v54 = vld [vmem:[#allocation2 + $0x8] sm:$0xff]
  %v55 = vld [vmem:[%s2] sm:$0xff]
  %v56 = vld [vmem:[%s2 + $0x8] sm:$0xff]
  %58 = vset.pattern.permute.xlu0 0
  %59 = vperm.xlu0 %58, %v55
  %v60 = vpop.permute.xlu0 %59
  %63 = vset.pattern.permute.xlu0 0
  %64 = vperm.xlu0 %63, %v56
  %v65 = vpop.permute.xlu0 %64
  %v67 = vmul.f32 %v53, %v60
  %v68 = vmul.f32 %v54, %v65
  %v69 = vld [vmem:[%s3] sm:$0xff]
  %v70 = vld [vmem:[%s3 + $0x8] sm:$0xff]
  %72 = vset.pattern.permute.xlu0 0
  %73 = vperm.xlu0 %72, %v69
  %v74 = vpop.permute.xlu0 %73
  %77 = vset.pattern.permute.xlu0 0
  %78 = vperm.xlu0 %77, %v70
  %v79 = vpop.permute.xlu0 %78
  %v81 = vadd.f32 %v67, %v74
  %v82 = vadd.f32 %v68, %v79
  %v83 = vmax.f32 %v81, 0.0
  %v84 = vmax.f32 %v82, 0.0
  %v85 = vld [vmem:[%s4] sm:$0xf]
  %v86 = vld [vmem:[%s4 + $0x4] sm:$0xf]
  %v87 = vpack.c.bf16 %v84, %v83
  %v88 = vld [vmem:[%s5] sm:$0xff]
  %v89 = vld [vmem:[%s5 + $0x8] sm:$0xff]
  %91 = vset.pattern.permute.xlu0 0
  %92 = vperm.xlu0 %91, %v88
  %v93 = vpop.permute.xlu0 %92
  %96 = vset.pattern.permute.xlu0 0
  %97 = vperm.xlu0 %96, %v89
  %v98 = vpop.permute.xlu0 %97
  %v102 = vunpack.c.l.b16 %v85
  %v103 = vunpack.c.l.b16 %v86
  %v104 = vpack.c.b16 %v103, %v102
  %vm105 = vcmask 130048
  %v107 = vsel %vm105, %v104, 0
  %109 = vmatpush.bf16.msra.mxu0 0
  %110 = vmatpush.bf16.msra.mxu0 0
  %111 = vmatpush.bf16.msra.mxu0 0
  %112 = vmatpush.bf16.msra.mxu0 0
  %113 = vmatpush.bf16.msra.mxu0 0
  %114 = vmatpush.bf16.msra.mxu0 0
  %115 = vmatpush.bf16.msra.mxu0 0
  %116 = vmatpush.bf16.msra.mxu0 %v87
  %117 = vmatmul.bf16.gmra.mxu0 %v107
  %v118 = vpop.f32.mrf.mxu0
  %v119 = vadd.f32 %v93, %v118
  %v120 = vpop.f32.mrf.mxu0
  %v121 = vadd.f32 %v98, %v120
  %122 = vdwg.mxu0
  %v123 = vmax.f32 %v119, 0.0
  %v124 = vmax.f32 %v121, 0.0
  %v125 = vpack.c.bf16 %v123, %v123
  %v126 = vpack.c.bf16 %v124, %v124
  %vm127 = vcmask 11264
  %128 = vst.msk [vmem:[#allocation3 + $0x4] sm:$0xf] %vm127, %v125
  %129 = vst.msk [vmem:[#allocation3 + $0xc] sm:$0xf] %vm127, %v126
  %v130 = vld [vmem:[#allocation3 + $0x4] sm:$0xf]
  %v131 = vld [vmem:[#allocation3 + $0xc] sm:$0xf]
  %s132 = scalar_lea.vmem %s6, 16
  %v133 = vld [vmem:[%s132] sm:$0xf]
  %v136 = vunpack.c.l.b16 %v130
  %v137 = vunpack.c.l.b16 %v131
  %v138 = vpack.c.b16 %v137, %v136
  %v141 = vsel %vm105, %v133, 0
  %143 = vmatpush.bf16.msra.mxu0 0
  %144 = vmatpush.bf16.msra.mxu0 0
  %145 = vmatpush.bf16.msra.mxu0 0
  %146 = vmatpush.bf16.msra.mxu0 0
  %147 = vmatpush.bf16.msra.mxu0 0
  %148 = vmatpush.bf16.msra.mxu0 0
  %149 = vmatpush.bf16.msra.mxu0 0
  %150 = vmatpush.bf16.msra.mxu0 %v138
  %151 = vmatmul.bf16.gmra.mxu0 %v141
  %v152 = vpop.f32.mrf.mxu0
  %v153 = vadd.f32 0.0, %v152
  %v154 = vpop.f32.mrf.mxu0
  %155 = vdwg.mxu0
  %v156 = vperm.slane %v52, 4
  %v157 = vmul.f32 %v153, %v156
  %v158 = vadd.f32 %v157, 0.0
  %159 = vst.msk [vmem:[#allocation2 + $0x10] sm:$0xff] %vm49, %v158
  %v160 = vld [vmem:[#allocation2] sm:$0xff]
  %v161 = vld [vmem:[#allocation2 + $0x8] sm:$0xff]
  %v162 = vld [vmem:[#allocation2 + $0x10] sm:$0xff]
  %v163 = vld [vmem:[%s7] sm:$0xff]
  %v164 = vld [vmem:[%s7 + $0x8] sm:$0xff]
  %v165 = vld [vmem:[%s7 + $0x10] sm:$0xff]
  %167 = vset.pattern.permute.xlu0 0
  %168 = vperm.xlu0 %167, %v163
  %v169 = vpop.permute.xlu0 %168
  %172 = vset.pattern.permute.xlu0 0
  %173 = vperm.xlu0 %172, %v164
  %v174 = vpop.permute.xlu0 %173
  %177 = vset.pattern.permute.xlu0 0
  %178 = vperm.xlu0 %177, %v165
  %v179 = vpop.permute.xlu0 %178
  %v181 = vmul.f32 %v160, %v169
  %v182 = vmul.f32 %v161, %v174
  %v183 = vmul.f32 %v162, %v179
  %v184 = vld [vmem:[%s8] sm:$0xff]
  %v185 = vld [vmem:[%s8 + $0x8] sm:$0xff]
  %v186 = vld [vmem:[%s8 + $0x10] sm:$0xff]
  %188 = vset.pattern.permute.xlu0 0
  %189 = vperm.xlu0 %188, %v184
  %v190 = vpop.permute.xlu0 %189
  %193 = vset.pattern.permute.xlu0 0
  %194 = vperm.xlu0 %193, %v185
  %v195 = vpop.permute.xlu0 %194
  %198 = vset.pattern.permute.xlu0 0
  %199 = vperm.xlu0 %198, %v186
  %v200 = vpop.permute.xlu0 %199
  %v202 = vadd.f32 %v181, %v190
  %v203 = vadd.f32 %v182, %v195
  %v204 = vadd.f32 %v183, %v200
  %v205 = vmax.f32 %v202, 0.0
  %v206 = vmax.f32 %v203, 0.0
  %v207 = vmax.f32 %v204, 0.0
  %v208 = vld [vmem:[%s9] sm:$0xf]
  %v209 = vld [vmem:[%s9 + $0x4] sm:$0xf]
  %v210 = vpack.c.bf16 %v206, %v205
  %v211 = vpack.c.bf16 %v207, %v207
  %v212 = vld [vmem:[%s10] sm:$0xff]
  %v213 = vld [vmem:[%s10 + $0x8] sm:$0xff]
  %215 = vset.pattern.permute.xlu0 0
  %216 = vperm.xlu0 %215, %v212
  %v217 = vpop.permute.xlu0 %216
  %220 = vset.pattern.permute.xlu0 0
  %221 = vperm.xlu0 %220, %v213
  %v222 = vpop.permute.xlu0 %221
  %v226 = vunpack.c.l.b16 %v208
  %v227 = vunpack.c.l.b16 %v209
  %v228 = vpack.c.b16 %v227, %v226
  %vm229 = vcmask 195584
  %v231 = vsel %vm229, %v228, 0
  %v234 = vsel %vm42, %v211, 0
  %236 = vmatpush.bf16.msra.mxu0 0
  %237 = vmatpush.bf16.msra.mxu0 0
  %238 = vmatpush.bf16.msra.mxu0 0
  %239 = vmatpush.bf16.msra.mxu0 0
  %240 = vmatpush.bf16.msra.mxu0 0
  %241 = vmatpush.bf16.msra.mxu0 0
  %242 = vmatpush.bf16.msra.mxu0 %v234
  %243 = vmatpush.bf16.msra.mxu0 %v210
  %244 = vmatmul.bf16.gmra.mxu0 %v231
  %v245 = vpop.f32.mrf.mxu0
  %v246 = vadd.f32 %v217, %v245
  %v247 = vpop.f32.mrf.mxu0
  %v248 = vadd.f32 %v222, %v247
  %249 = vdwg.mxu0
  %v250 = vmax.f32 %v246, 0.0
  %v251 = vmax.f32 %v248, 0.0
  %v252 = vpack.c.bf16 %v250, %v250
  %v253 = vpack.c.bf16 %v251, %v251
  %254 = vst.msk [vmem:[#allocation3 + $0x4] sm:$0xf] %vm127, %v252
  %255 = vst.msk [vmem:[#allocation3 + $0xc] sm:$0xf] %vm127, %v253
  %v256 = vld [vmem:[#allocation3 + $0x4] sm:$0xf]
  %v257 = vld [vmem:[#allocation3 + $0xc] sm:$0xf]
  %s258 = scalar_lea.vmem %s11, 16
  %v259 = vld [vmem:[%s258] sm:$0xf]
  %v262 = vunpack.c.l.b16 %v256
  %v263 = vunpack.c.l.b16 %v257
  %v264 = vpack.c.b16 %v263, %v262
  %v267 = vsel %vm105, %v259, 0
  %269 = vmatpush.bf16.msra.mxu0 0
  %270 = vmatpush.bf16.msra.mxu0 0
  %271 = vmatpush.bf16.msra.mxu0 0
  %272 = vmatpush.bf16.msra.mxu0 0
  %273 = vmatpush.bf16.msra.mxu0 0
  %274 = vmatpush.bf16.msra.mxu0 0
  %275 = vmatpush.bf16.msra.mxu0 0
  %276 = vmatpush.bf16.msra.mxu0 %v264
  %277 = vmatmul.bf16.gmra.mxu0 %v267
  %v278 = vpop.f32.mrf.mxu0
  %v279 = vadd.f32 0.0, %v278
  %v280 = vpop.f32.mrf.mxu0
  %281 = vdwg.mxu0
  %v282 = vmul.f32 %v279, %v156
  %v283 = vadd.f32 %v282, 0.0
  %284 = vst.msk [vmem:[#allocation2 + $0x18] sm:$0xff] %vm49, %v283
  %v285 = vld [vmem:[#allocation2] sm:$0xff]
  %v286 = vld [vmem:[#allocation2 + $0x8] sm:$0xff]
  %v287 = vld [vmem:[#allocation2 + $0x10] sm:$0xff]
  %v288 = vld [vmem:[#allocation2 + $0x18] sm:$0xff]
  %289 = vst.msk [vmem:[%s12] sm:$0xff] %vm49, %v285
  %290 = vst.msk [vmem:[%s12 + $0x8] sm:$0xff] %vm49, %v286
  %291 = vst.msk [vmem:[%s12 + $0x10] sm:$0xff] %vm49, %v287
  %292 = vst.msk [vmem:[%s12 + $0x18] sm:$0xff] %vm49, %v288
  // Predicated region
  $region50: #{densenet_forward.9} parent=0 // pred_check
    _
  $region51: #{densenet_forward.9} parent=0 // pred_check_branch
    %294 = sbr.rel (0) target = $region53
  $region52: #{densenet_forward.9} parent=0 // pred_region
    _
  $region53: #{densenet_forward.9} parent=0 // pred_fallthru
    _
  // Predicated region
  $region54: #{densenet_forward.9} parent=0 // pred_check
    _
  $region55: #{densenet_forward.9} parent=0 // pred_check_branch
    %296 = sbr.rel (0) target = $region57
  $region56: #{densenet_forward.9} parent=0 // pred_region
    _
  $region57: #{densenet_forward.9} parent=0 // pred_fallthru
    _

</llo_original>
